<compile_context>
chip_gen: v7x
topology: tpu7x:2x2x1
jax: 0.10.0
libtpu: 0.0.40
codegen_flags: <defaults>
</compile_context>

<pallas_src>
import functools

import jax
import jax.numpy as jnp
from jax.experimental import pallas as pl
from jax.experimental.pallas import tpu as pltpu


_SQRT_2_OVER_PI = 0.7978845608028654


def _gelu(x):
    # TODO(synk): the fused torch op uses exact erf-GELU; the tanh approximation is
    # used here (guaranteed Mosaic lowering, maps to the EUP), max diff ~1e-3.
    return 0.5 * x * (1.0 + jnp.tanh(_SQRT_2_OVER_PI * (x + 0.044715 * x * x * x)))


def _layernorm(h, g, b, eps):
    mu = jnp.mean(h, axis=-1, keepdims=True)
    var = jnp.mean(jnp.square(h - mu), axis=-1, keepdims=True)
    return (h - mu) * jax.lax.rsqrt(var + eps) * g + b


def _distilbert_layer_kernel(num_heads, q_tile, norm1_eps, norm2_eps,
                             x_ref, mask_ref,
                             wq_ref, bq_ref, wk_ref, bk_ref, wv_ref, bv_ref,
                             wo_ref, bo_ref, w1_ref, b1_ref, w2_ref, b2_ref,
                             g1_ref, be1_ref, g2_ref, be2_ref,
                             o_ref, k_sc, v_sc):
    H = num_heads
    _, S, D = x_ref.shape
    dh = D // H
    Tq = q_tile
    cdtype = x_ref.dtype                       # matmul operand dtype (bf16 in demo)
    scale = 1.0 / float(dh) ** 0.5
    qt = pl.program_id(1)
    f32 = jnp.float32

    # ---- K/V projection for the whole sequence: once per batch element -------
    # K is stored pre-transposed (H, dh, S) so the per-tile score matmul is
    # MXU-native; the single (S, D) -> (D, S) transpose is paid once per batch
    # element, not per query tile.  Per-head matmuls keep the live f32
    # intermediate bounded to one (dh, S) / (S, dh) slab.
    @pl.when(qt == 0)
    def _():
        x_full = x_ref[0]                                               # (S, D)
        x_t = x_full.T                                                  # (D, S)
        for h in range(H):
            k_h = jnp.dot(wk_ref[h], x_t,
                          preferred_element_type=f32) + bk_ref[h]       # (dh, S)
            k_sc[h] = k_h.astype(cdtype)
            v_h = jnp.dot(x_full, wv_ref[h],
                          preferred_element_type=f32) + bv_ref[h]       # (S, dh)
            v_sc[h] = v_h.astype(cdtype)

    # ---- per-query-tile attention --------------------------------------------
    start = pl.multiple_of(qt * Tq, Tq)
    x_q = x_ref[0, pl.ds(start, Tq), :]                                 # (Tq, D)
    mask = mask_ref[0]                                                  # (1, S) f32

    # One head at a time: score/softmax slabs stay (Tq, S) f32, and the head
    # reduction of the output projection is folded into the f32 accumulation of
    # per-head MXU matmuls (no (Tq,H,dh)->(Tq,D) concatenate / lane relayout).
    attn = jnp.zeros((Tq, D), f32)
    for h in range(H):
        q_h = (jnp.dot(x_q, wq_ref[h], preferred_element_type=f32)
               + bq_ref[h]) * scale                                     # (Tq, dh)
        s = jnp.dot(q_h.astype(cdtype), k_sc[h],
                    preferred_element_type=f32)                         # (Tq, S)
        s = s + mask                                                    # key padding
        m = jnp.max(s, axis=-1, keepdims=True)
        p = jnp.exp(s - m)
        l = jnp.sum(p, axis=-1, keepdims=True)
        p = p * pl.reciprocal(l, approx=True)
        ctx_h = jnp.dot(p.astype(cdtype), v_sc[h],
                        preferred_element_type=f32)                     # (Tq, dh)
        attn = attn + jnp.dot(ctx_h.astype(cdtype), wo_ref[h],
                              preferred_element_type=f32)               # (Tq, D)
    attn = attn + bo_ref[...]

    # ---- residual + LayerNorm1 (post-norm) -----------------------------------
    h1 = x_q.astype(f32) + attn
    h1 = _layernorm(h1, g1_ref[...], be1_ref[...], norm1_eps)

    # ---- feed-forward (GELU) + residual + LayerNorm2 --------------------------
    ff = jnp.dot(h1.astype(cdtype), w1_ref[...],
                 preferred_element_type=f32) + b1_ref[...]
    ff = _gelu(ff)
    ff = jnp.dot(ff.astype(cdtype), w2_ref[...],
                 preferred_element_type=f32) + b2_ref[...]
    h2 = _layernorm(h1 + ff, g2_ref[...], be2_ref[...], norm2_eps)

    o_ref[0] = h2.astype(o_ref.dtype)


def _pick_q_tile(S, q_block):
    """Largest query tile <= q_block that divides S and satisfies sublane tiling."""
    if S <= q_block:
        return S
    for t in range(q_block, 7, -1):
        if S % t == 0 and t % 8 == 0:
            return t
    # TODO(synk): awkward sequence lengths fall back to a single full-seq tile.
    return S


def _const_index_map(nd):
    def index_map(b, t):
        return (0,) * nd
    return index_map


def distilbert_layer_bt(hidden_states, attention_mask, params, *, num_heads,
                        norm1_eps=1e-12, norm2_eps=1e-12, q_block=256):
    """Pallas equivalent of DistilBertLayerBetterTransformer.forward.

    hidden_states:  (B, S, D), any float dtype (bf16 recommended on TPU).
    attention_mask: (B, S) with 1/True = attend, 0/False = padded, or None.
    Returns a 1-tuple (hidden_states,) to match the torch module.
    q_block: query tile size; 256 suits v6e's 256-wide MXU, use 128 on v5e.
    """
    B, S, D = hidden_states.shape
    H = num_heads
    dh = D // H
    Dff = params["linear1_weight"].shape[0]
    cdtype = hidden_states.dtype
    f32 = jnp.float32

    Tq = _pick_q_tile(S, q_block)
    n_qt = S // Tq

    # Additive key-padding mask (f32; bf16 cannot hold -1e9 accurately).
    if attention_mask is None:
        add_mask = jnp.zeros((B, 1, S), f32)
    else:
        keep = attention_mask.reshape(B, S).astype(jnp.bool_)
        add_mask = jnp.where(keep, 0.0, -1e9).astype(f32).reshape(B, 1, S)

    # Weights are pre-transposed / pre-split per head ONCE in the wrapper so the
    # kernel never relayouts a weight tile and never slices activations by head.
    w_in = params["in_proj_weight"]                       # (3D, D): rows [Wq; Wk; Wv]
    b_in = params["in_proj_bias"]                         # (3D,)
    wq = w_in[:D]
    wk = w_in[D:2 * D]
    wv = w_in[2 * D:]
    wq_h = wq.T.reshape(D, H, dh).transpose(1, 0, 2).astype(cdtype)     # (H, D, dh)
    wk_h = wk.reshape(H, dh, D).astype(cdtype)                          # (H, dh, D)
    wv_h = wv.T.reshape(D, H, dh).transpose(1, 0, 2).astype(cdtype)     # (H, D, dh)
    wo_h = params["out_proj_weight"].T.reshape(H, dh, D).astype(cdtype) # (H, dh, D)
    bq_h = b_in[:D].astype(f32).reshape(H, 1, dh)
    bk_h = b_in[D:2 * D].astype(f32).reshape(H, dh, 1)
    bv_h = b_in[2 * D:].astype(f32).reshape(H, 1, dh)
    bo = params["out_proj_bias"].astype(f32).reshape(1, D)
    w1_t = params["linear1_weight"].T.astype(cdtype)      # (D, Dff)
    b1 = params["linear1_bias"].astype(f32).reshape(1, Dff)
    w2_t = params["linear2_weight"].T.astype(cdtype)      # (Dff, D)
    b2 = params["linear2_bias"].astype(f32).reshape(1, D)
    g1 = params["norm1_weight"].astype(f32).reshape(1, D)
    be1 = params["norm1_bias"].astype(f32).reshape(1, D)
    g2 = params["norm2_weight"].astype(f32).reshape(1, D)
    be2 = params["norm2_bias"].astype(f32).reshape(1, D)

    def const(shape):
        # Constant-index weight/bias blocks: single-buffered (the block index
        # never changes, so the default double buffer is pure VMEM waste).
        return pl.BlockSpec(shape, _const_index_map(len(shape)),
                            pipeline_mode=pl.Buffered(1))

    grid_spec = pltpu.PrefetchScalarGridSpec(
        num_scalar_prefetch=0,
        grid=(B, n_qt),
        in_specs=[
            pl.BlockSpec((1, S, D), lambda b, t: (b, 0, 0)),   # hidden states (full seq)
            pl.BlockSpec((1, 1, S), lambda b, t: (b, 0, 0)),   # additive mask
            const((H, D, dh)), const((H, 1, dh)),              # Wq^T per head, bq
            const((H, dh, D)), const((H, dh, 1)),              # Wk rows per head, bk
            const((H, D, dh)), const((H, 1, dh)),              # Wv^T per head, bv
            const((H, dh, D)), const((1, D)),                  # Wo^T rows per head, bo
            const((D, Dff)), const((1, Dff)),                  # W1^T, b1
            const((Dff, D)), const((1, D)),                    # W2^T, b2
            const((1, D)), const((1, D)),                      # LN1 gamma/beta
            const((1, D)), const((1, D)),                      # LN2 gamma/beta
        ],
        out_specs=pl.BlockSpec((1, Tq, D), lambda b, t: (b, t, 0)),
        scratch_shapes=[
            pltpu.VMEM((H, dh, S), cdtype),                    # K^T (full seq, cached)
            pltpu.VMEM((H, S, dh), cdtype),                    # V   (full seq, cached)
        ],
    )

    # Declared VMEM footprint (weights single-buffered, activations double-
    # buffered, KV scratch) + headroom for compiler temporaries; kept well
    # under v7x's 64 MiB physical VMEM.
    itemsize = jnp.dtype(cdtype).itemsize
    weight_bytes = (4 * D * D + 2 * D * Dff) * itemsize
    act_bytes = 2 * (S * D * itemsize + S * 4 + Tq * D * itemsize)
    scratch_bytes = 2 * H * S * dh * itemsize
    vmem_limit = int(min(max(weight_bytes + act_bytes + scratch_bytes + 16 * 2**20,
                             32 * 2**20), 48 * 2**20))

    # Advisory cost estimate so XLA schedules around the fused layer sensibly.
    flops = 2 * B * S * (3 * D * D + 2 * S * D + D * D + 2 * D * Dff)
    transcendentals = B * (H * S * S + S * Dff)
    bytes_accessed = (2 * B * S * D * itemsize
                      + (4 * D * D + 2 * D * Dff) * itemsize
                      + B * S * 4)

    kernel = functools.partial(_distilbert_layer_kernel, H, Tq,
                               float(norm1_eps), float(norm2_eps))

    out = pl.pallas_call(
        kernel,
        out_shape=jax.ShapeDtypeStruct((B, S, D), cdtype),
        grid_spec=grid_spec,
        compiler_params=pltpu.CompilerParams(
            dimension_semantics=("parallel", "arbitrary"),
            vmem_limit_bytes=vmem_limit),
        cost_estimate=pl.CostEstimate(flops=flops,
                                      transcendentals=transcendentals,
                                      bytes_accessed=bytes_accessed),
    )(hidden_states, add_mask,
      wq_h, bq_h, wk_h, bk_h, wv_h, bv_h, wo_h, bo,
      w1_t, b1, w2_t, b2, g1, be1, g2, be2)

    return (out,)


def _reference(x, attn_mask, p, H, eps1, eps2):
    """Pure-JAX f32 reference (same math, same tanh-GELU)."""
    f = lambda t: t.astype(jnp.float32)
    x = f(x)
    B, S, D = x.shape
    dh = D // H
    qkv = x @ f(p["in_proj_weight"]).T + f(p["in_proj_bias"])
    q, k, v = jnp.split(qkv, 3, axis=-1)
    heads = lambda t: t.reshape(B, S, H, dh).transpose(0, 2, 1, 3)
    qh, kh, vh = heads(q), heads(k), heads(v)
    s = jnp.einsum("bhqd,bhkd->bhqk", qh, kh) / jnp.sqrt(dh)
    keep = attn_mask.reshape(B, S).astype(bool)
    s = s + jnp.where(keep, 0.0, -1e9)[:, None, None, :]
    a = jax.nn.softmax(s, axis=-1)
    ctx = jnp.einsum("bhqk,bhkd->bhqd", a, vh).transpose(0, 2, 1, 3).reshape(B, S, D)
    attn = ctx @ f(p["out_proj_weight"]).T + f(p["out_proj_bias"])
    h1 = _layernorm(x + attn, f(p["norm1_weight"]), f(p["norm1_bias"]), eps1)
    ff = _gelu(h1 @ f(p["linear1_weight"]).T + f(p["linear1_bias"]))
    ff = ff @ f(p["linear2_weight"]).T + f(p["linear2_bias"])
    return _layernorm(h1 + ff, f(p["norm2_weight"]), f(p["norm2_bias"]), eps2)


if __name__ == "__main__":
    B, S, D, H, Dff = 2, 8, 32, 4, 64
    dtype = jnp.bfloat16
    key = jax.random.PRNGKey(0)
    keys = jax.random.split(key, 10)

    def rnd(k, shape, s=0.05):
        return (s * jax.random.normal(k, shape, jnp.float32)).astype(dtype)

    params = {
        "in_proj_weight": rnd(keys[0], (3 * D, D)),
        "in_proj_bias":   rnd(keys[1], (3 * D,)),
        "out_proj_weight": rnd(keys[2], (D, D)),
        "out_proj_bias":   rnd(keys[3], (D,)),
        "linear1_weight":  rnd(keys[4], (Dff, D)),
        "linear1_bias":    rnd(keys[5], (Dff,)),
        "linear2_weight":  rnd(keys[6], (D, Dff)),
        "linear2_bias":    rnd(keys[7], (D,)),
        "norm1_weight": jnp.ones((D,), dtype),
        "norm1_bias":   jnp.zeros((D,), dtype),
        "norm2_weight": jnp.ones((D,), dtype),
        "norm2_bias":   jnp.zeros((D,), dtype),
    }

    hidden_states = jax.random.normal(keys[8], (B, S, D), jnp.float32).astype(dtype)
    # DistilBERT attention mask: 1 = attend, 0 = padded. Second example has its
    # last 3 positions padded.
    attention_mask = jnp.array([[1] * S, [1] * (S - 3) + [0] * 3], dtype=jnp.int32)

    (out,) = distilbert_layer_bt(hidden_states, attention_mask, params,
                                 num_heads=H, norm1_eps=1e-12, norm2_eps=1e-12)
    out = jax.block_until_ready(out)

    ref = _reference(hidden_states, attention_mask, params, H, 1e-12, 1e-12)
    assert out.shape == (B, S, D) and out.dtype == dtype
    err = float(jnp.max(jnp.abs(out.astype(jnp.float32) - ref)))
    assert err < 5e-2, f"max abs err {err}"

    print("KERNEL_OK")
</pallas_src>

<mosaic_0001>
module attributes {stable_mosaic.version = 11 : i64} {
  func.func @_distilbert_layer_kernel(%arg0: i32, %arg1: i32, %arg2: memref<1x8x32xbf16, #tpu.memory_space<vmem>>, %arg3: memref<1x1x8xf32, #tpu.memory_space<vmem>>, %arg4: memref<4x32x8xbf16, #tpu.memory_space<vmem>>, %arg5: memref<4x1x8xf32, #tpu.memory_space<vmem>>, %arg6: memref<4x8x32xbf16, #tpu.memory_space<vmem>>, %arg7: memref<4x8x1xf32, #tpu.memory_space<vmem>>, %arg8: memref<4x32x8xbf16, #tpu.memory_space<vmem>>, %arg9: memref<4x1x8xf32, #tpu.memory_space<vmem>>, %arg10: memref<4x8x32xbf16, #tpu.memory_space<vmem>>, %arg11: memref<1x32xf32, #tpu.memory_space<vmem>>, %arg12: memref<32x64xbf16, #tpu.memory_space<vmem>>, %arg13: memref<1x64xf32, #tpu.memory_space<vmem>>, %arg14: memref<64x32xbf16, #tpu.memory_space<vmem>>, %arg15: memref<1x32xf32, #tpu.memory_space<vmem>>, %arg16: memref<1x32xf32, #tpu.memory_space<vmem>>, %arg17: memref<1x32xf32, #tpu.memory_space<vmem>>, %arg18: memref<1x32xf32, #tpu.memory_space<vmem>>, %arg19: memref<1x32xf32, #tpu.memory_space<vmem>>, %arg20: memref<1x8x32xbf16, #tpu.memory_space<vmem>>, %arg21: memref<4x8x8xbf16, #tpu.memory_space<vmem>>, %arg22: memref<4x8x8xbf16, #tpu.memory_space<vmem>>) attributes {dimension_semantics = [#tpu.dimension_semantics<parallel>, #tpu.dimension_semantics<arbitrary>], iteration_bounds = array<i64: 2, 1>, scalar_prefetch = 0 : i64, scratch_operands = 2 : i64, tpu.core_type = #tpu.core_type<tc>, window_params = [{transform_indices = @transform_0, window_bounds = array<i64: 1, 8, 32>}, {transform_indices = @transform_1, window_bounds = array<i64: 1, 1, 8>}, {pipeline_mode = #tpu.pipeline_mode<synchronous>, transform_indices = @transform_2, window_bounds = array<i64: 4, 32, 8>}, {pipeline_mode = #tpu.pipeline_mode<synchronous>, transform_indices = @transform_3, window_bounds = array<i64: 4, 1, 8>}, {pipeline_mode = #tpu.pipeline_mode<synchronous>, transform_indices = @transform_4, window_bounds = array<i64: 4, 8, 32>}, {pipeline_mode = #tpu.pipeline_mode<synchronous>, transform_indices = @transform_5, window_bounds = array<i64: 4, 8, 1>}, {pipeline_mode = #tpu.pipeline_mode<synchronous>, transform_indices = @transform_6, window_bounds = array<i64: 4, 32, 8>}, {pipeline_mode = #tpu.pipeline_mode<synchronous>, transform_indices = @transform_7, window_bounds = array<i64: 4, 1, 8>}, {pipeline_mode = #tpu.pipeline_mode<synchronous>, transform_indices = @transform_8, window_bounds = array<i64: 4, 8, 32>}, {pipeline_mode = #tpu.pipeline_mode<synchronous>, transform_indices = @transform_9, window_bounds = array<i64: 1, 32>}, {pipeline_mode = #tpu.pipeline_mode<synchronous>, transform_indices = @transform_10, window_bounds = array<i64: 32, 64>}, {pipeline_mode = #tpu.pipeline_mode<synchronous>, transform_indices = @transform_11, window_bounds = array<i64: 1, 64>}, {pipeline_mode = #tpu.pipeline_mode<synchronous>, transform_indices = @transform_12, window_bounds = array<i64: 64, 32>}, {pipeline_mode = #tpu.pipeline_mode<synchronous>, transform_indices = @transform_13, window_bounds = array<i64: 1, 32>}, {pipeline_mode = #tpu.pipeline_mode<synchronous>, transform_indices = @transform_14, window_bounds = array<i64: 1, 32>}, {pipeline_mode = #tpu.pipeline_mode<synchronous>, transform_indices = @transform_15, window_bounds = array<i64: 1, 32>}, {pipeline_mode = #tpu.pipeline_mode<synchronous>, transform_indices = @transform_16, window_bounds = array<i64: 1, 32>}, {pipeline_mode = #tpu.pipeline_mode<synchronous>, transform_indices = @transform_17, window_bounds = array<i64: 1, 32>}, {transform_indices = @transform_18, window_bounds = array<i64: 1, 8, 32>}]} {
    %c0_i32 = arith.constant 0 : i32
    %0 = arith.cmpi eq, %arg1, %c0_i32 : i32
    %1 = arith.extui %0 : i1 to i32
    %c0_i32_0 = arith.constant 0 : i32
    %2 = arith.cmpi ne, %1, %c0_i32_0 : i32
    scf.if %2 {
      %c0_127 = arith.constant 0 : index
      %c0_128 = arith.constant 0 : index
      %c0_129 = arith.constant 0 : index
      %230 = vector.load %arg2[%c0_127, %c0_128, %c0_129] : memref<1x8x32xbf16, #tpu.memory_space<vmem>>, vector<1x8x32xbf16>
      %231 = vector.shape_cast %230 : vector<1x8x32xbf16> to vector<8x32xbf16>
      %232 = tpu.transpose %231, [1, 0] : vector<8x32xbf16> -> vector<32x8xbf16>
      %c0_130 = arith.constant 0 : index
      %c0_131 = arith.constant 0 : index
      %c0_132 = arith.constant 0 : index
      %233 = vector.load %arg6[%c0_130, %c0_131, %c0_132] : memref<4x8x32xbf16, #tpu.memory_space<vmem>>, vector<1x8x32xbf16>
      %234 = vector.shape_cast %233 : vector<1x8x32xbf16> to vector<8x32xbf16>
      %cst_133 = arith.constant dense<0.000000e+00> : vector<8x8xf32>
      %235 = tpu.matmul %234, %232, %cst_133 {dimension_numbers = #tpu.dot_dimension_numbers<[1], [0], [0], [1], [0, 0, 1, 1], [], []>} : vector<8x32xbf16>, vector<32x8xbf16>, vector<8x8xf32> -> vector<8x8xf32>
      %c0_134 = arith.constant 0 : index
      %c0_135 = arith.constant 0 : index
      %c0_136 = arith.constant 0 : index
      %236 = vector.load %arg7[%c0_134, %c0_135, %c0_136] : memref<4x8x1xf32, #tpu.memory_space<vmem>>, vector<1x8x1xf32>
      %237 = vector.shape_cast %236 : vector<1x8x1xf32> to vector<8x1xf32>
      %238 = vector.broadcast %237 : vector<8x1xf32> to vector<8x8xf32>
      %239 = arith.addf %235, %238 : vector<8x8xf32>
      %240 = arith.truncf %239 : vector<8x8xf32> to vector<8x8xbf16>
      %c0_137 = arith.constant 0 : index
      %c0_138 = arith.constant 0 : index
      %c0_139 = arith.constant 0 : index
      %241 = vector.load %arg21[%c0_137, %c0_138, %c0_139] : memref<4x8x8xbf16, #tpu.memory_space<vmem>>, vector<1x8x8xbf16>
      %242 = vector.shape_cast %241 : vector<1x8x8xbf16> to vector<8x8xbf16>
      %243 = vector.shape_cast %240 : vector<8x8xbf16> to vector<1x8x8xbf16>
      tpu.vector_store %arg21[%c0_137, %c0_138, %c0_139], %243 {strides = array<i32>} : memref<4x8x8xbf16, #tpu.memory_space<vmem>>, vector<1x8x8xbf16>,
      %c0_140 = arith.constant 0 : index
      %c0_141 = arith.constant 0 : index
      %c0_142 = arith.constant 0 : index
      %244 = vector.load %arg8[%c0_140, %c0_141, %c0_142] : memref<4x32x8xbf16, #tpu.memory_space<vmem>>, vector<1x32x8xbf16>
      %245 = vector.shape_cast %244 : vector<1x32x8xbf16> to vector<32x8xbf16>
      %cst_143 = arith.constant dense<0.000000e+00> : vector<8x8xf32>
      %246 = tpu.matmul %231, %245, %cst_143 {dimension_numbers = #tpu.dot_dimension_numbers<[1], [0], [0], [1], [0, 0, 1, 1], [], []>} : vector<8x32xbf16>, vector<32x8xbf16>, vector<8x8xf32> -> vector<8x8xf32>
      %c0_144 = arith.constant 0 : index
      %c0_145 = arith.constant 0 : index
      %c0_146 = arith.constant 0 : index
      %247 = vector.load %arg9[%c0_144, %c0_145, %c0_146] : memref<4x1x8xf32, #tpu.memory_space<vmem>>, vector<1x1x8xf32>
      %248 = vector.shape_cast %247 : vector<1x1x8xf32> to vector<1x8xf32>
      %249 = vector.broadcast %248 : vector<1x8xf32> to vector<8x8xf32>
      %250 = arith.addf %246, %249 : vector<8x8xf32>
      %251 = arith.truncf %250 : vector<8x8xf32> to vector<8x8xbf16>
      %c0_147 = arith.constant 0 : index
      %c0_148 = arith.constant 0 : index
      %c0_149 = arith.constant 0 : index
      %252 = vector.load %arg22[%c0_147, %c0_148, %c0_149] : memref<4x8x8xbf16, #tpu.memory_space<vmem>>, vector<1x8x8xbf16>
      %253 = vector.shape_cast %252 : vector<1x8x8xbf16> to vector<8x8xbf16>
      %254 = vector.shape_cast %251 : vector<8x8xbf16> to vector<1x8x8xbf16>
      tpu.vector_store %arg22[%c0_147, %c0_148, %c0_149], %254 {strides = array<i32>} : memref<4x8x8xbf16, #tpu.memory_space<vmem>>, vector<1x8x8xbf16>,
      %c1_150 = arith.constant 1 : index
      %c0_151 = arith.constant 0 : index
      %c0_152 = arith.constant 0 : index
      %255 = vector.load %arg6[%c1_150, %c0_151, %c0_152] : memref<4x8x32xbf16, #tpu.memory_space<vmem>>, vector<1x8x32xbf16>
      %256 = vector.shape_cast %255 : vector<1x8x32xbf16> to vector<8x32xbf16>
      %cst_153 = arith.constant dense<0.000000e+00> : vector<8x8xf32>
      %257 = tpu.matmul %256, %232, %cst_153 {dimension_numbers = #tpu.dot_dimension_numbers<[1], [0], [0], [1], [0, 0, 1, 1], [], []>} : vector<8x32xbf16>, vector<32x8xbf16>, vector<8x8xf32> -> vector<8x8xf32>
      %c1_154 = arith.constant 1 : index
      %c0_155 = arith.constant 0 : index
      %c0_156 = arith.constant 0 : index
      %258 = vector.load %arg7[%c1_154, %c0_155, %c0_156] : memref<4x8x1xf32, #tpu.memory_space<vmem>>, vector<1x8x1xf32>
      %259 = vector.shape_cast %258 : vector<1x8x1xf32> to vector<8x1xf32>
      %260 = vector.broadcast %259 : vector<8x1xf32> to vector<8x8xf32>
      %261 = arith.addf %257, %260 : vector<8x8xf32>
      %262 = arith.truncf %261 : vector<8x8xf32> to vector<8x8xbf16>
      %c1_157 = arith.constant 1 : index
      %c0_158 = arith.constant 0 : index
      %c0_159 = arith.constant 0 : index
      %263 = vector.load %arg21[%c1_157, %c0_158, %c0_159] : memref<4x8x8xbf16, #tpu.memory_space<vmem>>, vector<1x8x8xbf16>
      %264 = vector.shape_cast %263 : vector<1x8x8xbf16> to vector<8x8xbf16>
      %265 = vector.shape_cast %262 : vector<8x8xbf16> to vector<1x8x8xbf16>
      tpu.vector_store %arg21[%c1_157, %c0_158, %c0_159], %265 {strides = array<i32>} : memref<4x8x8xbf16, #tpu.memory_space<vmem>>, vector<1x8x8xbf16>,
      %c1_160 = arith.constant 1 : index
      %c0_161 = arith.constant 0 : index
      %c0_162 = arith.constant 0 : index
      %266 = vector.load %arg8[%c1_160, %c0_161, %c0_162] : memref<4x32x8xbf16, #tpu.memory_space<vmem>>, vector<1x32x8xbf16>
      %267 = vector.shape_cast %266 : vector<1x32x8xbf16> to vector<32x8xbf16>
      %cst_163 = arith.constant dense<0.000000e+00> : vector<8x8xf32>
      %268 = tpu.matmul %231, %267, %cst_163 {dimension_numbers = #tpu.dot_dimension_numbers<[1], [0], [0], [1], [0, 0, 1, 1], [], []>} : vector<8x32xbf16>, vector<32x8xbf16>, vector<8x8xf32> -> vector<8x8xf32>
      %c1_164 = arith.constant 1 : index
      %c0_165 = arith.constant 0 : index
      %c0_166 = arith.constant 0 : index
      %269 = vector.load %arg9[%c1_164, %c0_165, %c0_166] : memref<4x1x8xf32, #tpu.memory_space<vmem>>, vector<1x1x8xf32>
      %270 = vector.shape_cast %269 : vector<1x1x8xf32> to vector<1x8xf32>
      %271 = vector.broadcast %270 : vector<1x8xf32> to vector<8x8xf32>
      %272 = arith.addf %268, %271 : vector<8x8xf32>
      %273 = arith.truncf %272 : vector<8x8xf32> to vector<8x8xbf16>
      %c1_167 = arith.constant 1 : index
      %c0_168 = arith.constant 0 : index
      %c0_169 = arith.constant 0 : index
      %274 = vector.load %arg22[%c1_167, %c0_168, %c0_169] : memref<4x8x8xbf16, #tpu.memory_space<vmem>>, vector<1x8x8xbf16>
      %275 = vector.shape_cast %274 : vector<1x8x8xbf16> to vector<8x8xbf16>
      %276 = vector.shape_cast %273 : vector<8x8xbf16> to vector<1x8x8xbf16>
      tpu.vector_store %arg22[%c1_167, %c0_168, %c0_169], %276 {strides = array<i32>} : memref<4x8x8xbf16, #tpu.memory_space<vmem>>, vector<1x8x8xbf16>,
      %c2_170 = arith.constant 2 : index
      %c0_171 = arith.constant 0 : index
      %c0_172 = arith.constant 0 : index
      %277 = vector.load %arg6[%c2_170, %c0_171, %c0_172] : memref<4x8x32xbf16, #tpu.memory_space<vmem>>, vector<1x8x32xbf16>
      %278 = vector.shape_cast %277 : vector<1x8x32xbf16> to vector<8x32xbf16>
      %cst_173 = arith.constant dense<0.000000e+00> : vector<8x8xf32>
      %279 = tpu.matmul %278, %232, %cst_173 {dimension_numbers = #tpu.dot_dimension_numbers<[1], [0], [0], [1], [0, 0, 1, 1], [], []>} : vector<8x32xbf16>, vector<32x8xbf16>, vector<8x8xf32> -> vector<8x8xf32>
      %c2_174 = arith.constant 2 : index
      %c0_175 = arith.constant 0 : index
      %c0_176 = arith.constant 0 : index
      %280 = vector.load %arg7[%c2_174, %c0_175, %c0_176] : memref<4x8x1xf32, #tpu.memory_space<vmem>>, vector<1x8x1xf32>
      %281 = vector.shape_cast %280 : vector<1x8x1xf32> to vector<8x1xf32>
      %282 = vector.broadcast %281 : vector<8x1xf32> to vector<8x8xf32>
      %283 = arith.addf %279, %282 : vector<8x8xf32>
      %284 = arith.truncf %283 : vector<8x8xf32> to vector<8x8xbf16>
      %c2_177 = arith.constant 2 : index
      %c0_178 = arith.constant 0 : index
      %c0_179 = arith.constant 0 : index
      %285 = vector.load %arg21[%c2_177, %c0_178, %c0_179] : memref<4x8x8xbf16, #tpu.memory_space<vmem>>, vector<1x8x8xbf16>
      %286 = vector.shape_cast %285 : vector<1x8x8xbf16> to vector<8x8xbf16>
      %287 = vector.shape_cast %284 : vector<8x8xbf16> to vector<1x8x8xbf16>
      tpu.vector_store %arg21[%c2_177, %c0_178, %c0_179], %287 {strides = array<i32>} : memref<4x8x8xbf16, #tpu.memory_space<vmem>>, vector<1x8x8xbf16>,
      %c2_180 = arith.constant 2 : index
      %c0_181 = arith.constant 0 : index
      %c0_182 = arith.constant 0 : index
      %288 = vector.load %arg8[%c2_180, %c0_181, %c0_182] : memref<4x32x8xbf16, #tpu.memory_space<vmem>>, vector<1x32x8xbf16>
      %289 = vector.shape_cast %288 : vector<1x32x8xbf16> to vector<32x8xbf16>
      %cst_183 = arith.constant dense<0.000000e+00> : vector<8x8xf32>
      %290 = tpu.matmul %231, %289, %cst_183 {dimension_numbers = #tpu.dot_dimension_numbers<[1], [0], [0], [1], [0, 0, 1, 1], [], []>} : vector<8x32xbf16>, vector<32x8xbf16>, vector<8x8xf32> -> vector<8x8xf32>
      %c2_184 = arith.constant 2 : index
      %c0_185 = arith.constant 0 : index
      %c0_186 = arith.constant 0 : index
      %291 = vector.load %arg9[%c2_184, %c0_185, %c0_186] : memref<4x1x8xf32, #tpu.memory_space<vmem>>, vector<1x1x8xf32>
      %292 = vector.shape_cast %291 : vector<1x1x8xf32> to vector<1x8xf32>
      %293 = vector.broadcast %292 : vector<1x8xf32> to vector<8x8xf32>
      %294 = arith.addf %290, %293 : vector<8x8xf32>
      %295 = arith.truncf %294 : vector<8x8xf32> to vector<8x8xbf16>
      %c2_187 = arith.constant 2 : index
      %c0_188 = arith.constant 0 : index
      %c0_189 = arith.constant 0 : index
      %296 = vector.load %arg22[%c2_187, %c0_188, %c0_189] : memref<4x8x8xbf16, #tpu.memory_space<vmem>>, vector<1x8x8xbf16>
      %297 = vector.shape_cast %296 : vector<1x8x8xbf16> to vector<8x8xbf16>
      %298 = vector.shape_cast %295 : vector<8x8xbf16> to vector<1x8x8xbf16>
      tpu.vector_store %arg22[%c2_187, %c0_188, %c0_189], %298 {strides = array<i32>} : memref<4x8x8xbf16, #tpu.memory_space<vmem>>, vector<1x8x8xbf16>,
      %c3_190 = arith.constant 3 : index
      %c0_191 = arith.constant 0 : index
      %c0_192 = arith.constant 0 : index
      %299 = vector.load %arg6[%c3_190, %c0_191, %c0_192] : memref<4x8x32xbf16, #tpu.memory_space<vmem>>, vector<1x8x32xbf16>
      %300 = vector.shape_cast %299 : vector<1x8x32xbf16> to vector<8x32xbf16>
      %cst_193 = arith.constant dense<0.000000e+00> : vector<8x8xf32>
      %301 = tpu.matmul %300, %232, %cst_193 {dimension_numbers = #tpu.dot_dimension_numbers<[1], [0], [0], [1], [0, 0, 1, 1], [], []>} : vector<8x32xbf16>, vector<32x8xbf16>, vector<8x8xf32> -> vector<8x8xf32>
      %c3_194 = arith.constant 3 : index
      %c0_195 = arith.constant 0 : index
      %c0_196 = arith.constant 0 : index
      %302 = vector.load %arg7[%c3_194, %c0_195, %c0_196] : memref<4x8x1xf32, #tpu.memory_space<vmem>>, vector<1x8x1xf32>
      %303 = vector.shape_cast %302 : vector<1x8x1xf32> to vector<8x1xf32>
      %304 = vector.broadcast %303 : vector<8x1xf32> to vector<8x8xf32>
      %305 = arith.addf %301, %304 : vector<8x8xf32>
      %306 = arith.truncf %305 : vector<8x8xf32> to vector<8x8xbf16>
      %c3_197 = arith.constant 3 : index
      %c0_198 = arith.constant 0 : index
      %c0_199 = arith.constant 0 : index
      %307 = vector.load %arg21[%c3_197, %c0_198, %c0_199] : memref<4x8x8xbf16, #tpu.memory_space<vmem>>, vector<1x8x8xbf16>
      %308 = vector.shape_cast %307 : vector<1x8x8xbf16> to vector<8x8xbf16>
      %309 = vector.shape_cast %306 : vector<8x8xbf16> to vector<1x8x8xbf16>
      tpu.vector_store %arg21[%c3_197, %c0_198, %c0_199], %309 {strides = array<i32>} : memref<4x8x8xbf16, #tpu.memory_space<vmem>>, vector<1x8x8xbf16>,
      %c3_200 = arith.constant 3 : index
      %c0_201 = arith.constant 0 : index
      %c0_202 = arith.constant 0 : index
      %310 = vector.load %arg8[%c3_200, %c0_201, %c0_202] : memref<4x32x8xbf16, #tpu.memory_space<vmem>>, vector<1x32x8xbf16>
      %311 = vector.shape_cast %310 : vector<1x32x8xbf16> to vector<32x8xbf16>
      %cst_203 = arith.constant dense<0.000000e+00> : vector<8x8xf32>
      %312 = tpu.matmul %231, %311, %cst_203 {dimension_numbers = #tpu.dot_dimension_numbers<[1], [0], [0], [1], [0, 0, 1, 1], [], []>} : vector<8x32xbf16>, vector<32x8xbf16>, vector<8x8xf32> -> vector<8x8xf32>
      %c3_204 = arith.constant 3 : index
      %c0_205 = arith.constant 0 : index
      %c0_206 = arith.constant 0 : index
      %313 = vector.load %arg9[%c3_204, %c0_205, %c0_206] : memref<4x1x8xf32, #tpu.memory_space<vmem>>, vector<1x1x8xf32>
      %314 = vector.shape_cast %313 : vector<1x1x8xf32> to vector<1x8xf32>
      %315 = vector.broadcast %314 : vector<1x8xf32> to vector<8x8xf32>
      %316 = arith.addf %312, %315 : vector<8x8xf32>
      %317 = arith.truncf %316 : vector<8x8xf32> to vector<8x8xbf16>
      %c3_207 = arith.constant 3 : index
      %c0_208 = arith.constant 0 : index
      %c0_209 = arith.constant 0 : index
      %318 = vector.load %arg22[%c3_207, %c0_208, %c0_209] : memref<4x8x8xbf16, #tpu.memory_space<vmem>>, vector<1x8x8xbf16>
      %319 = vector.shape_cast %318 : vector<1x8x8xbf16> to vector<8x8xbf16>
      %320 = vector.shape_cast %317 : vector<8x8xbf16> to vector<1x8x8xbf16>
      tpu.vector_store %arg22[%c3_207, %c0_208, %c0_209], %320 {strides = array<i32>} : memref<4x8x8xbf16, #tpu.memory_space<vmem>>, vector<1x8x8xbf16>,
    } else {
    }
    %c8_i32 = arith.constant 8 : i32
    %3 = arith.muli %arg1, %c8_i32 : i32
    %4 = tpu.assume_multiple %3, 8 : i32
    %c0 = arith.constant 0 : index
    %5 = arith.index_cast %4 : i32 to index
    %c0_1 = arith.constant 0 : index
    %6 = vector.load %arg2[%c0, %5, %c0_1] : memref<1x8x32xbf16, #tpu.memory_space<vmem>>, vector<1x8x32xbf16>
    %7 = vector.shape_cast %6 : vector<1x8x32xbf16> to vector<8x32xbf16>
    %c0_2 = arith.constant 0 : index
    %c0_3 = arith.constant 0 : index
    %c0_4 = arith.constant 0 : index
    %8 = vector.load %arg3[%c0_2, %c0_3, %c0_4] : memref<1x1x8xf32, #tpu.memory_space<vmem>>, vector<1x1x8xf32>
    %9 = vector.shape_cast %8 : vector<1x1x8xf32> to vector<1x8xf32>
    %cst = arith.constant 0.000000e+00 : f32
    %10 = vector.broadcast %cst : f32 to vector<8x32xf32>
    %c0_5 = arith.constant 0 : index
    %c0_6 = arith.constant 0 : index
    %c0_7 = arith.constant 0 : index
    %11 = vector.load %arg4[%c0_5, %c0_6, %c0_7] : memref<4x32x8xbf16, #tpu.memory_space<vmem>>, vector<1x32x8xbf16>
    %12 = vector.shape_cast %11 : vector<1x32x8xbf16> to vector<32x8xbf16>
    %cst_8 = arith.constant dense<0.000000e+00> : vector<8x8xf32>
    %13 = tpu.matmul %7, %12, %cst_8 {dimension_numbers = #tpu.dot_dimension_numbers<[1], [0], [0], [1], [0, 0, 1, 1], [], []>} : vector<8x32xbf16>, vector<32x8xbf16>, vector<8x8xf32> -> vector<8x8xf32>
    %c0_9 = arith.constant 0 : index
    %c0_10 = arith.constant 0 : index
    %c0_11 = arith.constant 0 : index
    %14 = vector.load %arg5[%c0_9, %c0_10, %c0_11] : memref<4x1x8xf32, #tpu.memory_space<vmem>>, vector<1x1x8xf32>
    %15 = vector.shape_cast %14 : vector<1x1x8xf32> to vector<1x8xf32>
    %16 = vector.broadcast %15 : vector<1x8xf32> to vector<8x8xf32>
    %17 = arith.addf %13, %16 : vector<8x8xf32>
    %cst_12 = arith.constant 0.353553385 : f32
    %18 = vector.broadcast %cst_12 : f32 to vector<8x8xf32>
    %19 = arith.mulf %17, %18 : vector<8x8xf32>
    %20 = arith.truncf %19 : vector<8x8xf32> to vector<8x8xbf16>
    %c0_13 = arith.constant 0 : index
    %c0_14 = arith.constant 0 : index
    %c0_15 = arith.constant 0 : index
    %21 = vector.load %arg21[%c0_13, %c0_14, %c0_15] : memref<4x8x8xbf16, #tpu.memory_space<vmem>>, vector<1x8x8xbf16>
    %22 = vector.shape_cast %21 : vector<1x8x8xbf16> to vector<8x8xbf16>
    %cst_16 = arith.constant dense<0.000000e+00> : vector<8x8xf32>
    %23 = tpu.matmul %20, %22, %cst_16 {dimension_numbers = #tpu.dot_dimension_numbers<[1], [0], [0], [1], [0, 0, 1, 1], [], []>} : vector<8x8xbf16>, vector<8x8xbf16>, vector<8x8xf32> -> vector<8x8xf32>
    %24 = vector.broadcast %9 : vector<1x8xf32> to vector<8x8xf32>
    %25 = arith.addf %23, %24 : vector<8x8xf32>
    %cst_17 = arith.constant dense<0xFF800000> : vector<8xf32>
    %26 = vector.multi_reduction <maximumf>, %25, %cst_17 [1] : vector<8x8xf32> to vector<8xf32>
    %27 = vector.shape_cast %26 : vector<8xf32> to vector<8x1xf32>
    %28 = vector.broadcast %27 : vector<8x1xf32> to vector<8x8xf32>
    %29 = arith.subf %25, %28 : vector<8x8xf32>
    %30 = math.exp %29 : vector<8x8xf32>
    %cst_18 = arith.constant dense<0.000000e+00> : vector<8xf32>
    %31 = vector.multi_reduction <add>, %30, %cst_18 [1] : vector<8x8xf32> to vector<8xf32>
    %32 = vector.shape_cast %31 : vector<8xf32> to vector<8x1xf32>
    %33 = tpu.reciprocal %32 {approx = true} : vector<8x1xf32> -> vector<8x1xf32>
    %34 = vector.broadcast %33 : vector<8x1xf32> to vector<8x8xf32>
    %35 = arith.mulf %30, %34 : vector<8x8xf32>
    %36 = arith.truncf %35 : vector<8x8xf32> to vector<8x8xbf16>
    %c0_19 = arith.constant 0 : index
    %c0_20 = arith.constant 0 : index
    %c0_21 = arith.constant 0 : index
    %37 = vector.load %arg22[%c0_19, %c0_20, %c0_21] : memref<4x8x8xbf16, #tpu.memory_space<vmem>>, vector<1x8x8xbf16>
    %38 = vector.shape_cast %37 : vector<1x8x8xbf16> to vector<8x8xbf16>
    %cst_22 = arith.constant dense<0.000000e+00> : vector<8x8xf32>
    %39 = tpu.matmul %36, %38, %cst_22 {dimension_numbers = #tpu.dot_dimension_numbers<[1], [0], [0], [1], [0, 0, 1, 1], [], []>} : vector<8x8xbf16>, vector<8x8xbf16>, vector<8x8xf32> -> vector<8x8xf32>
    %40 = arith.truncf %39 : vector<8x8xf32> to vector<8x8xbf16>
    %c0_23 = arith.constant 0 : index
    %c0_24 = arith.constant 0 : index
    %c0_25 = arith.constant 0 : index
    %41 = vector.load %arg10[%c0_23, %c0_24, %c0_25] : memref<4x8x32xbf16, #tpu.memory_space<vmem>>, vector<1x8x32xbf16>
    %42 = vector.shape_cast %41 : vector<1x8x32xbf16> to vector<8x32xbf16>
    %cst_26 = arith.constant dense<0.000000e+00> : vector<8x32xf32>
    %43 = tpu.matmul %40, %42, %cst_26 {dimension_numbers = #tpu.dot_dimension_numbers<[1], [0], [0], [1], [0, 0, 1, 1], [], []>} : vector<8x8xbf16>, vector<8x32xbf16>, vector<8x32xf32> -> vector<8x32xf32>
    %44 = arith.addf %10, %43 : vector<8x32xf32>
    %c1 = arith.constant 1 : index
    %c0_27 = arith.constant 0 : index
    %c0_28 = arith.constant 0 : index
    %45 = vector.load %arg4[%c1, %c0_27, %c0_28] : memref<4x32x8xbf16, #tpu.memory_space<vmem>>, vector<1x32x8xbf16>
    %46 = vector.shape_cast %45 : vector<1x32x8xbf16> to vector<32x8xbf16>
    %cst_29 = arith.constant dense<0.000000e+00> : vector<8x8xf32>
    %47 = tpu.matmul %7, %46, %cst_29 {dimension_numbers = #tpu.dot_dimension_numbers<[1], [0], [0], [1], [0, 0, 1, 1], [], []>} : vector<8x32xbf16>, vector<32x8xbf16>, vector<8x8xf32> -> vector<8x8xf32>
    %c1_30 = arith.constant 1 : index
    %c0_31 = arith.constant 0 : index
    %c0_32 = arith.constant 0 : index
    %48 = vector.load %arg5[%c1_30, %c0_31, %c0_32] : memref<4x1x8xf32, #tpu.memory_space<vmem>>, vector<1x1x8xf32>
    %49 = vector.shape_cast %48 : vector<1x1x8xf32> to vector<1x8xf32>
    %50 = vector.broadcast %49 : vector<1x8xf32> to vector<8x8xf32>
    %51 = arith.addf %47, %50 : vector<8x8xf32>
    %cst_33 = arith.constant 0.353553385 : f32
    %52 = vector.broadcast %cst_33 : f32 to vector<8x8xf32>
    %53 = arith.mulf %51, %52 : vector<8x8xf32>
    %54 = arith.truncf %53 : vector<8x8xf32> to vector<8x8xbf16>
    %c1_34 = arith.constant 1 : index
    %c0_35 = arith.constant 0 : index
    %c0_36 = arith.constant 0 : index
    %55 = vector.load %arg21[%c1_34, %c0_35, %c0_36] : memref<4x8x8xbf16, #tpu.memory_space<vmem>>, vector<1x8x8xbf16>
    %56 = vector.shape_cast %55 : vector<1x8x8xbf16> to vector<8x8xbf16>
    %cst_37 = arith.constant dense<0.000000e+00> : vector<8x8xf32>
    %57 = tpu.matmul %54, %56, %cst_37 {dimension_numbers = #tpu.dot_dimension_numbers<[1], [0], [0], [1], [0, 0, 1, 1], [], []>} : vector<8x8xbf16>, vector<8x8xbf16>, vector<8x8xf32> -> vector<8x8xf32>
    %58 = vector.broadcast %9 : vector<1x8xf32> to vector<8x8xf32>
    %59 = arith.addf %57, %58 : vector<8x8xf32>
    %cst_38 = arith.constant dense<0xFF800000> : vector<8xf32>
    %60 = vector.multi_reduction <maximumf>, %59, %cst_38 [1] : vector<8x8xf32> to vector<8xf32>
    %61 = vector.shape_cast %60 : vector<8xf32> to vector<8x1xf32>
    %62 = vector.broadcast %61 : vector<8x1xf32> to vector<8x8xf32>
    %63 = arith.subf %59, %62 : vector<8x8xf32>
    %64 = math.exp %63 : vector<8x8xf32>
    %cst_39 = arith.constant dense<0.000000e+00> : vector<8xf32>
    %65 = vector.multi_reduction <add>, %64, %cst_39 [1] : vector<8x8xf32> to vector<8xf32>
    %66 = vector.shape_cast %65 : vector<8xf32> to vector<8x1xf32>
    %67 = tpu.reciprocal %66 {approx = true} : vector<8x1xf32> -> vector<8x1xf32>
    %68 = vector.broadcast %67 : vector<8x1xf32> to vector<8x8xf32>
    %69 = arith.mulf %64, %68 : vector<8x8xf32>
    %70 = arith.truncf %69 : vector<8x8xf32> to vector<8x8xbf16>
    %c1_40 = arith.constant 1 : index
    %c0_41 = arith.constant 0 : index
    %c0_42 = arith.constant 0 : index
    %71 = vector.load %arg22[%c1_40, %c0_41, %c0_42] : memref<4x8x8xbf16, #tpu.memory_space<vmem>>, vector<1x8x8xbf16>
    %72 = vector.shape_cast %71 : vector<1x8x8xbf16> to vector<8x8xbf16>
    %cst_43 = arith.constant dense<0.000000e+00> : vector<8x8xf32>
    %73 = tpu.matmul %70, %72, %cst_43 {dimension_numbers = #tpu.dot_dimension_numbers<[1], [0], [0], [1], [0, 0, 1, 1], [], []>} : vector<8x8xbf16>, vector<8x8xbf16>, vector<8x8xf32> -> vector<8x8xf32>
    %74 = arith.truncf %73 : vector<8x8xf32> to vector<8x8xbf16>
    %c1_44 = arith.constant 1 : index
    %c0_45 = arith.constant 0 : index
    %c0_46 = arith.constant 0 : index
    %75 = vector.load %arg10[%c1_44, %c0_45, %c0_46] : memref<4x8x32xbf16, #tpu.memory_space<vmem>>, vector<1x8x32xbf16>
    %76 = vector.shape_cast %75 : vector<1x8x32xbf16> to vector<8x32xbf16>
    %cst_47 = arith.constant dense<0.000000e+00> : vector<8x32xf32>
    %77 = tpu.matmul %74, %76, %cst_47 {dimension_numbers = #tpu.dot_dimension_numbers<[1], [0], [0], [1], [0, 0, 1, 1], [], []>} : vector<8x8xbf16>, vector<8x32xbf16>, vector<8x32xf32> -> vector<8x32xf32>
    %78 = arith.addf %44, %77 : vector<8x32xf32>
    %c2 = arith.constant 2 : index
    %c0_48 = arith.constant 0 : index
    %c0_49 = arith.constant 0 : index
    %79 = vector.load %arg4[%c2, %c0_48, %c0_49] : memref<4x32x8xbf16, #tpu.memory_space<vmem>>, vector<1x32x8xbf16>
    %80 = vector.shape_cast %79 : vector<1x32x8xbf16> to vector<32x8xbf16>
    %cst_50 = arith.constant dense<0.000000e+00> : vector<8x8xf32>
    %81 = tpu.matmul %7, %80, %cst_50 {dimension_numbers = #tpu.dot_dimension_numbers<[1], [0], [0], [1], [0, 0, 1, 1], [], []>} : vector<8x32xbf16>, vector<32x8xbf16>, vector<8x8xf32> -> vector<8x8xf32>
    %c2_51 = arith.constant 2 : index
    %c0_52 = arith.constant 0 : index
    %c0_53 = arith.constant 0 : index
    %82 = vector.load %arg5[%c2_51, %c0_52, %c0_53] : memref<4x1x8xf32, #tpu.memory_space<vmem>>, vector<1x1x8xf32>
    %83 = vector.shape_cast %82 : vector<1x1x8xf32> to vector<1x8xf32>
    %84 = vector.broadcast %83 : vector<1x8xf32> to vector<8x8xf32>
    %85 = arith.addf %81, %84 : vector<8x8xf32>
    %cst_54 = arith.constant 0.353553385 : f32
    %86 = vector.broadcast %cst_54 : f32 to vector<8x8xf32>
    %87 = arith.mulf %85, %86 : vector<8x8xf32>
    %88 = arith.truncf %87 : vector<8x8xf32> to vector<8x8xbf16>
    %c2_55 = arith.constant 2 : index
    %c0_56 = arith.constant 0 : index
    %c0_57 = arith.constant 0 : index
    %89 = vector.load %arg21[%c2_55, %c0_56, %c0_57] : memref<4x8x8xbf16, #tpu.memory_space<vmem>>, vector<1x8x8xbf16>
    %90 = vector.shape_cast %89 : vector<1x8x8xbf16> to vector<8x8xbf16>
    %cst_58 = arith.constant dense<0.000000e+00> : vector<8x8xf32>
    %91 = tpu.matmul %88, %90, %cst_58 {dimension_numbers = #tpu.dot_dimension_numbers<[1], [0], [0], [1], [0, 0, 1, 1], [], []>} : vector<8x8xbf16>, vector<8x8xbf16>, vector<8x8xf32> -> vector<8x8xf32>
    %92 = vector.broadcast %9 : vector<1x8xf32> to vector<8x8xf32>
    %93 = arith.addf %91, %92 : vector<8x8xf32>
    %cst_59 = arith.constant dense<0xFF800000> : vector<8xf32>
    %94 = vector.multi_reduction <maximumf>, %93, %cst_59 [1] : vector<8x8xf32> to vector<8xf32>
    %95 = vector.shape_cast %94 : vector<8xf32> to vector<8x1xf32>
    %96 = vector.broadcast %95 : vector<8x1xf32> to vector<8x8xf32>
    %97 = arith.subf %93, %96 : vector<8x8xf32>
    %98 = math.exp %97 : vector<8x8xf32>
    %cst_60 = arith.constant dense<0.000000e+00> : vector<8xf32>
    %99 = vector.multi_reduction <add>, %98, %cst_60 [1] : vector<8x8xf32> to vector<8xf32>
    %100 = vector.shape_cast %99 : vector<8xf32> to vector<8x1xf32>
    %101 = tpu.reciprocal %100 {approx = true} : vector<8x1xf32> -> vector<8x1xf32>
    %102 = vector.broadcast %101 : vector<8x1xf32> to vector<8x8xf32>
    %103 = arith.mulf %98, %102 : vector<8x8xf32>
    %104 = arith.truncf %103 : vector<8x8xf32> to vector<8x8xbf16>
    %c2_61 = arith.constant 2 : index
    %c0_62 = arith.constant 0 : index
    %c0_63 = arith.constant 0 : index
    %105 = vector.load %arg22[%c2_61, %c0_62, %c0_63] : memref<4x8x8xbf16, #tpu.memory_space<vmem>>, vector<1x8x8xbf16>
    %106 = vector.shape_cast %105 : vector<1x8x8xbf16> to vector<8x8xbf16>
    %cst_64 = arith.constant dense<0.000000e+00> : vector<8x8xf32>
    %107 = tpu.matmul %104, %106, %cst_64 {dimension_numbers = #tpu.dot_dimension_numbers<[1], [0], [0], [1], [0, 0, 1, 1], [], []>} : vector<8x8xbf16>, vector<8x8xbf16>, vector<8x8xf32> -> vector<8x8xf32>
    %108 = arith.truncf %107 : vector<8x8xf32> to vector<8x8xbf16>
    %c2_65 = arith.constant 2 : index
    %c0_66 = arith.constant 0 : index
    %c0_67 = arith.constant 0 : index
    %109 = vector.load %arg10[%c2_65, %c0_66, %c0_67] : memref<4x8x32xbf16, #tpu.memory_space<vmem>>, vector<1x8x32xbf16>
    %110 = vector.shape_cast %109 : vector<1x8x32xbf16> to vector<8x32xbf16>
    %cst_68 = arith.constant dense<0.000000e+00> : vector<8x32xf32>
    %111 = tpu.matmul %108, %110, %cst_68 {dimension_numbers = #tpu.dot_dimension_numbers<[1], [0], [0], [1], [0, 0, 1, 1], [], []>} : vector<8x8xbf16>, vector<8x32xbf16>, vector<8x32xf32> -> vector<8x32xf32>
    %112 = arith.addf %78, %111 : vector<8x32xf32>
    %c3 = arith.constant 3 : index
    %c0_69 = arith.constant 0 : index
    %c0_70 = arith.constant 0 : index
    %113 = vector.load %arg4[%c3, %c0_69, %c0_70] : memref<4x32x8xbf16, #tpu.memory_space<vmem>>, vector<1x32x8xbf16>
    %114 = vector.shape_cast %113 : vector<1x32x8xbf16> to vector<32x8xbf16>
    %cst_71 = arith.constant dense<0.000000e+00> : vector<8x8xf32>
    %115 = tpu.matmul %7, %114, %cst_71 {dimension_numbers = #tpu.dot_dimension_numbers<[1], [0], [0], [1], [0, 0, 1, 1], [], []>} : vector<8x32xbf16>, vector<32x8xbf16>, vector<8x8xf32> -> vector<8x8xf32>
    %c3_72 = arith.constant 3 : index
    %c0_73 = arith.constant 0 : index
    %c0_74 = arith.constant 0 : index
    %116 = vector.load %arg5[%c3_72, %c0_73, %c0_74] : memref<4x1x8xf32, #tpu.memory_space<vmem>>, vector<1x1x8xf32>
    %117 = vector.shape_cast %116 : vector<1x1x8xf32> to vector<1x8xf32>
    %118 = vector.broadcast %117 : vector<1x8xf32> to vector<8x8xf32>
    %119 = arith.addf %115, %118 : vector<8x8xf32>
    %cst_75 = arith.constant 0.353553385 : f32
    %120 = vector.broadcast %cst_75 : f32 to vector<8x8xf32>
    %121 = arith.mulf %119, %120 : vector<8x8xf32>
    %122 = arith.truncf %121 : vector<8x8xf32> to vector<8x8xbf16>
    %c3_76 = arith.constant 3 : index
    %c0_77 = arith.constant 0 : index
    %c0_78 = arith.constant 0 : index
    %123 = vector.load %arg21[%c3_76, %c0_77, %c0_78] : memref<4x8x8xbf16, #tpu.memory_space<vmem>>, vector<1x8x8xbf16>
    %124 = vector.shape_cast %123 : vector<1x8x8xbf16> to vector<8x8xbf16>
    %cst_79 = arith.constant dense<0.000000e+00> : vector<8x8xf32>
    %125 = tpu.matmul %122, %124, %cst_79 {dimension_numbers = #tpu.dot_dimension_numbers<[1], [0], [0], [1], [0, 0, 1, 1], [], []>} : vector<8x8xbf16>, vector<8x8xbf16>, vector<8x8xf32> -> vector<8x8xf32>
    %126 = vector.broadcast %9 : vector<1x8xf32> to vector<8x8xf32>
    %127 = arith.addf %125, %126 : vector<8x8xf32>
    %cst_80 = arith.constant dense<0xFF800000> : vector<8xf32>
    %128 = vector.multi_reduction <maximumf>, %127, %cst_80 [1] : vector<8x8xf32> to vector<8xf32>
    %129 = vector.shape_cast %128 : vector<8xf32> to vector<8x1xf32>
    %130 = vector.broadcast %129 : vector<8x1xf32> to vector<8x8xf32>
    %131 = arith.subf %127, %130 : vector<8x8xf32>
    %132 = math.exp %131 : vector<8x8xf32>
    %cst_81 = arith.constant dense<0.000000e+00> : vector<8xf32>
    %133 = vector.multi_reduction <add>, %132, %cst_81 [1] : vector<8x8xf32> to vector<8xf32>
    %134 = vector.shape_cast %133 : vector<8xf32> to vector<8x1xf32>
    %135 = tpu.reciprocal %134 {approx = true} : vector<8x1xf32> -> vector<8x1xf32>
    %136 = vector.broadcast %135 : vector<8x1xf32> to vector<8x8xf32>
    %137 = arith.mulf %132, %136 : vector<8x8xf32>
    %138 = arith.truncf %137 : vector<8x8xf32> to vector<8x8xbf16>
    %c3_82 = arith.constant 3 : index
    %c0_83 = arith.constant 0 : index
    %c0_84 = arith.constant 0 : index
    %139 = vector.load %arg22[%c3_82, %c0_83, %c0_84] : memref<4x8x8xbf16, #tpu.memory_space<vmem>>, vector<1x8x8xbf16>
    %140 = vector.shape_cast %139 : vector<1x8x8xbf16> to vector<8x8xbf16>
    %cst_85 = arith.constant dense<0.000000e+00> : vector<8x8xf32>
    %141 = tpu.matmul %138, %140, %cst_85 {dimension_numbers = #tpu.dot_dimension_numbers<[1], [0], [0], [1], [0, 0, 1, 1], [], []>} : vector<8x8xbf16>, vector<8x8xbf16>, vector<8x8xf32> -> vector<8x8xf32>
    %142 = arith.truncf %141 : vector<8x8xf32> to vector<8x8xbf16>
    %c3_86 = arith.constant 3 : index
    %c0_87 = arith.constant 0 : index
    %c0_88 = arith.constant 0 : index
    %143 = vector.load %arg10[%c3_86, %c0_87, %c0_88] : memref<4x8x32xbf16, #tpu.memory_space<vmem>>, vector<1x8x32xbf16>
    %144 = vector.shape_cast %143 : vector<1x8x32xbf16> to vector<8x32xbf16>
    %cst_89 = arith.constant dense<0.000000e+00> : vector<8x32xf32>
    %145 = tpu.matmul %142, %144, %cst_89 {dimension_numbers = #tpu.dot_dimension_numbers<[1], [0], [0], [1], [0, 0, 1, 1], [], []>} : vector<8x8xbf16>, vector<8x32xbf16>, vector<8x32xf32> -> vector<8x32xf32>
    %146 = arith.addf %112, %145 : vector<8x32xf32>
    %c0_90 = arith.constant 0 : index
    %c0_91 = arith.constant 0 : index
    %147 = vector.load %arg11[%c0_90, %c0_91] : memref<1x32xf32, #tpu.memory_space<vmem>>, vector<1x32xf32>
    %148 = vector.broadcast %147 : vector<1x32xf32> to vector<8x32xf32>
    %149 = arith.addf %146, %148 : vector<8x32xf32>
    %150 = arith.extf %7 : vector<8x32xbf16> to vector<8x32xf32>
    %151 = arith.addf %150, %149 : vector<8x32xf32>
    %c0_92 = arith.constant 0 : index
    %c0_93 = arith.constant 0 : index
    %152 = vector.load %arg16[%c0_92, %c0_93] : memref<1x32xf32, #tpu.memory_space<vmem>>, vector<1x32xf32>
    %c0_94 = arith.constant 0 : index
    %c0_95 = arith.constant 0 : index
    %153 = vector.load %arg17[%c0_94, %c0_95] : memref<1x32xf32, #tpu.memory_space<vmem>>, vector<1x32xf32>
    %cst_96 = arith.constant dense<0.000000e+00> : vector<8xf32>
    %154 = vector.multi_reduction <add>, %151, %cst_96 [1] : vector<8x32xf32> to vector<8xf32>
    %155 = vector.shape_cast %154 : vector<8xf32> to vector<8x1xf32>
    %cst_97 = arith.constant 3.200000e+01 : f32
    %156 = vector.broadcast %cst_97 : f32 to vector<8x1xf32>
    %157 = arith.divf %155, %156 : vector<8x1xf32>
    %158 = vector.broadcast %157 : vector<8x1xf32> to vector<8x32xf32>
    %159 = arith.subf %151, %158 : vector<8x32xf32>
    %160 = arith.mulf %159, %159 : vector<8x32xf32>
    %cst_98 = arith.constant dense<0.000000e+00> : vector<8xf32>
    %161 = vector.multi_reduction <add>, %160, %cst_98 [1] : vector<8x32xf32> to vector<8xf32>
    %162 = vector.shape_cast %161 : vector<8xf32> to vector<8x1xf32>
    %cst_99 = arith.constant 3.200000e+01 : f32
    %163 = vector.broadcast %cst_99 : f32 to vector<8x1xf32>
    %164 = arith.divf %162, %163 : vector<8x1xf32>
    %165 = vector.broadcast %157 : vector<8x1xf32> to vector<8x32xf32>
    %166 = arith.subf %151, %165 : vector<8x32xf32>
    %cst_100 = arith.constant 9.99999996E-13 : f32
    %167 = vector.broadcast %cst_100 : f32 to vector<8x1xf32>
    %168 = arith.addf %164, %167 : vector<8x1xf32>
    %169 = math.rsqrt %168 : vector<8x1xf32>
    %170 = vector.broadcast %169 : vector<8x1xf32> to vector<8x32xf32>
    %171 = arith.mulf %166, %170 : vector<8x32xf32>
    %172 = vector.broadcast %152 : vector<1x32xf32> to vector<8x32xf32>
    %173 = arith.mulf %171, %172 : vector<8x32xf32>
    %174 = vector.broadcast %153 : vector<1x32xf32> to vector<8x32xf32>
    %175 = arith.addf %173, %174 : vector<8x32xf32>
    %176 = arith.truncf %175 : vector<8x32xf32> to vector<8x32xbf16>
    %c0_101 = arith.constant 0 : index
    %c0_102 = arith.constant 0 : index
    %177 = vector.load %arg12[%c0_101, %c0_102] : memref<32x64xbf16, #tpu.memory_space<vmem>>, vector<32x64xbf16>
    %cst_103 = arith.constant dense<0.000000e+00> : vector<8x64xf32>
    %178 = tpu.matmul %176, %177, %cst_103 {dimension_numbers = #tpu.dot_dimension_numbers<[1], [0], [0], [1], [0, 0, 1, 1], [], []>} : vector<8x32xbf16>, vector<32x64xbf16>, vector<8x64xf32> -> vector<8x64xf32>
    %c0_104 = arith.constant 0 : index
    %c0_105 = arith.constant 0 : index
    %179 = vector.load %arg13[%c0_104, %c0_105] : memref<1x64xf32, #tpu.memory_space<vmem>>, vector<1x64xf32>
    %180 = vector.broadcast %179 : vector<1x64xf32> to vector<8x64xf32>
    %181 = arith.addf %178, %180 : vector<8x64xf32>
    %cst_106 = arith.constant 5.000000e-01 : f32
    %182 = vector.broadcast %cst_106 : f32 to vector<8x64xf32>
    %183 = arith.mulf %182, %181 : vector<8x64xf32>
    %cst_107 = arith.constant 4.471500e-02 : f32
    %184 = vector.broadcast %cst_107 : f32 to vector<8x64xf32>
    %185 = arith.mulf %184, %181 : vector<8x64xf32>
    %186 = arith.mulf %185, %181 : vector<8x64xf32>
    %187 = arith.mulf %186, %181 : vector<8x64xf32>
    %188 = arith.addf %181, %187 : vector<8x64xf32>
    %cst_108 = arith.constant 0.797884583 : f32
    %189 = vector.broadcast %cst_108 : f32 to vector<8x64xf32>
    %190 = arith.mulf %189, %188 : vector<8x64xf32>
    %191 = math.tanh %190 : vector<8x64xf32>
    %cst_109 = arith.constant 1.000000e+00 : f32
    %192 = vector.broadcast %cst_109 : f32 to vector<8x64xf32>
    %193 = arith.addf %192, %191 : vector<8x64xf32>
    %194 = arith.mulf %183, %193 : vector<8x64xf32>
    %195 = arith.truncf %194 : vector<8x64xf32> to vector<8x64xbf16>
    %c0_110 = arith.constant 0 : index
    %c0_111 = arith.constant 0 : index
    %196 = vector.load %arg14[%c0_110, %c0_111] : memref<64x32xbf16, #tpu.memory_space<vmem>>, vector<64x32xbf16>
    %cst_112 = arith.constant dense<0.000000e+00> : vector<8x32xf32>
    %197 = tpu.matmul %195, %196, %cst_112 {dimension_numbers = #tpu.dot_dimension_numbers<[1], [0], [0], [1], [0, 0, 1, 1], [], []>} : vector<8x64xbf16>, vector<64x32xbf16>, vector<8x32xf32> -> vector<8x32xf32>
    %c0_113 = arith.constant 0 : index
    %c0_114 = arith.constant 0 : index
    %198 = vector.load %arg15[%c0_113, %c0_114] : memref<1x32xf32, #tpu.memory_space<vmem>>, vector<1x32xf32>
    %199 = vector.broadcast %198 : vector<1x32xf32> to vector<8x32xf32>
    %200 = arith.addf %197, %199 : vector<8x32xf32>
    %201 = arith.addf %175, %200 : vector<8x32xf32>
    %c0_115 = arith.constant 0 : index
    %c0_116 = arith.constant 0 : index
    %202 = vector.load %arg18[%c0_115, %c0_116] : memref<1x32xf32, #tpu.memory_space<vmem>>, vector<1x32xf32>
    %c0_117 = arith.constant 0 : index
    %c0_118 = arith.constant 0 : index
    %203 = vector.load %arg19[%c0_117, %c0_118] : memref<1x32xf32, #tpu.memory_space<vmem>>, vector<1x32xf32>
    %cst_119 = arith.constant dense<0.000000e+00> : vector<8xf32>
    %204 = vector.multi_reduction <add>, %201, %cst_119 [1] : vector<8x32xf32> to vector<8xf32>
    %205 = vector.shape_cast %204 : vector<8xf32> to vector<8x1xf32>
    %cst_120 = arith.constant 3.200000e+01 : f32
    %206 = vector.broadcast %cst_120 : f32 to vector<8x1xf32>
    %207 = arith.divf %205, %206 : vector<8x1xf32>
    %208 = vector.broadcast %207 : vector<8x1xf32> to vector<8x32xf32>
    %209 = arith.subf %201, %208 : vector<8x32xf32>
    %210 = arith.mulf %209, %209 : vector<8x32xf32>
    %cst_121 = arith.constant dense<0.000000e+00> : vector<8xf32>
    %211 = vector.multi_reduction <add>, %210, %cst_121 [1] : vector<8x32xf32> to vector<8xf32>
    %212 = vector.shape_cast %211 : vector<8xf32> to vector<8x1xf32>
    %cst_122 = arith.constant 3.200000e+01 : f32
    %213 = vector.broadcast %cst_122 : f32 to vector<8x1xf32>
    %214 = arith.divf %212, %213 : vector<8x1xf32>
    %215 = vector.broadcast %207 : vector<8x1xf32> to vector<8x32xf32>
    %216 = arith.subf %201, %215 : vector<8x32xf32>
    %cst_123 = arith.constant 9.99999996E-13 : f32
    %217 = vector.broadcast %cst_123 : f32 to vector<8x1xf32>
    %218 = arith.addf %214, %217 : vector<8x1xf32>
    %219 = math.rsqrt %218 : vector<8x1xf32>
    %220 = vector.broadcast %219 : vector<8x1xf32> to vector<8x32xf32>
    %221 = arith.mulf %216, %220 : vector<8x32xf32>
    %222 = vector.broadcast %202 : vector<1x32xf32> to vector<8x32xf32>
    %223 = arith.mulf %221, %222 : vector<8x32xf32>
    %224 = vector.broadcast %203 : vector<1x32xf32> to vector<8x32xf32>
    %225 = arith.addf %223, %224 : vector<8x32xf32>
    %226 = arith.truncf %225 : vector<8x32xf32> to vector<8x32xbf16>
    %c0_124 = arith.constant 0 : index
    %c0_125 = arith.constant 0 : index
    %c0_126 = arith.constant 0 : index
    %227 = vector.load %arg20[%c0_124, %c0_125, %c0_126] : memref<1x8x32xbf16, #tpu.memory_space<vmem>>, vector<1x8x32xbf16>
    %228 = vector.shape_cast %227 : vector<1x8x32xbf16> to vector<8x32xbf16>
    %229 = vector.shape_cast %226 : vector<8x32xbf16> to vector<1x8x32xbf16>
    tpu.vector_store %arg20[%c0_124, %c0_125, %c0_126], %229 {strides = array<i32>} : memref<1x8x32xbf16, #tpu.memory_space<vmem>>, vector<1x8x32xbf16>,
    return
  }
  func.func @transform_0(%arg0: i32, %arg1: i32) -> (i32, i32, i32) {
    %c0_i32 = arith.constant 0 : i32
    %c0_i32_0 = arith.constant 0 : i32
    %c0_i32_1 = arith.constant 0 : i32
    return %arg0, %c0_i32, %c0_i32_0 : i32, i32, i32
  }
  func.func @transform_1(%arg0: i32, %arg1: i32) -> (i32, i32, i32) {
    %c0_i32 = arith.constant 0 : i32
    %c0_i32_0 = arith.constant 0 : i32
    %c0_i32_1 = arith.constant 0 : i32
    return %arg0, %c0_i32, %c0_i32_0 : i32, i32, i32
  }
  func.func @transform_2(%arg0: i32, %arg1: i32) -> (i32, i32, i32) {
    %c0_i32 = arith.constant 0 : i32
    %c0_i32_0 = arith.constant 0 : i32
    %c0_i32_1 = arith.constant 0 : i32
    %c0_i32_2 = arith.constant 0 : i32
    return %c0_i32, %c0_i32_0, %c0_i32_1 : i32, i32, i32
  }
  func.func @transform_3(%arg0: i32, %arg1: i32) -> (i32, i32, i32) {
    %c0_i32 = arith.constant 0 : i32
    %c0_i32_0 = arith.constant 0 : i32
    %c0_i32_1 = arith.constant 0 : i32
    %c0_i32_2 = arith.constant 0 : i32
    return %c0_i32, %c0_i32_0, %c0_i32_1 : i32, i32, i32
  }
  func.func @transform_4(%arg0: i32, %arg1: i32) -> (i32, i32, i32) {
    %c0_i32 = arith.constant 0 : i32
    %c0_i32_0 = arith.constant 0 : i32
    %c0_i32_1 = arith.constant 0 : i32
    %c0_i32_2 = arith.constant 0 : i32
    return %c0_i32, %c0_i32_0, %c0_i32_1 : i32, i32, i32
  }
  func.func @transform_5(%arg0: i32, %arg1: i32) -> (i32, i32, i32) {
    %c0_i32 = arith.constant 0 : i32
    %c0_i32_0 = arith.constant 0 : i32
    %c0_i32_1 = arith.constant 0 : i32
    %c0_i32_2 = arith.constant 0 : i32
    return %c0_i32, %c0_i32_0, %c0_i32_1 : i32, i32, i32
  }
  func.func @transform_6(%arg0: i32, %arg1: i32) -> (i32, i32, i32) {
    %c0_i32 = arith.constant 0 : i32
    %c0_i32_0 = arith.constant 0 : i32
    %c0_i32_1 = arith.constant 0 : i32
    %c0_i32_2 = arith.constant 0 : i32
    return %c0_i32, %c0_i32_0, %c0_i32_1 : i32, i32, i32
  }
  func.func @transform_7(%arg0: i32, %arg1: i32) -> (i32, i32, i32) {
    %c0_i32 = arith.constant 0 : i32
    %c0_i32_0 = arith.constant 0 : i32
    %c0_i32_1 = arith.constant 0 : i32
    %c0_i32_2 = arith.constant 0 : i32
    return %c0_i32, %c0_i32_0, %c0_i32_1 : i32, i32, i32
  }
  func.func @transform_8(%arg0: i32, %arg1: i32) -> (i32, i32, i32) {
    %c0_i32 = arith.constant 0 : i32
    %c0_i32_0 = arith.constant 0 : i32
    %c0_i32_1 = arith.constant 0 : i32
    %c0_i32_2 = arith.constant 0 : i32
    return %c0_i32, %c0_i32_0, %c0_i32_1 : i32, i32, i32
  }
  func.func @transform_9(%arg0: i32, %arg1: i32) -> (i32, i32) {
    %c0_i32 = arith.constant 0 : i32
    %c0_i32_0 = arith.constant 0 : i32
    %c0_i32_1 = arith.constant 0 : i32
    return %c0_i32, %c0_i32_0 : i32, i32
  }
  func.func @transform_10(%arg0: i32, %arg1: i32) -> (i32, i32) {
    %c0_i32 = arith.constant 0 : i32
    %c0_i32_0 = arith.constant 0 : i32
    %c0_i32_1 = arith.constant 0 : i32
    return %c0_i32, %c0_i32_0 : i32, i32
  }
  func.func @transform_11(%arg0: i32, %arg1: i32) -> (i32, i32) {
    %c0_i32 = arith.constant 0 : i32
    %c0_i32_0 = arith.constant 0 : i32
    %c0_i32_1 = arith.constant 0 : i32
    return %c0_i32, %c0_i32_0 : i32, i32
  }
  func.func @transform_12(%arg0: i32, %arg1: i32) -> (i32, i32) {
    %c0_i32 = arith.constant 0 : i32
    %c0_i32_0 = arith.constant 0 : i32
    %c0_i32_1 = arith.constant 0 : i32
    return %c0_i32, %c0_i32_0 : i32, i32
  }
  func.func @transform_13(%arg0: i32, %arg1: i32) -> (i32, i32) {
    %c0_i32 = arith.constant 0 : i32
    %c0_i32_0 = arith.constant 0 : i32
    %c0_i32_1 = arith.constant 0 : i32
    return %c0_i32, %c0_i32_0 : i32, i32
  }
  func.func @transform_14(%arg0: i32, %arg1: i32) -> (i32, i32) {
    %c0_i32 = arith.constant 0 : i32
    %c0_i32_0 = arith.constant 0 : i32
    %c0_i32_1 = arith.constant 0 : i32
    return %c0_i32, %c0_i32_0 : i32, i32
  }
  func.func @transform_15(%arg0: i32, %arg1: i32) -> (i32, i32) {
    %c0_i32 = arith.constant 0 : i32
    %c0_i32_0 = arith.constant 0 : i32
    %c0_i32_1 = arith.constant 0 : i32
    return %c0_i32, %c0_i32_0 : i32, i32
  }
  func.func @transform_16(%arg0: i32, %arg1: i32) -> (i32, i32) {
    %c0_i32 = arith.constant 0 : i32
    %c0_i32_0 = arith.constant 0 : i32
    %c0_i32_1 = arith.constant 0 : i32
    return %c0_i32, %c0_i32_0 : i32, i32
  }
  func.func @transform_17(%arg0: i32, %arg1: i32) -> (i32, i32) {
    %c0_i32 = arith.constant 0 : i32
    %c0_i32_0 = arith.constant 0 : i32
    %c0_i32_1 = arith.constant 0 : i32
    return %c0_i32, %c0_i32_0 : i32, i32
  }
  func.func @transform_18(%arg0: i32, %arg1: i32) -> (i32, i32, i32) {
    %c0_i32 = arith.constant 0 : i32
    %c0_i32_0 = arith.constant 0 : i32
    return %arg0, %arg1, %c0_i32 : i32, i32, i32
  }
}

</mosaic_0001>

<llo_original>
// kernel: tpu_custom_call.1
$region0: #{tpu_custom_call.1}
  #allocation0 [shape = 'u32[]', space=smem, size = 0x4, offset = 0x4, fixed_abs, tag = 'smem constant byte address 0x4 - core index']
  #allocation1 [shape = 'u32[144,128]{1,0:T(1,128)}', space=vmem, size = 0x12000, scoped, tag = 'internal scratch']
  #allocation2 [shape = 'bf16[4,8,8]{2,1,0:T(8,128)(2,1)}', space=vmem, size = 0x2000, scoped, tag = 'scratch operand']
  #allocation3 [shape = 'bf16[4,8,8]{2,1,0:T(8,128)(2,1)}', space=vmem, size = 0x2000, scoped, tag = 'scratch operand']
  %s0 = inlined_call_operand.vmem [shape: bf16[2,8,32], index: 0, kind: input, shape index: {}]
  %s1 = inlined_call_operand.vmem [shape: f32[2,1,8], index: 1, kind: input, shape index: {}]
  %s2 = inlined_call_operand.vmem [shape: bf16[4,32,8], index: 2, kind: input, shape index: {}]
  %s3 = inlined_call_operand.vmem [shape: f32[4,1,8], index: 3, kind: input, shape index: {}]
  %s4 = inlined_call_operand.vmem [shape: bf16[4,8,32], index: 4, kind: input, shape index: {}]
  %s5 = inlined_call_operand.vmem [shape: f32[4,8,1], index: 5, kind: input, shape index: {}]
  %s6 = inlined_call_operand.vmem [shape: bf16[4,32,8], index: 6, kind: input, shape index: {}]
  %s7 = inlined_call_operand.vmem [shape: f32[4,1,8], index: 7, kind: input, shape index: {}]
  %s8 = inlined_call_operand.vmem [shape: bf16[4,8,32], index: 8, kind: input, shape index: {}]
  %s9 = inlined_call_operand.vmem [shape: f32[1,32], index: 9, kind: input, shape index: {}]
  %s10 = inlined_call_operand.vmem [shape: bf16[32,64], index: 10, kind: input, shape index: {}]
  %s11 = inlined_call_operand.vmem [shape: f32[1,64], index: 11, kind: input, shape index: {}]
  %s12 = inlined_call_operand.vmem [shape: bf16[64,32], index: 12, kind: input, shape index: {}]
  %s13 = inlined_call_operand.vmem [shape: f32[1,32], index: 13, kind: input, shape index: {}]
  %s14 = inlined_call_operand.vmem [shape: f32[1,32], index: 14, kind: input, shape index: {}]
  %s15 = inlined_call_operand.vmem [shape: f32[1,32], index: 15, kind: input, shape index: {}]
  %s16 = inlined_call_operand.vmem [shape: f32[1,32], index: 16, kind: input, shape index: {}]
  %s17 = inlined_call_operand.vmem [shape: f32[1,32], index: 17, kind: input, shape index: {}]
  %s18 = inlined_call_operand.hbm [shape: bf16[2,8,32], index: 18, kind: output, shape index: {}]
  %s19 = sld [smem:[#allocation0]]
  $region109: #{tpu_custom_call.1} parent=0
    _
  %s21 = ssub.s32 1, %s19
  %s22 = scalar_select 0, %s21, %s19
  $region1: #{tpu_custom_call.1} parent=0
    #allocation4 [shape = 'u8[4096]{0}', space=vmem, size = 0x1000, scoped, tag = 'output window, operand 0']
    #allocation5 [shape = 's32[2]{0}', space=sflag, size = 0x8, scoped, tag = 'scoped memory for tpu_custom_call.1']
    %23 = vsyncpa [#allocation5], 0
    %s24 = scalar_lea.sflag [#allocation5], 1
    %25 = vsyncpa %s24, 0
    loop: start=0, step=1, limit=4
    $region2: #{tpu_custom_call.1} parent=1 // loop_pre_header
      _
    $region3: #{tpu_custom_call.1} parent=1 // loop_header
      %s27 = sphi 0, %s31
      %p28 = scmp.ge.s32.totalorder %s27, 4
      %s34 = sphi 0, %s46
      %s35 = sphi 0, %s42
      %s36 = sphi 0, %s34
      %s37 = sphi 0, %s35
      %s38 = sphi 0, %s36
      %s39 = sphi 0, %s37
      %s49 = sphi 0, %s51
      %s52 = sphi 0, %s49
      %s53 = sphi 0, %s52
      %s69 = sphi 0, %s53
      %s75 = sphi 0, %s77
      %s78 = sphi 0, %s75
      %s79 = sphi 0, %s78
      %s95 = sphi 0, %s79
      %s99 = sphi 0, %s99
      %s101 = sphi 0, %s99
      %s102 = sphi 0, %s101
      %s116 = sphi 0, %s102
      %s120 = sphi 0, %s120
      %s122 = sphi 0, %s120
      %s123 = sphi 0, %s122
      %s137 = sphi 0, %s123
      %s141 = sphi 0, %s141
      %s143 = sphi 0, %s141
      %s144 = sphi 0, %s143
      %s158 = sphi 0, %s144
      %s162 = sphi 0, %s162
      %s164 = sphi 0, %s162
      %s165 = sphi 0, %s164
      %s179 = sphi 0, %s165
      %s183 = sphi 0, %s183
      %s185 = sphi 0, %s183
      %s186 = sphi 0, %s185
      %s200 = sphi 0, %s186
      %s204 = sphi 0, %s204
      %s206 = sphi 0, %s204
      %s207 = sphi 0, %s206
      %s221 = sphi 0, %s207
      %s225 = sphi 0, %s225
      %s227 = sphi 0, %s225
      %s228 = sphi 0, %s227
      %s242 = sphi 0, %s228
      %s246 = sphi 0, %s246
      %s248 = sphi 0, %s246
      %s249 = sphi 0, %s248
      %s263 = sphi 0, %s249
      %s267 = sphi 0, %s267
      %s269 = sphi 0, %s267
      %s270 = sphi 0, %s269
      %s284 = sphi 0, %s270
      %s288 = sphi 0, %s288
      %s290 = sphi 0, %s288
      %s291 = sphi 0, %s290
      %s305 = sphi 0, %s291
      %s309 = sphi 0, %s309
      %s311 = sphi 0, %s309
      %s312 = sphi 0, %s311
      %s326 = sphi 0, %s312
      %s330 = sphi 0, %s330
      %s332 = sphi 0, %s330
      %s333 = sphi 0, %s332
      %s347 = sphi 0, %s333
      %s351 = sphi 0, %s351
      %s353 = sphi 0, %s351
      %s354 = sphi 0, %s353
      %s368 = sphi 0, %s354
      %s372 = sphi 0, %s372
      %s374 = sphi 0, %s372
      %s375 = sphi 0, %s374
      %s389 = sphi 0, %s375
      %s393 = sphi 0, %s393
      %s395 = sphi 0, %s393
      %s396 = sphi 0, %s395
      %s410 = sphi 0, %s396
      %s414 = sphi 0, %s414
      %s416 = sphi 0, %s414
      %s417 = sphi 0, %s416
      %s431 = sphi 0, %s417
      %s439 = sphi 0, %s441
      %s442 = sphi 0, %s439
      %s443 = sphi 0, %s442
      %s459 = sphi 0, %s443
    $region4: #{tpu_custom_call.1} parent=1 // loop_header_branch
      %30 = sbr.rel (%p28) target = $region8
    $region5: #{tpu_custom_call.1} parent=1 // loop_body
      %s32 = ssub.s32 %s27, 1
      %s33 = ssub.s32 %s27, 2
      %s40 = sadd.s32 1, %s35
      %p41 = scmp.ge.s32.totalorder %s40, 1
      %s42 = scalar_select %p41, 0, %s40
      %s43 = sadd.s32 1, %s34
      %s44 = scalar_select %p41, %s43, %s34
      %p45 = scmp.ge.s32.totalorder %s44, 2
      %s46 = scalar_select %p45, 0, %s44
      %s47 = ssub.s32 %s34, %s46
      %p48 = scmp.eq.s32.totalorder %s47, 0
      %s50 = sadd.s32 %s49, 1
      %s51 = scalar_select %p48, %s49, %s50
      %p54 = pneg %p48
      %p55 = scmp.eq.s32.totalorder %s27, 1
      %p56 = por %p54, %p55
      %p57 = scmp.ne.s32.totalorder %s49, %s52
      %p58 = scmp.eq.s32.totalorder %s27, 0
      %p59 = por %p57, %p58
      %p60 = scmp.ne.s32.totalorder %s49, %s52
      %p61 = scmp.eq.s32.totalorder %s32, 1
      %p62 = por %p60, %p61
      %p63 = scmp.ne.s32.totalorder %s52, %s53
      %p64 = scmp.eq.s32.totalorder %s32, 0
      %p65 = por %p63, %p64
      %p66 = scmp.ne.s32.totalorder %s52, %s53
      %p67 = scmp.eq.s32.totalorder %s33, 1
      %p68 = por %p66, %p67
      %p70 = scmp.ne.s32.totalorder %s53, %s69
      %p71 = scmp.eq.s32.totalorder %s33, 0
      %p72 = por %p70, %p71
      %s73 = ssub.s32 %s34, %s46
      %p74 = scmp.eq.s32.totalorder %s73, 0
      %s76 = sadd.s32 %s75, 1
      %s77 = scalar_select %p74, %s75, %s76
      %p80 = pneg %p74
      %p81 = scmp.eq.s32.totalorder %s27, 1
      %p82 = por %p80, %p81
      %p83 = scmp.ne.s32.totalorder %s75, %s78
      %p84 = scmp.eq.s32.totalorder %s27, 0
      %p85 = por %p83, %p84
      %p86 = scmp.ne.s32.totalorder %s75, %s78
      %p87 = scmp.eq.s32.totalorder %s32, 1
      %p88 = por %p86, %p87
      %p89 = scmp.ne.s32.totalorder %s78, %s79
      %p90 = scmp.eq.s32.totalorder %s32, 0
      %p91 = por %p89, %p90
      %p92 = scmp.ne.s32.totalorder %s78, %s79
      %p93 = scmp.eq.s32.totalorder %s33, 1
      %p94 = por %p92, %p93
      %p96 = scmp.ne.s32.totalorder %s79, %s95
      %p97 = scmp.eq.s32.totalorder %s33, 0
      %p98 = por %p96, %p97
      %s100 = sadd.s32 %s99, 1
      %p103 = scmp.eq.s32.totalorder %s27, 1
      %p104 = scmp.ne.s32.totalorder %s99, %s101
      %p105 = scmp.eq.s32.totalorder %s27, 0
      %p106 = por %p104, %p105
      %p107 = scmp.ne.s32.totalorder %s99, %s101
      %p108 = scmp.eq.s32.totalorder %s32, 1
      %p109 = por %p107, %p108
      %p110 = scmp.ne.s32.totalorder %s101, %s102
      %p111 = scmp.eq.s32.totalorder %s32, 0
      %p112 = por %p110, %p111
      %p113 = scmp.ne.s32.totalorder %s101, %s102
      %p114 = scmp.eq.s32.totalorder %s33, 1
      %p115 = por %p113, %p114
      %p117 = scmp.ne.s32.totalorder %s102, %s116
      %p118 = scmp.eq.s32.totalorder %s33, 0
      %p119 = por %p117, %p118
      %s121 = sadd.s32 %s120, 1
      %p124 = scmp.eq.s32.totalorder %s27, 1
      %p125 = scmp.ne.s32.totalorder %s120, %s122
      %p126 = scmp.eq.s32.totalorder %s27, 0
      %p127 = por %p125, %p126
      %p128 = scmp.ne.s32.totalorder %s120, %s122
      %p129 = scmp.eq.s32.totalorder %s32, 1
      %p130 = por %p128, %p129
      %p131 = scmp.ne.s32.totalorder %s122, %s123
      %p132 = scmp.eq.s32.totalorder %s32, 0
      %p133 = por %p131, %p132
      %p134 = scmp.ne.s32.totalorder %s122, %s123
      %p135 = scmp.eq.s32.totalorder %s33, 1
      %p136 = por %p134, %p135
      %p138 = scmp.ne.s32.totalorder %s123, %s137
      %p139 = scmp.eq.s32.totalorder %s33, 0
      %p140 = por %p138, %p139
      %s142 = sadd.s32 %s141, 1
      %p145 = scmp.eq.s32.totalorder %s27, 1
      %p146 = scmp.ne.s32.totalorder %s141, %s143
      %p147 = scmp.eq.s32.totalorder %s27, 0
      %p148 = por %p146, %p147
      %p149 = scmp.ne.s32.totalorder %s141, %s143
      %p150 = scmp.eq.s32.totalorder %s32, 1
      %p151 = por %p149, %p150
      %p152 = scmp.ne.s32.totalorder %s143, %s144
      %p153 = scmp.eq.s32.totalorder %s32, 0
      %p154 = por %p152, %p153
      %p155 = scmp.ne.s32.totalorder %s143, %s144
      %p156 = scmp.eq.s32.totalorder %s33, 1
      %p157 = por %p155, %p156
      %p159 = scmp.ne.s32.totalorder %s144, %s158
      %p160 = scmp.eq.s32.totalorder %s33, 0
      %p161 = por %p159, %p160
      %s163 = sadd.s32 %s162, 1
      %p166 = scmp.eq.s32.totalorder %s27, 1
      %p167 = scmp.ne.s32.totalorder %s162, %s164
      %p168 = scmp.eq.s32.totalorder %s27, 0
      %p169 = por %p167, %p168
      %p170 = scmp.ne.s32.totalorder %s162, %s164
      %p171 = scmp.eq.s32.totalorder %s32, 1
      %p172 = por %p170, %p171
      %p173 = scmp.ne.s32.totalorder %s164, %s165
      %p174 = scmp.eq.s32.totalorder %s32, 0
      %p175 = por %p173, %p174
      %p176 = scmp.ne.s32.totalorder %s164, %s165
      %p177 = scmp.eq.s32.totalorder %s33, 1
      %p178 = por %p176, %p177
      %p180 = scmp.ne.s32.totalorder %s165, %s179
      %p181 = scmp.eq.s32.totalorder %s33, 0
      %p182 = por %p180, %p181
      %s184 = sadd.s32 %s183, 1
      %p187 = scmp.eq.s32.totalorder %s27, 1
      %p188 = scmp.ne.s32.totalorder %s183, %s185
      %p189 = scmp.eq.s32.totalorder %s27, 0
      %p190 = por %p188, %p189
      %p191 = scmp.ne.s32.totalorder %s183, %s185
      %p192 = scmp.eq.s32.totalorder %s32, 1
      %p193 = por %p191, %p192
      %p194 = scmp.ne.s32.totalorder %s185, %s186
      %p195 = scmp.eq.s32.totalorder %s32, 0
      %p196 = por %p194, %p195
      %p197 = scmp.ne.s32.totalorder %s185, %s186
      %p198 = scmp.eq.s32.totalorder %s33, 1
      %p199 = por %p197, %p198
      %p201 = scmp.ne.s32.totalorder %s186, %s200
      %p202 = scmp.eq.s32.totalorder %s33, 0
      %p203 = por %p201, %p202
      %s205 = sadd.s32 %s204, 1
      %p208 = scmp.eq.s32.totalorder %s27, 1
      %p209 = scmp.ne.s32.totalorder %s204, %s206
      %p210 = scmp.eq.s32.totalorder %s27, 0
      %p211 = por %p209, %p210
      %p212 = scmp.ne.s32.totalorder %s204, %s206
      %p213 = scmp.eq.s32.totalorder %s32, 1
      %p214 = por %p212, %p213
      %p215 = scmp.ne.s32.totalorder %s206, %s207
      %p216 = scmp.eq.s32.totalorder %s32, 0
      %p217 = por %p215, %p216
      %p218 = scmp.ne.s32.totalorder %s206, %s207
      %p219 = scmp.eq.s32.totalorder %s33, 1
      %p220 = por %p218, %p219
      %p222 = scmp.ne.s32.totalorder %s207, %s221
      %p223 = scmp.eq.s32.totalorder %s33, 0
      %p224 = por %p222, %p223
      %s226 = sadd.s32 %s225, 1
      %p229 = scmp.eq.s32.totalorder %s27, 1
      %p230 = scmp.ne.s32.totalorder %s225, %s227
      %p231 = scmp.eq.s32.totalorder %s27, 0
      %p232 = por %p230, %p231
      %p233 = scmp.ne.s32.totalorder %s225, %s227
      %p234 = scmp.eq.s32.totalorder %s32, 1
      %p235 = por %p233, %p234
      %p236 = scmp.ne.s32.totalorder %s227, %s228
      %p237 = scmp.eq.s32.totalorder %s32, 0
      %p238 = por %p236, %p237
      %p239 = scmp.ne.s32.totalorder %s227, %s228
      %p240 = scmp.eq.s32.totalorder %s33, 1
      %p241 = por %p239, %p240
      %p243 = scmp.ne.s32.totalorder %s228, %s242
      %p244 = scmp.eq.s32.totalorder %s33, 0
      %p245 = por %p243, %p244
      %s247 = sadd.s32 %s246, 1
      %p250 = scmp.eq.s32.totalorder %s27, 1
      %p251 = scmp.ne.s32.totalorder %s246, %s248
      %p252 = scmp.eq.s32.totalorder %s27, 0
      %p253 = por %p251, %p252
      %p254 = scmp.ne.s32.totalorder %s246, %s248
      %p255 = scmp.eq.s32.totalorder %s32, 1
      %p256 = por %p254, %p255
      %p257 = scmp.ne.s32.totalorder %s248, %s249
      %p258 = scmp.eq.s32.totalorder %s32, 0
      %p259 = por %p257, %p258
      %p260 = scmp.ne.s32.totalorder %s248, %s249
      %p261 = scmp.eq.s32.totalorder %s33, 1
      %p262 = por %p260, %p261
      %p264 = scmp.ne.s32.totalorder %s249, %s263
      %p265 = scmp.eq.s32.totalorder %s33, 0
      %p266 = por %p264, %p265
      %s268 = sadd.s32 %s267, 1
      %p271 = scmp.eq.s32.totalorder %s27, 1
      %p272 = scmp.ne.s32.totalorder %s267, %s269
      %p273 = scmp.eq.s32.totalorder %s27, 0
      %p274 = por %p272, %p273
      %p275 = scmp.ne.s32.totalorder %s267, %s269
      %p276 = scmp.eq.s32.totalorder %s32, 1
      %p277 = por %p275, %p276
      %p278 = scmp.ne.s32.totalorder %s269, %s270
      %p279 = scmp.eq.s32.totalorder %s32, 0
      %p280 = por %p278, %p279
      %p281 = scmp.ne.s32.totalorder %s269, %s270
      %p282 = scmp.eq.s32.totalorder %s33, 1
      %p283 = por %p281, %p282
      %p285 = scmp.ne.s32.totalorder %s270, %s284
      %p286 = scmp.eq.s32.totalorder %s33, 0
      %p287 = por %p285, %p286
      %s289 = sadd.s32 %s288, 1
      %p292 = scmp.eq.s32.totalorder %s27, 1
      %p293 = scmp.ne.s32.totalorder %s288, %s290
      %p294 = scmp.eq.s32.totalorder %s27, 0
      %p295 = por %p293, %p294
      %p296 = scmp.ne.s32.totalorder %s288, %s290
      %p297 = scmp.eq.s32.totalorder %s32, 1
      %p298 = por %p296, %p297
      %p299 = scmp.ne.s32.totalorder %s290, %s291
      %p300 = scmp.eq.s32.totalorder %s32, 0
      %p301 = por %p299, %p300
      %p302 = scmp.ne.s32.totalorder %s290, %s291
      %p303 = scmp.eq.s32.totalorder %s33, 1
      %p304 = por %p302, %p303
      %p306 = scmp.ne.s32.totalorder %s291, %s305
      %p307 = scmp.eq.s32.totalorder %s33, 0
      %p308 = por %p306, %p307
      %s310 = sadd.s32 %s309, 1
      %p313 = scmp.eq.s32.totalorder %s27, 1
      %p314 = scmp.ne.s32.totalorder %s309, %s311
      %p315 = scmp.eq.s32.totalorder %s27, 0
      %p316 = por %p314, %p315
      %p317 = scmp.ne.s32.totalorder %s309, %s311
      %p318 = scmp.eq.s32.totalorder %s32, 1
      %p319 = por %p317, %p318
      %p320 = scmp.ne.s32.totalorder %s311, %s312
      %p321 = scmp.eq.s32.totalorder %s32, 0
      %p322 = por %p320, %p321
      %p323 = scmp.ne.s32.totalorder %s311, %s312
      %p324 = scmp.eq.s32.totalorder %s33, 1
      %p325 = por %p323, %p324
      %p327 = scmp.ne.s32.totalorder %s312, %s326
      %p328 = scmp.eq.s32.totalorder %s33, 0
      %p329 = por %p327, %p328
      %s331 = sadd.s32 %s330, 1
      %p334 = scmp.eq.s32.totalorder %s27, 1
      %p335 = scmp.ne.s32.totalorder %s330, %s332
      %p336 = scmp.eq.s32.totalorder %s27, 0
      %p337 = por %p335, %p336
      %p338 = scmp.ne.s32.totalorder %s330, %s332
      %p339 = scmp.eq.s32.totalorder %s32, 1
      %p340 = por %p338, %p339
      %p341 = scmp.ne.s32.totalorder %s332, %s333
      %p342 = scmp.eq.s32.totalorder %s32, 0
      %p343 = por %p341, %p342
      %p344 = scmp.ne.s32.totalorder %s332, %s333
      %p345 = scmp.eq.s32.totalorder %s33, 1
      %p346 = por %p344, %p345
      %p348 = scmp.ne.s32.totalorder %s333, %s347
      %p349 = scmp.eq.s32.totalorder %s33, 0
      %p350 = por %p348, %p349
      %s352 = sadd.s32 %s351, 1
      %p355 = scmp.eq.s32.totalorder %s27, 1
      %p356 = scmp.ne.s32.totalorder %s351, %s353
      %p357 = scmp.eq.s32.totalorder %s27, 0
      %p358 = por %p356, %p357
      %p359 = scmp.ne.s32.totalorder %s351, %s353
      %p360 = scmp.eq.s32.totalorder %s32, 1
      %p361 = por %p359, %p360
      %p362 = scmp.ne.s32.totalorder %s353, %s354
      %p363 = scmp.eq.s32.totalorder %s32, 0
      %p364 = por %p362, %p363
      %p365 = scmp.ne.s32.totalorder %s353, %s354
      %p366 = scmp.eq.s32.totalorder %s33, 1
      %p367 = por %p365, %p366
      %p369 = scmp.ne.s32.totalorder %s354, %s368
      %p370 = scmp.eq.s32.totalorder %s33, 0
      %p371 = por %p369, %p370
      %s373 = sadd.s32 %s372, 1
      %p376 = scmp.eq.s32.totalorder %s27, 1
      %p377 = scmp.ne.s32.totalorder %s372, %s374
      %p378 = scmp.eq.s32.totalorder %s27, 0
      %p379 = por %p377, %p378
      %p380 = scmp.ne.s32.totalorder %s372, %s374
      %p381 = scmp.eq.s32.totalorder %s32, 1
      %p382 = por %p380, %p381
      %p383 = scmp.ne.s32.totalorder %s374, %s375
      %p384 = scmp.eq.s32.totalorder %s32, 0
      %p385 = por %p383, %p384
      %p386 = scmp.ne.s32.totalorder %s374, %s375
      %p387 = scmp.eq.s32.totalorder %s33, 1
      %p388 = por %p386, %p387
      %p390 = scmp.ne.s32.totalorder %s375, %s389
      %p391 = scmp.eq.s32.totalorder %s33, 0
      %p392 = por %p390, %p391
      %s394 = sadd.s32 %s393, 1
      %p397 = scmp.eq.s32.totalorder %s27, 1
      %p398 = scmp.ne.s32.totalorder %s393, %s395
      %p399 = scmp.eq.s32.totalorder %s27, 0
      %p400 = por %p398, %p399
      %p401 = scmp.ne.s32.totalorder %s393, %s395
      %p402 = scmp.eq.s32.totalorder %s32, 1
      %p403 = por %p401, %p402
      %p404 = scmp.ne.s32.totalorder %s395, %s396
      %p405 = scmp.eq.s32.totalorder %s32, 0
      %p406 = por %p404, %p405
      %p407 = scmp.ne.s32.totalorder %s395, %s396
      %p408 = scmp.eq.s32.totalorder %s33, 1
      %p409 = por %p407, %p408
      %p411 = scmp.ne.s32.totalorder %s396, %s410
      %p412 = scmp.eq.s32.totalorder %s33, 0
      %p413 = por %p411, %p412
      %s415 = sadd.s32 %s414, 1
      %p418 = scmp.eq.s32.totalorder %s27, 1
      %p419 = scmp.ne.s32.totalorder %s414, %s416
      %p420 = scmp.eq.s32.totalorder %s27, 0
      %p421 = por %p419, %p420
      %p422 = scmp.ne.s32.totalorder %s414, %s416
      %p423 = scmp.eq.s32.totalorder %s32, 1
      %p424 = por %p422, %p423
      %p425 = scmp.ne.s32.totalorder %s416, %s417
      %p426 = scmp.eq.s32.totalorder %s32, 0
      %p427 = por %p425, %p426
      %p428 = scmp.ne.s32.totalorder %s416, %s417
      %p429 = scmp.eq.s32.totalorder %s33, 1
      %p430 = por %p428, %p429
      %p432 = scmp.ne.s32.totalorder %s417, %s431
      %p433 = scmp.eq.s32.totalorder %s33, 0
      %p434 = por %p432, %p433
      %s435 = ssub.s32 %s34, %s46
      %s436 = ssub.s32 %s35, %s42
      %s437 = sor.u32 %s435, %s436
      %p438 = scmp.eq.s32.totalorder %s437, 0
      %s440 = sadd.s32 %s439, 1
      %s441 = scalar_select %p438, %s439, %s440
      %p444 = pneg %p438
      %p445 = scmp.eq.s32.totalorder %s27, 1
      %p446 = por %p444, %p445
      %p447 = scmp.ne.s32.totalorder %s439, %s442
      %p448 = scmp.eq.s32.totalorder %s27, 0
      %p449 = por %p447, %p448
      %p450 = scmp.ne.s32.totalorder %s439, %s442
      %p451 = scmp.eq.s32.totalorder %s32, 1
      %p452 = por %p450, %p451
      %p453 = scmp.ne.s32.totalorder %s442, %s443
      %p454 = scmp.eq.s32.totalorder %s32, 0
      %p455 = por %p453, %p454
      %p456 = scmp.ne.s32.totalorder %s442, %s443
      %p457 = scmp.eq.s32.totalorder %s33, 1
      %p458 = por %p456, %p457
      %p460 = scmp.ne.s32.totalorder %s443, %s459
      %p461 = scmp.eq.s32.totalorder %s33, 0
      %p462 = por %p460, %p461
      %p463 = scmp.le.s32.totalorder 1, %s27
      %p464 = scmp.lt.s32.totalorder %s27, 3
      %p465 = pnand %p463, %p464
      %p466 = pneg %p465
      // Predicated region
      $region9: #{tpu_custom_call.1} parent=5 // pred_check
        _
      $region10: #{tpu_custom_call.1} parent=5 // pred_check_branch
        %468 = sbr.rel (%p465) target = $region12
      $region11: #{tpu_custom_call.1} parent=5 // pred_region
        %s469 = ssub.s32 %s27, 1
        // Predicated region
        $region13: #{tpu_custom_call.1} parent=11 // pred_check
          %p470 = pneg %p112
        $region14: #{tpu_custom_call.1} parent=11 // pred_check_branch
          %472 = sbr.rel (%p470) target = $region16
        $region15: #{tpu_custom_call.1} parent=11 // pred_region
          _
        $region16: #{tpu_custom_call.1} parent=11 // pred_fallthru
          _
        // Predicated region
        $region17: #{tpu_custom_call.1} parent=11 // pred_check
          %p473 = pneg %p133
        $region18: #{tpu_custom_call.1} parent=11 // pred_check_branch
          %475 = sbr.rel (%p473) target = $region20
        $region19: #{tpu_custom_call.1} parent=11 // pred_region
          _
        $region20: #{tpu_custom_call.1} parent=11 // pred_fallthru
          _
        // Predicated region
        $region21: #{tpu_custom_call.1} parent=11 // pred_check
          %p476 = pneg %p154
        $region22: #{tpu_custom_call.1} parent=11 // pred_check_branch
          %478 = sbr.rel (%p476) target = $region24
        $region23: #{tpu_custom_call.1} parent=11 // pred_region
          _
        $region24: #{tpu_custom_call.1} parent=11 // pred_fallthru
          _
        // Predicated region
        $region25: #{tpu_custom_call.1} parent=11 // pred_check
          %p479 = pneg %p175
        $region26: #{tpu_custom_call.1} parent=11 // pred_check_branch
          %481 = sbr.rel (%p479) target = $region28
        $region27: #{tpu_custom_call.1} parent=11 // pred_region
          _
        $region28: #{tpu_custom_call.1} parent=11 // pred_fallthru
          _
        // Predicated region
        $region29: #{tpu_custom_call.1} parent=11 // pred_check
          %p482 = pneg %p196
        $region30: #{tpu_custom_call.1} parent=11 // pred_check_branch
          %484 = sbr.rel (%p482) target = $region32
        $region31: #{tpu_custom_call.1} parent=11 // pred_region
          _
        $region32: #{tpu_custom_call.1} parent=11 // pred_fallthru
          _
        // Predicated region
        $region33: #{tpu_custom_call.1} parent=11 // pred_check
          %p485 = pneg %p217
        $region34: #{tpu_custom_call.1} parent=11 // pred_check_branch
          %487 = sbr.rel (%p485) target = $region36
        $region35: #{tpu_custom_call.1} parent=11 // pred_region
          _
        $region36: #{tpu_custom_call.1} parent=11 // pred_fallthru
          _
        // Predicated region
        $region37: #{tpu_custom_call.1} parent=11 // pred_check
          %p488 = pneg %p238
        $region38: #{tpu_custom_call.1} parent=11 // pred_check_branch
          %490 = sbr.rel (%p488) target = $region40
        $region39: #{tpu_custom_call.1} parent=11 // pred_region
          _
        $region40: #{tpu_custom_call.1} parent=11 // pred_fallthru
          _
        // Predicated region
        $region41: #{tpu_custom_call.1} parent=11 // pred_check
          %p491 = pneg %p259
        $region42: #{tpu_custom_call.1} parent=11 // pred_check_branch
          %493 = sbr.rel (%p491) target = $region44
        $region43: #{tpu_custom_call.1} parent=11 // pred_region
          _
        $region44: #{tpu_custom_call.1} parent=11 // pred_fallthru
          _
        // Predicated region
        $region45: #{tpu_custom_call.1} parent=11 // pred_check
          %p494 = pneg %p280
        $region46: #{tpu_custom_call.1} parent=11 // pred_check_branch
          %496 = sbr.rel (%p494) target = $region48
        $region47: #{tpu_custom_call.1} parent=11 // pred_region
          _
        $region48: #{tpu_custom_call.1} parent=11 // pred_fallthru
          _
        // Predicated region
        $region49: #{tpu_custom_call.1} parent=11 // pred_check
          %p497 = pneg %p301
        $region50: #{tpu_custom_call.1} parent=11 // pred_check_branch
          %499 = sbr.rel (%p497) target = $region52
        $region51: #{tpu_custom_call.1} parent=11 // pred_region
          _
        $region52: #{tpu_custom_call.1} parent=11 // pred_fallthru
          _
        // Predicated region
        $region53: #{tpu_custom_call.1} parent=11 // pred_check
          %p500 = pneg %p322
        $region54: #{tpu_custom_call.1} parent=11 // pred_check_branch
          %502 = sbr.rel (%p500) target = $region56
        $region55: #{tpu_custom_call.1} parent=11 // pred_region
          _
        $region56: #{tpu_custom_call.1} parent=11 // pred_fallthru
          _
        // Predicated region
        $region57: #{tpu_custom_call.1} parent=11 // pred_check
          %p503 = pneg %p343
        $region58: #{tpu_custom_call.1} parent=11 // pred_check_branch
          %505 = sbr.rel (%p503) target = $region60
        $region59: #{tpu_custom_call.1} parent=11 // pred_region
          _
        $region60: #{tpu_custom_call.1} parent=11 // pred_fallthru
          _
        // Predicated region
        $region61: #{tpu_custom_call.1} parent=11 // pred_check
          %p506 = pneg %p364
        $region62: #{tpu_custom_call.1} parent=11 // pred_check_branch
          %508 = sbr.rel (%p506) target = $region64
        $region63: #{tpu_custom_call.1} parent=11 // pred_region
          _
        $region64: #{tpu_custom_call.1} parent=11 // pred_fallthru
          _
        // Predicated region
        $region65: #{tpu_custom_call.1} parent=11 // pred_check
          %p509 = pneg %p385
        $region66: #{tpu_custom_call.1} parent=11 // pred_check_branch
          %511 = sbr.rel (%p509) target = $region68
        $region67: #{tpu_custom_call.1} parent=11 // pred_region
          _
        $region68: #{tpu_custom_call.1} parent=11 // pred_fallthru
          _
        // Predicated region
        $region69: #{tpu_custom_call.1} parent=11 // pred_check
          %p512 = pneg %p406
        $region70: #{tpu_custom_call.1} parent=11 // pred_check_branch
          %514 = sbr.rel (%p512) target = $region72
        $region71: #{tpu_custom_call.1} parent=11 // pred_region
          _
        $region72: #{tpu_custom_call.1} parent=11 // pred_fallthru
          _
        // Predicated region
        $region73: #{tpu_custom_call.1} parent=11 // pred_check
          %p515 = pneg %p427
        $region74: #{tpu_custom_call.1} parent=11 // pred_check_branch
          %517 = sbr.rel (%p515) target = $region76
        $region75: #{tpu_custom_call.1} parent=11 // pred_region
          _
        $region76: #{tpu_custom_call.1} parent=11 // pred_fallthru
          _
      $region12: #{tpu_custom_call.1} parent=5 // pred_fallthru
        _
      %p518 = scmp.lt.s32.totalorder %s27, 2
      // Predicated region
      $region77: #{tpu_custom_call.1} parent=5 // pred_check
        %p519 = pneg %p518
      $region78: #{tpu_custom_call.1} parent=5 // pred_check_branch
        %521 = sbr.rel (%p519) target = $region80
      $region79: #{tpu_custom_call.1} parent=5 // pred_region
        // Predicated region
        $region81: #{tpu_custom_call.1} parent=79 // pred_check
          %p522 = pneg %p59
        $region82: #{tpu_custom_call.1} parent=79 // pred_check_branch
          %524 = sbr.rel (%p522) target = $region84
        $region83: #{tpu_custom_call.1} parent=79 // pred_region
          %p525 = scmp.lt.s32.totalorder %s34, 1
          %s526 = scalar_select %p525, %s34, 1
          %s527 = smul.addr %s526, 4
          %s528 = scalar_lea.vmem %s0, %s527
        $region84: #{tpu_custom_call.1} parent=79 // pred_fallthru
          _
        // Predicated region
        $region85: #{tpu_custom_call.1} parent=79 // pred_check
          %p529 = pneg %p85
        $region86: #{tpu_custom_call.1} parent=79 // pred_check_branch
          %531 = sbr.rel (%p529) target = $region88
        $region87: #{tpu_custom_call.1} parent=79 // pred_region
          %p532 = scmp.lt.s32.totalorder %s34, 1
          %s533 = scalar_select %p532, %s34, 1
          %s534 = scalar_lea.vmem %s1, %s533
        $region88: #{tpu_custom_call.1} parent=79 // pred_fallthru
          _
      $region80: #{tpu_custom_call.1} parent=5 // pred_fallthru
        _
      %p535 = scmp.le.s32.totalorder 1, %s27
      %p536 = scmp.lt.s32.totalorder %s27, 3
      %p537 = pnand %p535, %p536
      %p538 = pneg %p537
      // Predicated region
      $region89: #{tpu_custom_call.1} parent=5 // pred_check
        _
      $region90: #{tpu_custom_call.1} parent=5 // pred_check_branch
        %540 = sbr.rel (%p537) target = $region92
      $region91: #{tpu_custom_call.1} parent=5 // pred_region
        %s541 = ssub.s32 %s27, 1
        %p542 = scmp.lt.s32.totalorder %s36, 1
        %s543 = scalar_select %p542, %s36, 1
        %s544 = smul.addr %s543, 4
        %s545 = scalar_lea.vmem %s0, %s544
        %p546 = pneg %p65
        %p547 = pneg %p62
        %p548 = scmp.lt.s32.totalorder %s36, 1
        %s549 = scalar_select %p548, %s36, 1
        %s550 = scalar_lea.vmem %s1, %s549
        %p551 = pneg %p91
        %p552 = pneg %p88
        %p553 = pneg %p112
        %p554 = pneg %p109
        %p555 = pneg %p133
        %p556 = pneg %p130
        %p557 = pneg %p154
        %p558 = pneg %p151
        %p559 = pneg %p175
        %p560 = pneg %p172
        %p561 = pneg %p196
        %p562 = pneg %p193
        %p563 = pneg %p217
        %p564 = pneg %p214
        %p565 = pneg %p238
        %p566 = pneg %p235
        %p567 = pneg %p259
        %p568 = pneg %p256
        %p569 = pneg %p280
        %p570 = pneg %p277
        %p571 = pneg %p301
        %p572 = pneg %p298
        %p573 = pneg %p322
        %p574 = pneg %p319
        %p575 = pneg %p343
        %p576 = pneg %p340
        %p577 = pneg %p364
        %p578 = pneg %p361
        %p579 = pneg %p385
        %p580 = pneg %p382
        %p581 = pneg %p406
        %p582 = pneg %p403
        %p583 = pneg %p427
        %p584 = pneg %p424
        %p585 = pneg %p455
        %p586 = pneg %p452
        %s587 = sand.u32 %s442, 1
        %s588 = scalar_lea.sflag [#allocation5], %s587
        %s589 = sand.u32 %s442, 1
        %s590 = smul.addr %s589, 4
        %s591 = scalar_lea.vmem [#allocation4], %s590
        %p592 = scmp.lt.s32.totalorder %s36, 1
        %s593 = scalar_select %p592, %s36, 1
        %s594 = smul.addr %s593, 4
        %s595 = scalar_lea.vmem %s0, %s594
        %p596 = scmp.lt.s32.totalorder %s36, 1
        %s597 = scalar_select %p596, %s36, 1
        %s598 = scalar_lea.vmem %s1, %s597
        %p600 = scmp.eq.s32.totalorder %s37, 0
        // Predicated region
        $region93: #{tpu_custom_call.1} parent=91 // pred_check
          %p601 = pneg %p600
        $region94: #{tpu_custom_call.1} parent=91 // pred_check_branch
          %603 = sbr.rel (%p601) target = $region96
        $region95: #{tpu_custom_call.1} parent=91 // pred_region
          %v604 = vld [vmem:[%s595] sm:$0xf]
          %v605 = vld [vmem:[%s4] sm:$0xf]
          %v606 = vld [vmem:[%s5] sm:$0xff]
          %608 = vset.pattern.permute.xlu0 0
          %609 = vperm.xlu0 %608, %v606
          %v610 = vpop.permute.xlu0 %609
          %vm612 = vcmask 261120
          %v614 = vsel %vm612, %v605, 0
          %v617 = vsel %vm612, %v604, 0
          %619 = vmatprep.subr.bf16.mxu0 0
          %620 = vmatpush1.bf16.xpose.msra.mxu0 %v617
          %621 = vmatprep.subr.bf16.mxu0 0
          %622 = vmatpush1.bf16.xpose.msra.mxu0 0
          %623 = vmatprep.subr.bf16.mxu0 0
          %624 = vmatpush1.bf16.xpose.msra.mxu0 0
          %625 = vmatprep.subr.bf16.mxu0 0
          %626 = vmatpush1.bf16.xpose.msra.mxu0 0
          %627 = vmatprep.subr.bf16.mxu0 0
          %628 = vmatpush1.bf16.xpose.msra.mxu0 0
          %629 = vmatprep.subr.bf16.mxu0 0
          %630 = vmatpush1.bf16.xpose.msra.mxu0 0
          %631 = vmatprep.subr.bf16.mxu0 0
          %632 = vmatpush1.bf16.xpose.msra.mxu0 0
          %633 = vmatprep.subr.bf16.mxu0 0
          %634 = vmatpush1.bf16.xpose.msra.mxu0 0
          %635 = vmatprep.subr.bf16.mxu0 0
          %636 = vmatpush1.bf16.xpose.msra.mxu0 0
          %637 = vmatprep.subr.bf16.mxu0 0
          %638 = vmatpush1.bf16.xpose.msra.mxu0 0
          %639 = vmatprep.subr.bf16.mxu0 0
          %640 = vmatpush1.bf16.xpose.msra.mxu0 0
          %641 = vmatprep.subr.bf16.mxu0 0
          %642 = vmatpush1.bf16.xpose.msra.mxu0 0
          %643 = vmatprep.subr.bf16.mxu0 0
          %644 = vmatpush1.bf16.xpose.msra.mxu0 0
          %645 = vmatprep.subr.bf16.mxu0 0
          %646 = vmatpush1.bf16.xpose.msra.mxu0 0
          %647 = vmatprep.subr.bf16.mxu0 0
          %648 = vmatpush1.bf16.xpose.msra.mxu0 0
          %649 = vmatprep.subr.bf16.mxu0 0
          %650 = vmatpush1.bf16.xpose.msra.mxu0 0
          %651 = vmatprep.mubr.bf16.mxu0 0
          %652 = vmatmul.mubr.bf16.gmra.mrb[0].mxu0 %v614
          %v653 = vpop.f32.mrb[0].mxu0
          %v654 = vadd.f32 %v610, %v653
          %v655 = vpop.f32.mrb[0].mxu0
          %v656 = vpop.f32.mrb[0].mxu0
          %v657 = vpop.f32.mrb[0].mxu0
          %658 = vdwg.mxu0
          %v659 = vpack.c.bf16 %v654, %v654
          %vm660 = vcmask 60416
          %661 = vst.msk [vmem:[#allocation2] sm:$0xf] %vm660, %v659
          %v662 = vld [vmem:[%s6] sm:$0xf]
          %v663 = vld [vmem:[%s6 + $0x4] sm:$0xf]
          %v664 = vld [vmem:[%s6 + $0x8] sm:$0xf]
          %v665 = vld [vmem:[%s6 + $0xc] sm:$0xf]
          %v666 = vld [vmem:[%s7] sm:$0x1]
          %v668 = vlaneseq
          %v669 = vshrl.u32 %v668, 7
          %v670 = vsub.s32 0, %v669
          %v671 = vrot.slane %v666, %v670
          %v677 = vunpack.c.l.b16 %v662
          %v678 = vunpack.c.l.b16 %v663
          %v679 = vunpack.c.l.b16 %v664
          %v680 = vunpack.c.l.b16 %v665
          %v681 = vpack.c.b16 %v678, %v677
          %v682 = vpack.c.b16 %v680, %v679
          %685 = vmatprep.subr.bf16.mxu0 0
          %686 = vmatpush1.bf16.msra.mxu0 %v681
          %687 = vmatprep.subr.bf16.mxu0 0
          %688 = vmatpush1.bf16.msra.mxu0 %v682
          %689 = vmatprep.subr.bf16.mxu0 0
          %690 = vmatpush1.bf16.msra.mxu0 0
          %691 = vmatprep.subr.bf16.mxu0 0
          %692 = vmatpush1.bf16.msra.mxu0 0
          %693 = vmatprep.subr.bf16.mxu0 0
          %694 = vmatpush1.bf16.msra.mxu0 0
          %695 = vmatprep.subr.bf16.mxu0 0
          %696 = vmatpush1.bf16.msra.mxu0 0
          %697 = vmatprep.subr.bf16.mxu0 0
          %698 = vmatpush1.bf16.msra.mxu0 0
          %699 = vmatprep.subr.bf16.mxu0 0
          %700 = vmatpush1.bf16.msra.mxu0 0
          %701 = vmatprep.subr.bf16.mxu0 0
          %702 = vmatpush1.bf16.msra.mxu0 0
          %703 = vmatprep.subr.bf16.mxu0 0
          %704 = vmatpush1.bf16.msra.mxu0 0
          %705 = vmatprep.subr.bf16.mxu0 0
          %706 = vmatpush1.bf16.msra.mxu0 0
          %707 = vmatprep.subr.bf16.mxu0 0
          %708 = vmatpush1.bf16.msra.mxu0 0
          %709 = vmatprep.subr.bf16.mxu0 0
          %710 = vmatpush1.bf16.msra.mxu0 0
          %711 = vmatprep.subr.bf16.mxu0 0
          %712 = vmatpush1.bf16.msra.mxu0 0
          %713 = vmatprep.subr.bf16.mxu0 0
          %714 = vmatpush1.bf16.msra.mxu0 0
          %715 = vmatprep.subr.bf16.mxu0 0
          %716 = vmatpush1.bf16.msra.mxu0 0
          %717 = vmatprep.mubr.bf16.mxu0 0
          %718 = vmatmul.mubr.bf16.gmra.mrb[0].mxu0 %v617
          %v719 = vpop.f32.mrb[0].mxu0
          %v720 = vadd.f32 %v671, %v719
          %v721 = vpop.f32.mrb[0].mxu0
          %v722 = vpop.f32.mrb[0].mxu0
          %v723 = vpop.f32.mrb[0].mxu0
          %724 = vdwg.mxu0
          %v725 = vpack.c.bf16 %v720, %v720
          %726 = vst.msk [vmem:[#allocation3] sm:$0xf] %vm660, %v725
          %s727 = scalar_lea.vmem %s4, 4
          %v728 = vld [vmem:[%s727] sm:$0xf]
          %s729 = scalar_lea.vmem %s5, 8
          %v730 = vld [vmem:[%s729] sm:$0xff]
          %732 = vset.pattern.permute.xlu0 0
          %733 = vperm.xlu0 %732, %v730
          %v734 = vpop.permute.xlu0 %733
          %v737 = vsel %vm612, %v728, 0
          %739 = vmatprep.subr.bf16.mxu0 0
          %740 = vmatpush1.bf16.xpose.msra.mxu0 %v617
          %741 = vmatprep.subr.bf16.mxu0 0
          %742 = vmatpush1.bf16.xpose.msra.mxu0 0
          %743 = vmatprep.subr.bf16.mxu0 0
          %744 = vmatpush1.bf16.xpose.msra.mxu0 0
          %745 = vmatprep.subr.bf16.mxu0 0
          %746 = vmatpush1.bf16.xpose.msra.mxu0 0
          %747 = vmatprep.subr.bf16.mxu0 0
          %748 = vmatpush1.bf16.xpose.msra.mxu0 0
          %749 = vmatprep.subr.bf16.mxu0 0
          %750 = vmatpush1.bf16.xpose.msra.mxu0 0
          %751 = vmatprep.subr.bf16.mxu0 0
          %752 = vmatpush1.bf16.xpose.msra.mxu0 0
          %753 = vmatprep.subr.bf16.mxu0 0
          %754 = vmatpush1.bf16.xpose.msra.mxu0 0
          %755 = vmatprep.subr.bf16.mxu0 0
          %756 = vmatpush1.bf16.xpose.msra.mxu0 0
          %757 = vmatprep.subr.bf16.mxu0 0
          %758 = vmatpush1.bf16.xpose.msra.mxu0 0
          %759 = vmatprep.subr.bf16.mxu0 0
          %760 = vmatpush1.bf16.xpose.msra.mxu0 0
          %761 = vmatprep.subr.bf16.mxu0 0
          %762 = vmatpush1.bf16.xpose.msra.mxu0 0
          %763 = vmatprep.subr.bf16.mxu0 0
          %764 = vmatpush1.bf16.xpose.msra.mxu0 0
          %765 = vmatprep.subr.bf16.mxu0 0
          %766 = vmatpush1.bf16.xpose.msra.mxu0 0
          %767 = vmatprep.subr.bf16.mxu0 0
          %768 = vmatpush1.bf16.xpose.msra.mxu0 0
          %769 = vmatprep.subr.bf16.mxu0 0
          %770 = vmatpush1.bf16.xpose.msra.mxu0 0
          %771 = vmatprep.mubr.bf16.mxu0 0
          %772 = vmatmul.mubr.bf16.gmra.mrb[0].mxu0 %v737
          %v773 = vpop.f32.mrb[0].mxu0
          %v774 = vadd.f32 %v734, %v773
          %v775 = vpop.f32.mrb[0].mxu0
          %v776 = vpop.f32.mrb[0].mxu0
          %v777 = vpop.f32.mrb[0].mxu0
          %778 = vdwg.mxu0
          %v779 = vpack.c.bf16 %v774, %v774
          %s780 = scalar_lea.vmem [#allocation2], 4
          %781 = vst.msk [vmem:[%s780] sm:$0xf] %vm660, %v779
          %s782 = scalar_lea.vmem %s6, 16
          %v783 = vld [vmem:[%s782] sm:$0xf]
          %v784 = vld [vmem:[%s782 + $0x4] sm:$0xf]
          %v785 = vld [vmem:[%s782 + $0x8] sm:$0xf]
          %v786 = vld [vmem:[%s782 + $0xc] sm:$0xf]
          %s787 = scalar_lea.vmem %s7, 1
          %v788 = vld [vmem:[%s787] sm:$0x1]
          %v790 = vlaneseq
          %v791 = vshrl.u32 %v790, 7
          %v792 = vsub.s32 0, %v791
          %v793 = vrot.slane %v788, %v792
          %v799 = vunpack.c.l.b16 %v783
          %v800 = vunpack.c.l.b16 %v784
          %v801 = vunpack.c.l.b16 %v785
          %v802 = vunpack.c.l.b16 %v786
          %v803 = vpack.c.b16 %v800, %v799
          %v804 = vpack.c.b16 %v802, %v801
          %807 = vmatprep.subr.bf16.mxu0 0
          %808 = vmatpush1.bf16.msra.mxu0 %v803
          %809 = vmatprep.subr.bf16.mxu0 0
          %810 = vmatpush1.bf16.msra.mxu0 %v804
          %811 = vmatprep.subr.bf16.mxu0 0
          %812 = vmatpush1.bf16.msra.mxu0 0
          %813 = vmatprep.subr.bf16.mxu0 0
          %814 = vmatpush1.bf16.msra.mxu0 0
          %815 = vmatprep.subr.bf16.mxu0 0
          %816 = vmatpush1.bf16.msra.mxu0 0
          %817 = vmatprep.subr.bf16.mxu0 0
          %818 = vmatpush1.bf16.msra.mxu0 0
          %819 = vmatprep.subr.bf16.mxu0 0
          %820 = vmatpush1.bf16.msra.mxu0 0
          %821 = vmatprep.subr.bf16.mxu0 0
          %822 = vmatpush1.bf16.msra.mxu0 0
          %823 = vmatprep.subr.bf16.mxu0 0
          %824 = vmatpush1.bf16.msra.mxu0 0
          %825 = vmatprep.subr.bf16.mxu0 0
          %826 = vmatpush1.bf16.msra.mxu0 0
          %827 = vmatprep.subr.bf16.mxu0 0
          %828 = vmatpush1.bf16.msra.mxu0 0
          %829 = vmatprep.subr.bf16.mxu0 0
          %830 = vmatpush1.bf16.msra.mxu0 0
          %831 = vmatprep.subr.bf16.mxu0 0
          %832 = vmatpush1.bf16.msra.mxu0 0
          %833 = vmatprep.subr.bf16.mxu0 0
          %834 = vmatpush1.bf16.msra.mxu0 0
          %835 = vmatprep.subr.bf16.mxu0 0
          %836 = vmatpush1.bf16.msra.mxu0 0
          %837 = vmatprep.subr.bf16.mxu0 0
          %838 = vmatpush1.bf16.msra.mxu0 0
          %839 = vmatprep.mubr.bf16.mxu0 0
          %840 = vmatmul.mubr.bf16.gmra.mrb[0].mxu0 %v617
          %v841 = vpop.f32.mrb[0].mxu0
          %v842 = vadd.f32 %v793, %v841
          %v843 = vpop.f32.mrb[0].mxu0
          %v844 = vpop.f32.mrb[0].mxu0
          %v845 = vpop.f32.mrb[0].mxu0
          %846 = vdwg.mxu0
          %v847 = vpack.c.bf16 %v842, %v842
          %s848 = scalar_lea.vmem [#allocation3], 4
          %849 = vst.msk [vmem:[%s848] sm:$0xf] %vm660, %v847
          %s850 = scalar_lea.vmem %s4, 8
          %v851 = vld [vmem:[%s850] sm:$0xf]
          %s852 = scalar_lea.vmem %s5, 16
          %v853 = vld [vmem:[%s852] sm:$0xff]
          %855 = vset.pattern.permute.xlu0 0
          %856 = vperm.xlu0 %855, %v853
          %v857 = vpop.permute.xlu0 %856
          %v860 = vsel %vm612, %v851, 0
          %862 = vmatprep.subr.bf16.mxu0 0
          %863 = vmatpush1.bf16.xpose.msra.mxu0 %v617
          %864 = vmatprep.subr.bf16.mxu0 0
          %865 = vmatpush1.bf16.xpose.msra.mxu0 0
          %866 = vmatprep.subr.bf16.mxu0 0
          %867 = vmatpush1.bf16.xpose.msra.mxu0 0
          %868 = vmatprep.subr.bf16.mxu0 0
          %869 = vmatpush1.bf16.xpose.msra.mxu0 0
          %870 = vmatprep.subr.bf16.mxu0 0
          %871 = vmatpush1.bf16.xpose.msra.mxu0 0
          %872 = vmatprep.subr.bf16.mxu0 0
          %873 = vmatpush1.bf16.xpose.msra.mxu0 0
          %874 = vmatprep.subr.bf16.mxu0 0
          %875 = vmatpush1.bf16.xpose.msra.mxu0 0
          %876 = vmatprep.subr.bf16.mxu0 0
          %877 = vmatpush1.bf16.xpose.msra.mxu0 0
          %878 = vmatprep.subr.bf16.mxu0 0
          %879 = vmatpush1.bf16.xpose.msra.mxu0 0
          %880 = vmatprep.subr.bf16.mxu0 0
          %881 = vmatpush1.bf16.xpose.msra.mxu0 0
          %882 = vmatprep.subr.bf16.mxu0 0
          %883 = vmatpush1.bf16.xpose.msra.mxu0 0
          %884 = vmatprep.subr.bf16.mxu0 0
          %885 = vmatpush1.bf16.xpose.msra.mxu0 0
          %886 = vmatprep.subr.bf16.mxu0 0
          %887 = vmatpush1.bf16.xpose.msra.mxu0 0
          %888 = vmatprep.subr.bf16.mxu0 0
          %889 = vmatpush1.bf16.xpose.msra.mxu0 0
          %890 = vmatprep.subr.bf16.mxu0 0
          %891 = vmatpush1.bf16.xpose.msra.mxu0 0
          %892 = vmatprep.subr.bf16.mxu0 0
          %893 = vmatpush1.bf16.xpose.msra.mxu0 0
          %894 = vmatprep.mubr.bf16.mxu0 0
          %895 = vmatmul.mubr.bf16.gmra.mrb[0].mxu0 %v860
          %v896 = vpop.f32.mrb[0].mxu0
          %v897 = vadd.f32 %v857, %v896
          %v898 = vpop.f32.mrb[0].mxu0
          %v899 = vpop.f32.mrb[0].mxu0
          %v900 = vpop.f32.mrb[0].mxu0
          %901 = vdwg.mxu0
          %v902 = vpack.c.bf16 %v897, %v897
          %s903 = scalar_lea.vmem [#allocation2], 8
          %904 = vst.msk [vmem:[%s903] sm:$0xf] %vm660, %v902
          %s905 = scalar_lea.vmem %s6, 32
          %v906 = vld [vmem:[%s905] sm:$0xf]
          %v907 = vld [vmem:[%s905 + $0x4] sm:$0xf]
          %v908 = vld [vmem:[%s905 + $0x8] sm:$0xf]
          %v909 = vld [vmem:[%s905 + $0xc] sm:$0xf]
          %s910 = scalar_lea.vmem %s7, 2
          %v911 = vld [vmem:[%s910] sm:$0x1]
          %v913 = vlaneseq
          %v914 = vshrl.u32 %v913, 7
          %v915 = vsub.s32 0, %v914
          %v916 = vrot.slane %v911, %v915
          %v922 = vunpack.c.l.b16 %v906
          %v923 = vunpack.c.l.b16 %v907
          %v924 = vunpack.c.l.b16 %v908
          %v925 = vunpack.c.l.b16 %v909
          %v926 = vpack.c.b16 %v923, %v922
          %v927 = vpack.c.b16 %v925, %v924
          %930 = vmatprep.subr.bf16.mxu0 0
          %931 = vmatpush1.bf16.msra.mxu0 %v926
          %932 = vmatprep.subr.bf16.mxu0 0
          %933 = vmatpush1.bf16.msra.mxu0 %v927
          %934 = vmatprep.subr.bf16.mxu0 0
          %935 = vmatpush1.bf16.msra.mxu0 0
          %936 = vmatprep.subr.bf16.mxu0 0
          %937 = vmatpush1.bf16.msra.mxu0 0
          %938 = vmatprep.subr.bf16.mxu0 0
          %939 = vmatpush1.bf16.msra.mxu0 0
          %940 = vmatprep.subr.bf16.mxu0 0
          %941 = vmatpush1.bf16.msra.mxu0 0
          %942 = vmatprep.subr.bf16.mxu0 0
          %943 = vmatpush1.bf16.msra.mxu0 0
          %944 = vmatprep.subr.bf16.mxu0 0
          %945 = vmatpush1.bf16.msra.mxu0 0
          %946 = vmatprep.subr.bf16.mxu0 0
          %947 = vmatpush1.bf16.msra.mxu0 0
          %948 = vmatprep.subr.bf16.mxu0 0
          %949 = vmatpush1.bf16.msra.mxu0 0
          %950 = vmatprep.subr.bf16.mxu0 0
          %951 = vmatpush1.bf16.msra.mxu0 0
          %952 = vmatprep.subr.bf16.mxu0 0
          %953 = vmatpush1.bf16.msra.mxu0 0
          %954 = vmatprep.subr.bf16.mxu0 0
          %955 = vmatpush1.bf16.msra.mxu0 0
          %956 = vmatprep.subr.bf16.mxu0 0
          %957 = vmatpush1.bf16.msra.mxu0 0
          %958 = vmatprep.subr.bf16.mxu0 0
          %959 = vmatpush1.bf16.msra.mxu0 0
          %960 = vmatprep.subr.bf16.mxu0 0
          %961 = vmatpush1.bf16.msra.mxu0 0
          %962 = vmatprep.mubr.bf16.mxu0 0
          %963 = vmatmul.mubr.bf16.gmra.mrb[0].mxu0 %v617
          %v964 = vpop.f32.mrb[0].mxu0
          %v965 = vadd.f32 %v916, %v964
          %v966 = vpop.f32.mrb[0].mxu0
          %v967 = vpop.f32.mrb[0].mxu0
          %v968 = vpop.f32.mrb[0].mxu0
          %969 = vdwg.mxu0
          %v970 = vpack.c.bf16 %v965, %v965
          %s971 = scalar_lea.vmem [#allocation3], 8
          %972 = vst.msk [vmem:[%s971] sm:$0xf] %vm660, %v970
          %s973 = scalar_lea.vmem %s4, 12
          %v974 = vld [vmem:[%s973] sm:$0xf]
          %s975 = scalar_lea.vmem %s5, 24
          %v976 = vld [vmem:[%s975] sm:$0xff]
          %978 = vset.pattern.permute.xlu0 0
          %979 = vperm.xlu0 %978, %v976
          %v980 = vpop.permute.xlu0 %979
          %v983 = vsel %vm612, %v974, 0
          %985 = vmatprep.subr.bf16.mxu0 0
          %986 = vmatpush1.bf16.xpose.msra.mxu0 %v617
          %987 = vmatprep.subr.bf16.mxu0 0
          %988 = vmatpush1.bf16.xpose.msra.mxu0 0
          %989 = vmatprep.subr.bf16.mxu0 0
          %990 = vmatpush1.bf16.xpose.msra.mxu0 0
          %991 = vmatprep.subr.bf16.mxu0 0
          %992 = vmatpush1.bf16.xpose.msra.mxu0 0
          %993 = vmatprep.subr.bf16.mxu0 0
          %994 = vmatpush1.bf16.xpose.msra.mxu0 0
          %995 = vmatprep.subr.bf16.mxu0 0
          %996 = vmatpush1.bf16.xpose.msra.mxu0 0
          %997 = vmatprep.subr.bf16.mxu0 0
          %998 = vmatpush1.bf16.xpose.msra.mxu0 0
          %999 = vmatprep.subr.bf16.mxu0 0
          %1000 = vmatpush1.bf16.xpose.msra.mxu0 0
          %1001 = vmatprep.subr.bf16.mxu0 0
          %1002 = vmatpush1.bf16.xpose.msra.mxu0 0
          %1003 = vmatprep.subr.bf16.mxu0 0
          %1004 = vmatpush1.bf16.xpose.msra.mxu0 0
          %1005 = vmatprep.subr.bf16.mxu0 0
          %1006 = vmatpush1.bf16.xpose.msra.mxu0 0
          %1007 = vmatprep.subr.bf16.mxu0 0
          %1008 = vmatpush1.bf16.xpose.msra.mxu0 0
          %1009 = vmatprep.subr.bf16.mxu0 0
          %1010 = vmatpush1.bf16.xpose.msra.mxu0 0
          %1011 = vmatprep.subr.bf16.mxu0 0
          %1012 = vmatpush1.bf16.xpose.msra.mxu0 0
          %1013 = vmatprep.subr.bf16.mxu0 0
          %1014 = vmatpush1.bf16.xpose.msra.mxu0 0
          %1015 = vmatprep.subr.bf16.mxu0 0
          %1016 = vmatpush1.bf16.xpose.msra.mxu0 0
          %1017 = vmatprep.mubr.bf16.mxu0 0
          %1018 = vmatmul.mubr.bf16.gmra.mrb[0].mxu0 %v983
          %v1019 = vpop.f32.mrb[0].mxu0
          %v1020 = vadd.f32 %v980, %v1019
          %v1021 = vpop.f32.mrb[0].mxu0
          %v1022 = vpop.f32.mrb[0].mxu0
          %v1023 = vpop.f32.mrb[0].mxu0
          %1024 = vdwg.mxu0
          %v1025 = vpack.c.bf16 %v1020, %v1020
          %s1026 = scalar_lea.vmem [#allocation2], 12
          %1027 = vst.msk [vmem:[%s1026] sm:$0xf] %vm660, %v1025
          %s1028 = scalar_lea.vmem %s6, 48
          %v1029 = vld [vmem:[%s1028] sm:$0xf]
          %v1030 = vld [vmem:[%s1028 + $0x4] sm:$0xf]
          %v1031 = vld [vmem:[%s1028 + $0x8] sm:$0xf]
          %v1032 = vld [vmem:[%s1028 + $0xc] sm:$0xf]
          %s1033 = scalar_lea.vmem %s7, 3
          %v1034 = vld [vmem:[%s1033] sm:$0x1]
          %v1036 = vlaneseq
          %v1037 = vshrl.u32 %v1036, 7
          %v1038 = vsub.s32 0, %v1037
          %v1039 = vrot.slane %v1034, %v1038
          %v1045 = vunpack.c.l.b16 %v1029
          %v1046 = vunpack.c.l.b16 %v1030
          %v1047 = vunpack.c.l.b16 %v1031
          %v1048 = vunpack.c.l.b16 %v1032
          %v1049 = vpack.c.b16 %v1046, %v1045
          %v1050 = vpack.c.b16 %v1048, %v1047
          %1053 = vmatprep.subr.bf16.mxu0 0
          %1054 = vmatpush1.bf16.msra.mxu0 %v1049
          %1055 = vmatprep.subr.bf16.mxu0 0
          %1056 = vmatpush1.bf16.msra.mxu0 %v1050
          %1057 = vmatprep.subr.bf16.mxu0 0
          %1058 = vmatpush1.bf16.msra.mxu0 0
          %1059 = vmatprep.subr.bf16.mxu0 0
          %1060 = vmatpush1.bf16.msra.mxu0 0
          %1061 = vmatprep.subr.bf16.mxu0 0
          %1062 = vmatpush1.bf16.msra.mxu0 0
          %1063 = vmatprep.subr.bf16.mxu0 0
          %1064 = vmatpush1.bf16.msra.mxu0 0
          %1065 = vmatprep.subr.bf16.mxu0 0
          %1066 = vmatpush1.bf16.msra.mxu0 0
          %1067 = vmatprep.subr.bf16.mxu0 0
          %1068 = vmatpush1.bf16.msra.mxu0 0
          %1069 = vmatprep.subr.bf16.mxu0 0
          %1070 = vmatpush1.bf16.msra.mxu0 0
          %1071 = vmatprep.subr.bf16.mxu0 0
          %1072 = vmatpush1.bf16.msra.mxu0 0
          %1073 = vmatprep.subr.bf16.mxu0 0
          %1074 = vmatpush1.bf16.msra.mxu0 0
          %1075 = vmatprep.subr.bf16.mxu0 0
          %1076 = vmatpush1.bf16.msra.mxu0 0
          %1077 = vmatprep.subr.bf16.mxu0 0
          %1078 = vmatpush1.bf16.msra.mxu0 0
          %1079 = vmatprep.subr.bf16.mxu0 0
          %1080 = vmatpush1.bf16.msra.mxu0 0
          %1081 = vmatprep.subr.bf16.mxu0 0
          %1082 = vmatpush1.bf16.msra.mxu0 0
          %1083 = vmatprep.subr.bf16.mxu0 0
          %1084 = vmatpush1.bf16.msra.mxu0 0
          %1085 = vmatprep.mubr.bf16.mxu0 0
          %1086 = vmatmul.mubr.bf16.gmra.mrb[0].mxu0 %v617
          %v1087 = vpop.f32.mrb[0].mxu0
          %v1088 = vadd.f32 %v1039, %v1087
          %v1089 = vpop.f32.mrb[0].mxu0
          %v1090 = vpop.f32.mrb[0].mxu0
          %v1091 = vpop.f32.mrb[0].mxu0
          %1092 = vdwg.mxu0
          %v1093 = vpack.c.bf16 %v1088, %v1088
          %s1094 = scalar_lea.vmem [#allocation3], 12
          %1095 = vst.msk [vmem:[%s1094] sm:$0xf] %vm660, %v1093
        $region96: #{tpu_custom_call.1} parent=91 // pred_fallthru
          _
        %s1096 = smul.u32 %s37, 8
        %s1097 = sshra.s32 %s1096, 3
        %s1098 = sand.u32 %s1096, 7
        %s1099 = smul.addr %s1097, 4
        %s1100 = scalar_lea.vmem %s595, %s1099
        %v1101 = vld [vmem:[%s1100] sm:$0xf]
        %v1102 = vld [vmem:[%s598] sm:$0x1]
        %v1103 = vld [vmem:[%s2] sm:$0xf]
        %v1104 = vld [vmem:[%s2 + $0x4] sm:$0xf]
        %v1105 = vld [vmem:[%s2 + $0x8] sm:$0xf]
        %v1106 = vld [vmem:[%s2 + $0xc] sm:$0xf]
        %v1107 = vld [vmem:[%s3] sm:$0x1]
        %v1109 = vlaneseq
        %v1110 = vshrl.u32 %v1109, 7
        %v1111 = vsub.s32 0, %v1110
        %v1112 = vrot.slane %v1107, %v1111
        %v1118 = vunpack.c.l.b16 %v1103
        %v1119 = vunpack.c.l.b16 %v1104
        %v1120 = vunpack.c.l.b16 %v1105
        %v1121 = vunpack.c.l.b16 %v1106
        %v1122 = vpack.c.b16 %v1119, %v1118
        %v1123 = vpack.c.b16 %v1121, %v1120
        %vm1126 = vcmask 261120
        %v1128 = vsel %vm1126, %v1101, 0
        %1130 = vmatprep.subr.bf16.mxu0 0
        %1131 = vmatpush1.bf16.msra.mxu0 %v1122
        %1132 = vmatprep.subr.bf16.mxu0 0
        %1133 = vmatpush1.bf16.msra.mxu0 %v1123
        %1134 = vmatprep.subr.bf16.mxu0 0
        %1135 = vmatpush1.bf16.msra.mxu0 0
        %1136 = vmatprep.subr.bf16.mxu0 0
        %1137 = vmatpush1.bf16.msra.mxu0 0
        %1138 = vmatprep.subr.bf16.mxu0 0
        %1139 = vmatpush1.bf16.msra.mxu0 0
        %1140 = vmatprep.subr.bf16.mxu0 0
        %1141 = vmatpush1.bf16.msra.mxu0 0
        %1142 = vmatprep.subr.bf16.mxu0 0
        %1143 = vmatpush1.bf16.msra.mxu0 0
        %1144 = vmatprep.subr.bf16.mxu0 0
        %1145 = vmatpush1.bf16.msra.mxu0 0
        %1146 = vmatprep.subr.bf16.mxu0 0
        %1147 = vmatpush1.bf16.msra.mxu0 0
        %1148 = vmatprep.subr.bf16.mxu0 0
        %1149 = vmatpush1.bf16.msra.mxu0 0
        %1150 = vmatprep.subr.bf16.mxu0 0
        %1151 = vmatpush1.bf16.msra.mxu0 0
        %1152 = vmatprep.subr.bf16.mxu0 0
        %1153 = vmatpush1.bf16.msra.mxu0 0
        %1154 = vmatprep.subr.bf16.mxu0 0
        %1155 = vmatpush1.bf16.msra.mxu0 0
        %1156 = vmatprep.subr.bf16.mxu0 0
        %1157 = vmatpush1.bf16.msra.mxu0 0
        %1158 = vmatprep.subr.bf16.mxu0 0
        %1159 = vmatpush1.bf16.msra.mxu0 0
        %1160 = vmatprep.subr.bf16.mxu0 0
        %1161 = vmatpush1.bf16.msra.mxu0 0
        %1162 = vmatprep.mubr.bf16.mxu0 0
        %1163 = vmatmul.mubr.bf16.gmra.mrb[0].mxu0 %v1128
        %v1164 = vpop.f32.mrb[0].mxu0
        %v1165 = vadd.f32 %v1112, %v1164
        %v1166 = vpop.f32.mrb[0].mxu0
        %v1167 = vpop.f32.mrb[0].mxu0
        %v1168 = vpop.f32.mrb[0].mxu0
        %1169 = vdwg.mxu0
        %v1170 = vmul.f32 %v1165, 0.35355338
        %v1171 = vpack.c.bf16 %v1170, %v1170
        %v1172 = vld [vmem:[#allocation2] sm:$0xf]
        %v1174 = vlaneseq
        %v1175 = vshrl.u32 %v1174, 7
        %v1176 = vsub.s32 0, %v1175
        %v1177 = vrot.slane %v1102, %v1176
        %vm1179 = vcmask 64512
        %v1181 = vsel %vm1179, %v1171, 0
        %vm1183 = vcmask 1043456
        %v1185 = vsel %vm1183, %v1172, 0
        %1187 = vmatprep.subr.bf16.mxu0 0
        %1188 = vmatpush1.bf16.msra.mxu0 %v1185
        %1189 = vmatprep.subr.bf16.mxu0 0
        %1190 = vmatpush1.bf16.msra.mxu0 0
        %1191 = vmatprep.subr.bf16.mxu0 0
        %1192 = vmatpush1.bf16.msra.mxu0 0
        %1193 = vmatprep.subr.bf16.mxu0 0
        %1194 = vmatpush1.bf16.msra.mxu0 0
        %1195 = vmatprep.subr.bf16.mxu0 0
        %1196 = vmatpush1.bf16.msra.mxu0 0
        %1197 = vmatprep.subr.bf16.mxu0 0
        %1198 = vmatpush1.bf16.msra.mxu0 0
        %1199 = vmatprep.subr.bf16.mxu0 0
        %1200 = vmatpush1.bf16.msra.mxu0 0
        %1201 = vmatprep.subr.bf16.mxu0 0
        %1202 = vmatpush1.bf16.msra.mxu0 0
        %1203 = vmatprep.subr.bf16.mxu0 0
        %1204 = vmatpush1.bf16.msra.mxu0 0
        %1205 = vmatprep.subr.bf16.mxu0 0
        %1206 = vmatpush1.bf16.msra.mxu0 0
        %1207 = vmatprep.subr.bf16.mxu0 0
        %1208 = vmatpush1.bf16.msra.mxu0 0
        %1209 = vmatprep.subr.bf16.mxu0 0
        %1210 = vmatpush1.bf16.msra.mxu0 0
        %1211 = vmatprep.subr.bf16.mxu0 0
        %1212 = vmatpush1.bf16.msra.mxu0 0
        %1213 = vmatprep.subr.bf16.mxu0 0
        %1214 = vmatpush1.bf16.msra.mxu0 0
        %1215 = vmatprep.subr.bf16.mxu0 0
        %1216 = vmatpush1.bf16.msra.mxu0 0
        %1217 = vmatprep.subr.bf16.mxu0 0
        %1218 = vmatpush1.bf16.msra.mxu0 0
        %1219 = vmatprep.mubr.bf16.mxu0 0
        %1220 = vmatmul.mubr.bf16.gmra.mrb[0].mxu0 %v1181
        %v1221 = vpop.f32.mrb[0].mxu0
        %v1222 = vadd.f32 %v1177, %v1221
        %v1223 = vpop.f32.mrb[0].mxu0
        %v1224 = vpop.f32.mrb[0].mxu0
        %v1225 = vpop.f32.mrb[0].mxu0
        %1226 = vdwg.mxu0
        %v1227 = vsel %vm1179, %v1222, -inf
        %1228 = vmax.xlane.f32.xlu0 %v1227
        %v1229 = vpop.xlane.xlu0 %1228
        %v1230 = vsub.f32 %v1222, %v1229
        %v1231 = vmul.f32 %v1230, 1.442695
        %v1232 = vpow.pop %v1231
        %v1233 = vsel %vm1179, %v1232, 0.0
        %1234 = vadd.xlane.f32.xlu0 %v1233
        %v1235 = vpop.xlane.xlu0 %1234
        %v1236 = vrcp.pop %v1235
        %v1237 = vmul.f32 %v1232, %v1236
        %v1238 = vpack.c.bf16 %v1237, %v1237
        %v1239 = vld [vmem:[#allocation3] sm:$0xf]
        %v1241 = vsel %vm1179, %v1238, 0
        %v1244 = vsel %vm1183, %v1239, 0
        %1246 = vmatprep.subr.bf16.mxu0 0
        %1247 = vmatpush1.bf16.msra.mxu0 %v1244
        %1248 = vmatprep.subr.bf16.mxu0 0
        %1249 = vmatpush1.bf16.msra.mxu0 0
        %1250 = vmatprep.subr.bf16.mxu0 0
        %1251 = vmatpush1.bf16.msra.mxu0 0
        %1252 = vmatprep.subr.bf16.mxu0 0
        %1253 = vmatpush1.bf16.msra.mxu0 0
        %1254 = vmatprep.subr.bf16.mxu0 0
        %1255 = vmatpush1.bf16.msra.mxu0 0
        %1256 = vmatprep.subr.bf16.mxu0 0
        %1257 = vmatpush1.bf16.msra.mxu0 0
        %1258 = vmatprep.subr.bf16.mxu0 0
        %1259 = vmatpush1.bf16.msra.mxu0 0
        %1260 = vmatprep.subr.bf16.mxu0 0
        %1261 = vmatpush1.bf16.msra.mxu0 0
        %1262 = vmatprep.subr.bf16.mxu0 0
        %1263 = vmatpush1.bf16.msra.mxu0 0
        %1264 = vmatprep.subr.bf16.mxu0 0
        %1265 = vmatpush1.bf16.msra.mxu0 0
        %1266 = vmatprep.subr.bf16.mxu0 0
        %1267 = vmatpush1.bf16.msra.mxu0 0
        %1268 = vmatprep.subr.bf16.mxu0 0
        %1269 = vmatpush1.bf16.msra.mxu0 0
        %1270 = vmatprep.subr.bf16.mxu0 0
        %1271 = vmatpush1.bf16.msra.mxu0 0
        %1272 = vmatprep.subr.bf16.mxu0 0
        %1273 = vmatpush1.bf16.msra.mxu0 0
        %1274 = vmatprep.subr.bf16.mxu0 0
        %1275 = vmatpush1.bf16.msra.mxu0 0
        %1276 = vmatprep.subr.bf16.mxu0 0
        %1277 = vmatpush1.bf16.msra.mxu0 0
        %1278 = vmatprep.mubr.bf16.mxu0 0
        %1279 = vmatmul.mubr.bf16.gmra.mrb[0].mxu0 %v1241
        %v1280 = vpop.f32.mrb[0].mxu0
        %v1281 = vadd.f32 0.0, %v1280
        %v1282 = vpop.f32.mrb[0].mxu0
        %v1283 = vpop.f32.mrb[0].mxu0
        %v1284 = vpop.f32.mrb[0].mxu0
        %1285 = vdwg.mxu0
        %v1286 = vpack.c.bf16 %v1281, %v1281
        %v1287 = vld [vmem:[%s8] sm:$0xf]
        %s1288 = scalar_lea.vmem %s2, 16
        %v1289 = vld [vmem:[%s1288] sm:$0xf]
        %v1290 = vld [vmem:[%s1288 + $0x4] sm:$0xf]
        %v1291 = vld [vmem:[%s1288 + $0x8] sm:$0xf]
        %v1292 = vld [vmem:[%s1288 + $0xc] sm:$0xf]
        %s1293 = scalar_lea.vmem %s3, 1
        %v1294 = vld [vmem:[%s1293] sm:$0x1]
        %v1296 = vlaneseq
        %v1297 = vshrl.u32 %v1296, 7
        %v1298 = vsub.s32 0, %v1297
        %v1299 = vrot.slane %v1294, %v1298
        %v1305 = vunpack.c.l.b16 %v1289
        %v1306 = vunpack.c.l.b16 %v1290
        %v1307 = vunpack.c.l.b16 %v1291
        %v1308 = vunpack.c.l.b16 %v1292
        %v1309 = vpack.c.b16 %v1306, %v1305
        %v1310 = vpack.c.b16 %v1308, %v1307
        %1313 = vmatprep.subr.bf16.mxu0 0
        %1314 = vmatpush1.bf16.msra.mxu0 %v1309
        %1315 = vmatprep.subr.bf16.mxu0 0
        %1316 = vmatpush1.bf16.msra.mxu0 %v1310
        %1317 = vmatprep.subr.bf16.mxu0 0
        %1318 = vmatpush1.bf16.msra.mxu0 0
        %1319 = vmatprep.subr.bf16.mxu0 0
        %1320 = vmatpush1.bf16.msra.mxu0 0
        %1321 = vmatprep.subr.bf16.mxu0 0
        %1322 = vmatpush1.bf16.msra.mxu0 0
        %1323 = vmatprep.subr.bf16.mxu0 0
        %1324 = vmatpush1.bf16.msra.mxu0 0
        %1325 = vmatprep.subr.bf16.mxu0 0
        %1326 = vmatpush1.bf16.msra.mxu0 0
        %1327 = vmatprep.subr.bf16.mxu0 0
        %1328 = vmatpush1.bf16.msra.mxu0 0
        %1329 = vmatprep.subr.bf16.mxu0 0
        %1330 = vmatpush1.bf16.msra.mxu0 0
        %1331 = vmatprep.subr.bf16.mxu0 0
        %1332 = vmatpush1.bf16.msra.mxu0 0
        %1333 = vmatprep.subr.bf16.mxu0 0
        %1334 = vmatpush1.bf16.msra.mxu0 0
        %1335 = vmatprep.subr.bf16.mxu0 0
        %1336 = vmatpush1.bf16.msra.mxu0 0
        %1337 = vmatprep.subr.bf16.mxu0 0
        %1338 = vmatpush1.bf16.msra.mxu0 0
        %1339 = vmatprep.subr.bf16.mxu0 0
        %1340 = vmatpush1.bf16.msra.mxu0 0
        %1341 = vmatprep.subr.bf16.mxu0 0
        %1342 = vmatpush1.bf16.msra.mxu0 0
        %1343 = vmatprep.subr.bf16.mxu0 0
        %1344 = vmatpush1.bf16.msra.mxu0 0
        %1345 = vmatprep.mubr.bf16.mxu0 0
        %1346 = vmatmul.mubr.bf16.gmra.mrb[0].mxu0 %v1128
        %v1347 = vpop.f32.mrb[0].mxu0
        %v1348 = vadd.f32 %v1299, %v1347
        %v1349 = vpop.f32.mrb[0].mxu0
        %v1350 = vpop.f32.mrb[0].mxu0
        %v1351 = vpop.f32.mrb[0].mxu0
        %1352 = vdwg.mxu0
        %v1353 = vmul.f32 %v1348, 0.35355338
        %v1354 = vpack.c.bf16 %v1353, %v1353
        %s1355 = scalar_lea.vmem [#allocation2], 4
        %v1356 = vld [vmem:[%s1355] sm:$0xf]
        %v1358 = vsel %vm1179, %v1354, 0
        %v1361 = vsel %vm1183, %v1356, 0
        %1363 = vmatprep.subr.bf16.mxu0 0
        %1364 = vmatpush1.bf16.msra.mxu0 %v1361
        %1365 = vmatprep.subr.bf16.mxu0 0
        %1366 = vmatpush1.bf16.msra.mxu0 0
        %1367 = vmatprep.subr.bf16.mxu0 0
        %1368 = vmatpush1.bf16.msra.mxu0 0
        %1369 = vmatprep.subr.bf16.mxu0 0
        %1370 = vmatpush1.bf16.msra.mxu0 0
        %1371 = vmatprep.subr.bf16.mxu0 0
        %1372 = vmatpush1.bf16.msra.mxu0 0
        %1373 = vmatprep.subr.bf16.mxu0 0
        %1374 = vmatpush1.bf16.msra.mxu0 0
        %1375 = vmatprep.subr.bf16.mxu0 0
        %1376 = vmatpush1.bf16.msra.mxu0 0
        %1377 = vmatprep.subr.bf16.mxu0 0
        %1378 = vmatpush1.bf16.msra.mxu0 0
        %1379 = vmatprep.subr.bf16.mxu0 0
        %1380 = vmatpush1.bf16.msra.mxu0 0
        %1381 = vmatprep.subr.bf16.mxu0 0
        %1382 = vmatpush1.bf16.msra.mxu0 0
        %1383 = vmatprep.subr.bf16.mxu0 0
        %1384 = vmatpush1.bf16.msra.mxu0 0
        %1385 = vmatprep.subr.bf16.mxu0 0
        %1386 = vmatpush1.bf16.msra.mxu0 0
        %1387 = vmatprep.subr.bf16.mxu0 0
        %1388 = vmatpush1.bf16.msra.mxu0 0
        %1389 = vmatprep.subr.bf16.mxu0 0
        %1390 = vmatpush1.bf16.msra.mxu0 0
        %1391 = vmatprep.subr.bf16.mxu0 0
        %1392 = vmatpush1.bf16.msra.mxu0 0
        %1393 = vmatprep.subr.bf16.mxu0 0
        %1394 = vmatpush1.bf16.msra.mxu0 0
        %1395 = vmatprep.mubr.bf16.mxu0 0
        %1396 = vmatmul.mubr.bf16.gmra.mrb[0].mxu0 %v1358
        %v1397 = vpop.f32.mrb[0].mxu0
        %v1398 = vadd.f32 %v1177, %v1397
        %v1399 = vpop.f32.mrb[0].mxu0
        %v1400 = vpop.f32.mrb[0].mxu0
        %v1401 = vpop.f32.mrb[0].mxu0
        %1402 = vdwg.mxu0
        %v1403 = vsel %vm1179, %v1398, -inf
        %1404 = vmax.xlane.f32.xlu0 %v1403
        %v1405 = vpop.xlane.xlu0 %1404
        %v1406 = vsub.f32 %v1398, %v1405
        %v1407 = vmul.f32 %v1406, 1.442695
        %v1408 = vpow.pop %v1407
        %v1409 = vsel %vm1179, %v1408, 0.0
        %1410 = vadd.xlane.f32.xlu0 %v1409
        %v1411 = vpop.xlane.xlu0 %1410
        %v1412 = vrcp.pop %v1411
        %v1413 = vmul.f32 %v1408, %v1412
        %v1414 = vpack.c.bf16 %v1413, %v1413
        %s1415 = scalar_lea.vmem [#allocation3], 4
        %v1416 = vld [vmem:[%s1415] sm:$0xf]
        %v1418 = vsel %vm1179, %v1414, 0
        %v1421 = vsel %vm1183, %v1416, 0
        %1423 = vmatprep.subr.bf16.mxu0 0
        %1424 = vmatpush1.bf16.msra.mxu0 %v1421
        %1425 = vmatprep.subr.bf16.mxu0 0
        %1426 = vmatpush1.bf16.msra.mxu0 0
        %1427 = vmatprep.subr.bf16.mxu0 0
        %1428 = vmatpush1.bf16.msra.mxu0 0
        %1429 = vmatprep.subr.bf16.mxu0 0
        %1430 = vmatpush1.bf16.msra.mxu0 0
        %1431 = vmatprep.subr.bf16.mxu0 0
        %1432 = vmatpush1.bf16.msra.mxu0 0
        %1433 = vmatprep.subr.bf16.mxu0 0
        %1434 = vmatpush1.bf16.msra.mxu0 0
        %1435 = vmatprep.subr.bf16.mxu0 0
        %1436 = vmatpush1.bf16.msra.mxu0 0
        %1437 = vmatprep.subr.bf16.mxu0 0
        %1438 = vmatpush1.bf16.msra.mxu0 0
        %1439 = vmatprep.subr.bf16.mxu0 0
        %1440 = vmatpush1.bf16.msra.mxu0 0
        %1441 = vmatprep.subr.bf16.mxu0 0
        %1442 = vmatpush1.bf16.msra.mxu0 0
        %1443 = vmatprep.subr.bf16.mxu0 0
        %1444 = vmatpush1.bf16.msra.mxu0 0
        %1445 = vmatprep.subr.bf16.mxu0 0
        %1446 = vmatpush1.bf16.msra.mxu0 0
        %1447 = vmatprep.subr.bf16.mxu0 0
        %1448 = vmatpush1.bf16.msra.mxu0 0
        %1449 = vmatprep.subr.bf16.mxu0 0
        %1450 = vmatpush1.bf16.msra.mxu0 0
        %1451 = vmatprep.subr.bf16.mxu0 0
        %1452 = vmatpush1.bf16.msra.mxu0 0
        %1453 = vmatprep.subr.bf16.mxu0 0
        %1454 = vmatpush1.bf16.msra.mxu0 0
        %1455 = vmatprep.mubr.bf16.mxu0 0
        %1456 = vmatmul.mubr.bf16.gmra.mrb[0].mxu0 %v1418
        %v1457 = vpop.f32.mrb[0].mxu0
        %v1458 = vadd.f32 0.0, %v1457
        %v1459 = vpop.f32.mrb[0].mxu0
        %v1460 = vpop.f32.mrb[0].mxu0
        %v1461 = vpop.f32.mrb[0].mxu0
        %1462 = vdwg.mxu0
        %v1463 = vpack.c.bf16 %v1458, %v1458
        %s1464 = scalar_lea.vmem %s8, 4
        %v1465 = vld [vmem:[%s1464] sm:$0xf]
        %v1467 = vsel %vm1179, %v1463, 0
        %v1470 = vsel %vm1183, %v1465, 0
        %1472 = vmatprep.subr.bf16.mxu0 0
        %1473 = vmatpush1.bf16.msra.mxu0 %v1470
        %1474 = vmatprep.subr.bf16.mxu0 0
        %1475 = vmatpush1.bf16.msra.mxu0 0
        %1476 = vmatprep.subr.bf16.mxu0 0
        %1477 = vmatpush1.bf16.msra.mxu0 0
        %1478 = vmatprep.subr.bf16.mxu0 0
        %1479 = vmatpush1.bf16.msra.mxu0 0
        %1480 = vmatprep.subr.bf16.mxu0 0
        %1481 = vmatpush1.bf16.msra.mxu0 0
        %1482 = vmatprep.subr.bf16.mxu0 0
        %1483 = vmatpush1.bf16.msra.mxu0 0
        %1484 = vmatprep.subr.bf16.mxu0 0
        %1485 = vmatpush1.bf16.msra.mxu0 0
        %1486 = vmatprep.subr.bf16.mxu0 0
        %1487 = vmatpush1.bf16.msra.mxu0 0
        %1488 = vmatprep.subr.bf16.mxu0 0
        %1489 = vmatpush1.bf16.msra.mxu0 0
        %1490 = vmatprep.subr.bf16.mxu0 0
        %1491 = vmatpush1.bf16.msra.mxu0 0
        %1492 = vmatprep.subr.bf16.mxu0 0
        %1493 = vmatpush1.bf16.msra.mxu0 0
        %1494 = vmatprep.subr.bf16.mxu0 0
        %1495 = vmatpush1.bf16.msra.mxu0 0
        %1496 = vmatprep.subr.bf16.mxu0 0
        %1497 = vmatpush1.bf16.msra.mxu0 0
        %1498 = vmatprep.subr.bf16.mxu0 0
        %1499 = vmatpush1.bf16.msra.mxu0 0
        %1500 = vmatprep.subr.bf16.mxu0 0
        %1501 = vmatpush1.bf16.msra.mxu0 0
        %1502 = vmatprep.subr.bf16.mxu0 0
        %1503 = vmatpush1.bf16.msra.mxu0 0
        %1504 = vmatprep.mubr.bf16.mxu0 0
        %1505 = vmatmul.mubr.bf16.gmra.mrb[0].mxu0 %v1467
        %v1506 = vpop.f32.mrb[0].mxu0
        %v1507 = vadd.f32 0.0, %v1506
        %v1508 = vpop.f32.mrb[0].mxu0
        %v1509 = vpop.f32.mrb[0].mxu0
        %v1510 = vpop.f32.mrb[0].mxu0
        %1511 = vdwg.mxu0
        %v1513 = vsel %vm1179, %v1286, 0
        %v1516 = vsel %vm1183, %v1287, 0
        %1518 = vmatprep.subr.bf16.mxu0 0
        %1519 = vmatpush1.bf16.msra.mxu0 %v1516
        %1520 = vmatprep.subr.bf16.mxu0 0
        %1521 = vmatpush1.bf16.msra.mxu0 0
        %1522 = vmatprep.subr.bf16.mxu0 0
        %1523 = vmatpush1.bf16.msra.mxu0 0
        %1524 = vmatprep.subr.bf16.mxu0 0
        %1525 = vmatpush1.bf16.msra.mxu0 0
        %1526 = vmatprep.subr.bf16.mxu0 0
        %1527 = vmatpush1.bf16.msra.mxu0 0
        %1528 = vmatprep.subr.bf16.mxu0 0
        %1529 = vmatpush1.bf16.msra.mxu0 0
        %1530 = vmatprep.subr.bf16.mxu0 0
        %1531 = vmatpush1.bf16.msra.mxu0 0
        %1532 = vmatprep.subr.bf16.mxu0 0
        %1533 = vmatpush1.bf16.msra.mxu0 0
        %1534 = vmatprep.subr.bf16.mxu0 0
        %1535 = vmatpush1.bf16.msra.mxu0 0
        %1536 = vmatprep.subr.bf16.mxu0 0
        %1537 = vmatpush1.bf16.msra.mxu0 0
        %1538 = vmatprep.subr.bf16.mxu0 0
        %1539 = vmatpush1.bf16.msra.mxu0 0
        %1540 = vmatprep.subr.bf16.mxu0 0
        %1541 = vmatpush1.bf16.msra.mxu0 0
        %1542 = vmatprep.subr.bf16.mxu0 0
        %1543 = vmatpush1.bf16.msra.mxu0 0
        %1544 = vmatprep.subr.bf16.mxu0 0
        %1545 = vmatpush1.bf16.msra.mxu0 0
        %1546 = vmatprep.subr.bf16.mxu0 0
        %1547 = vmatpush1.bf16.msra.mxu0 0
        %1548 = vmatprep.subr.bf16.mxu0 0
        %1549 = vmatpush1.bf16.msra.mxu0 0
        %1550 = vmatprep.mubr.bf16.mxu0 0
        %1551 = vmatmul.mubr.bf16.gmra.mrb[0].mxu0 %v1513
        %v1552 = vpop.f32.mrb[0].mxu0
        %v1553 = vadd.f32 %v1507, %v1552
        %v1554 = vpop.f32.mrb[0].mxu0
        %v1555 = vpop.f32.mrb[0].mxu0
        %v1556 = vpop.f32.mrb[0].mxu0
        %1557 = vdwg.mxu0
        %s1558 = scalar_lea.vmem %s2, 32
        %v1559 = vld [vmem:[%s1558] sm:$0xf]
        %v1560 = vld [vmem:[%s1558 + $0x4] sm:$0xf]
        %v1561 = vld [vmem:[%s1558 + $0x8] sm:$0xf]
        %v1562 = vld [vmem:[%s1558 + $0xc] sm:$0xf]
        %s1563 = scalar_lea.vmem %s3, 2
        %v1564 = vld [vmem:[%s1563] sm:$0x1]
        %v1566 = vlaneseq
        %v1567 = vshrl.u32 %v1566, 7
        %v1568 = vsub.s32 0, %v1567
        %v1569 = vrot.slane %v1564, %v1568
        %v1575 = vunpack.c.l.b16 %v1559
        %v1576 = vunpack.c.l.b16 %v1560
        %v1577 = vunpack.c.l.b16 %v1561
        %v1578 = vunpack.c.l.b16 %v1562
        %v1579 = vpack.c.b16 %v1576, %v1575
        %v1580 = vpack.c.b16 %v1578, %v1577
        %1583 = vmatprep.subr.bf16.mxu0 0
        %1584 = vmatpush1.bf16.msra.mxu0 %v1579
        %1585 = vmatprep.subr.bf16.mxu0 0
        %1586 = vmatpush1.bf16.msra.mxu0 %v1580
        %1587 = vmatprep.subr.bf16.mxu0 0
        %1588 = vmatpush1.bf16.msra.mxu0 0
        %1589 = vmatprep.subr.bf16.mxu0 0
        %1590 = vmatpush1.bf16.msra.mxu0 0
        %1591 = vmatprep.subr.bf16.mxu0 0
        %1592 = vmatpush1.bf16.msra.mxu0 0
        %1593 = vmatprep.subr.bf16.mxu0 0
        %1594 = vmatpush1.bf16.msra.mxu0 0
        %1595 = vmatprep.subr.bf16.mxu0 0
        %1596 = vmatpush1.bf16.msra.mxu0 0
        %1597 = vmatprep.subr.bf16.mxu0 0
        %1598 = vmatpush1.bf16.msra.mxu0 0
        %1599 = vmatprep.subr.bf16.mxu0 0
        %1600 = vmatpush1.bf16.msra.mxu0 0
        %1601 = vmatprep.subr.bf16.mxu0 0
        %1602 = vmatpush1.bf16.msra.mxu0 0
        %1603 = vmatprep.subr.bf16.mxu0 0
        %1604 = vmatpush1.bf16.msra.mxu0 0
        %1605 = vmatprep.subr.bf16.mxu0 0
        %1606 = vmatpush1.bf16.msra.mxu0 0
        %1607 = vmatprep.subr.bf16.mxu0 0
        %1608 = vmatpush1.bf16.msra.mxu0 0
        %1609 = vmatprep.subr.bf16.mxu0 0
        %1610 = vmatpush1.bf16.msra.mxu0 0
        %1611 = vmatprep.subr.bf16.mxu0 0
        %1612 = vmatpush1.bf16.msra.mxu0 0
        %1613 = vmatprep.subr.bf16.mxu0 0
        %1614 = vmatpush1.bf16.msra.mxu0 0
        %1615 = vmatprep.mubr.bf16.mxu0 0
        %1616 = vmatmul.mubr.bf16.gmra.mrb[0].mxu0 %v1128
        %v1617 = vpop.f32.mrb[0].mxu0
        %v1618 = vadd.f32 %v1569, %v1617
        %v1619 = vpop.f32.mrb[0].mxu0
        %v1620 = vpop.f32.mrb[0].mxu0
        %v1621 = vpop.f32.mrb[0].mxu0
        %1622 = vdwg.mxu0
        %v1623 = vmul.f32 %v1618, 0.35355338
        %v1624 = vpack.c.bf16 %v1623, %v1623
        %s1625 = scalar_lea.vmem [#allocation2], 8
        %v1626 = vld [vmem:[%s1625] sm:$0xf]
        %v1628 = vsel %vm1179, %v1624, 0
        %v1631 = vsel %vm1183, %v1626, 0
        %1633 = vmatprep.subr.bf16.mxu0 0
        %1634 = vmatpush1.bf16.msra.mxu0 %v1631
        %1635 = vmatprep.subr.bf16.mxu0 0
        %1636 = vmatpush1.bf16.msra.mxu0 0
        %1637 = vmatprep.subr.bf16.mxu0 0
        %1638 = vmatpush1.bf16.msra.mxu0 0
        %1639 = vmatprep.subr.bf16.mxu0 0
        %1640 = vmatpush1.bf16.msra.mxu0 0
        %1641 = vmatprep.subr.bf16.mxu0 0
        %1642 = vmatpush1.bf16.msra.mxu0 0
        %1643 = vmatprep.subr.bf16.mxu0 0
        %1644 = vmatpush1.bf16.msra.mxu0 0
        %1645 = vmatprep.subr.bf16.mxu0 0
        %1646 = vmatpush1.bf16.msra.mxu0 0
        %1647 = vmatprep.subr.bf16.mxu0 0
        %1648 = vmatpush1.bf16.msra.mxu0 0
        %1649 = vmatprep.subr.bf16.mxu0 0
        %1650 = vmatpush1.bf16.msra.mxu0 0
        %1651 = vmatprep.subr.bf16.mxu0 0
        %1652 = vmatpush1.bf16.msra.mxu0 0
        %1653 = vmatprep.subr.bf16.mxu0 0
        %1654 = vmatpush1.bf16.msra.mxu0 0
        %1655 = vmatprep.subr.bf16.mxu0 0
        %1656 = vmatpush1.bf16.msra.mxu0 0
        %1657 = vmatprep.subr.bf16.mxu0 0
        %1658 = vmatpush1.bf16.msra.mxu0 0
        %1659 = vmatprep.subr.bf16.mxu0 0
        %1660 = vmatpush1.bf16.msra.mxu0 0
        %1661 = vmatprep.subr.bf16.mxu0 0
        %1662 = vmatpush1.bf16.msra.mxu0 0
        %1663 = vmatprep.subr.bf16.mxu0 0
        %1664 = vmatpush1.bf16.msra.mxu0 0
        %1665 = vmatprep.mubr.bf16.mxu0 0
        %1666 = vmatmul.mubr.bf16.gmra.mrb[0].mxu0 %v1628
        %v1667 = vpop.f32.mrb[0].mxu0
        %v1668 = vadd.f32 %v1177, %v1667
        %v1669 = vpop.f32.mrb[0].mxu0
        %v1670 = vpop.f32.mrb[0].mxu0
        %v1671 = vpop.f32.mrb[0].mxu0
        %1672 = vdwg.mxu0
        %v1673 = vsel %vm1179, %v1668, -inf
        %1674 = vmax.xlane.f32.xlu0 %v1673
        %v1675 = vpop.xlane.xlu0 %1674
        %v1676 = vsub.f32 %v1668, %v1675
        %v1677 = vmul.f32 %v1676, 1.442695
        %v1678 = vpow.pop %v1677
        %v1679 = vsel %vm1179, %v1678, 0.0
        %1680 = vadd.xlane.f32.xlu0 %v1679
        %v1681 = vpop.xlane.xlu0 %1680
        %v1682 = vrcp.pop %v1681
        %v1683 = vmul.f32 %v1678, %v1682
        %v1684 = vpack.c.bf16 %v1683, %v1683
        %s1685 = scalar_lea.vmem [#allocation3], 8
        %v1686 = vld [vmem:[%s1685] sm:$0xf]
        %v1688 = vsel %vm1179, %v1684, 0
        %v1691 = vsel %vm1183, %v1686, 0
        %1693 = vmatprep.subr.bf16.mxu0 0
        %1694 = vmatpush1.bf16.msra.mxu0 %v1691
        %1695 = vmatprep.subr.bf16.mxu0 0
        %1696 = vmatpush1.bf16.msra.mxu0 0
        %1697 = vmatprep.subr.bf16.mxu0 0
        %1698 = vmatpush1.bf16.msra.mxu0 0
        %1699 = vmatprep.subr.bf16.mxu0 0
        %1700 = vmatpush1.bf16.msra.mxu0 0
        %1701 = vmatprep.subr.bf16.mxu0 0
        %1702 = vmatpush1.bf16.msra.mxu0 0
        %1703 = vmatprep.subr.bf16.mxu0 0
        %1704 = vmatpush1.bf16.msra.mxu0 0
        %1705 = vmatprep.subr.bf16.mxu0 0
        %1706 = vmatpush1.bf16.msra.mxu0 0
        %1707 = vmatprep.subr.bf16.mxu0 0
        %1708 = vmatpush1.bf16.msra.mxu0 0
        %1709 = vmatprep.subr.bf16.mxu0 0
        %1710 = vmatpush1.bf16.msra.mxu0 0
        %1711 = vmatprep.subr.bf16.mxu0 0
        %1712 = vmatpush1.bf16.msra.mxu0 0
        %1713 = vmatprep.subr.bf16.mxu0 0
        %1714 = vmatpush1.bf16.msra.mxu0 0
        %1715 = vmatprep.subr.bf16.mxu0 0
        %1716 = vmatpush1.bf16.msra.mxu0 0
        %1717 = vmatprep.subr.bf16.mxu0 0
        %1718 = vmatpush1.bf16.msra.mxu0 0
        %1719 = vmatprep.subr.bf16.mxu0 0
        %1720 = vmatpush1.bf16.msra.mxu0 0
        %1721 = vmatprep.subr.bf16.mxu0 0
        %1722 = vmatpush1.bf16.msra.mxu0 0
        %1723 = vmatprep.subr.bf16.mxu0 0
        %1724 = vmatpush1.bf16.msra.mxu0 0
        %1725 = vmatprep.mubr.bf16.mxu0 0
        %1726 = vmatmul.mubr.bf16.gmra.mrb[0].mxu0 %v1688
        %v1727 = vpop.f32.mrb[0].mxu0
        %v1728 = vadd.f32 0.0, %v1727
        %v1729 = vpop.f32.mrb[0].mxu0
        %v1730 = vpop.f32.mrb[0].mxu0
        %v1731 = vpop.f32.mrb[0].mxu0
        %1732 = vdwg.mxu0
        %v1733 = vpack.c.bf16 %v1728, %v1728
        %s1734 = scalar_lea.vmem %s8, 8
        %v1735 = vld [vmem:[%s1734] sm:$0xf]
        %v1737 = vsel %vm1179, %v1733, 0
        %v1740 = vsel %vm1183, %v1735, 0
        %1742 = vmatprep.subr.bf16.mxu0 0
        %1743 = vmatpush1.bf16.msra.mxu0 %v1740
        %1744 = vmatprep.subr.bf16.mxu0 0
        %1745 = vmatpush1.bf16.msra.mxu0 0
        %1746 = vmatprep.subr.bf16.mxu0 0
        %1747 = vmatpush1.bf16.msra.mxu0 0
        %1748 = vmatprep.subr.bf16.mxu0 0
        %1749 = vmatpush1.bf16.msra.mxu0 0
        %1750 = vmatprep.subr.bf16.mxu0 0
        %1751 = vmatpush1.bf16.msra.mxu0 0
        %1752 = vmatprep.subr.bf16.mxu0 0
        %1753 = vmatpush1.bf16.msra.mxu0 0
        %1754 = vmatprep.subr.bf16.mxu0 0
        %1755 = vmatpush1.bf16.msra.mxu0 0
        %1756 = vmatprep.subr.bf16.mxu0 0
        %1757 = vmatpush1.bf16.msra.mxu0 0
        %1758 = vmatprep.subr.bf16.mxu0 0
        %1759 = vmatpush1.bf16.msra.mxu0 0
        %1760 = vmatprep.subr.bf16.mxu0 0
        %1761 = vmatpush1.bf16.msra.mxu0 0
        %1762 = vmatprep.subr.bf16.mxu0 0
        %1763 = vmatpush1.bf16.msra.mxu0 0
        %1764 = vmatprep.subr.bf16.mxu0 0
        %1765 = vmatpush1.bf16.msra.mxu0 0
        %1766 = vmatprep.subr.bf16.mxu0 0
        %1767 = vmatpush1.bf16.msra.mxu0 0
        %1768 = vmatprep.subr.bf16.mxu0 0
        %1769 = vmatpush1.bf16.msra.mxu0 0
        %1770 = vmatprep.subr.bf16.mxu0 0
        %1771 = vmatpush1.bf16.msra.mxu0 0
        %1772 = vmatprep.subr.bf16.mxu0 0
        %1773 = vmatpush1.bf16.msra.mxu0 0
        %1774 = vmatprep.mubr.bf16.mxu0 0
        %1775 = vmatmul.mubr.bf16.gmra.mrb[0].mxu0 %v1737
        %v1776 = vpop.f32.mrb[0].mxu0
        %v1777 = vadd.f32 0.0, %v1776
        %v1778 = vpop.f32.mrb[0].mxu0
        %v1779 = vpop.f32.mrb[0].mxu0
        %v1780 = vpop.f32.mrb[0].mxu0
        %1781 = vdwg.mxu0
        %v1782 = vadd.f32 %v1553, %v1777
        %s1783 = scalar_lea.vmem %s2, 48
        %v1784 = vld [vmem:[%s1783] sm:$0xf]
        %v1785 = vld [vmem:[%s1783 + $0x4] sm:$0xf]
        %v1786 = vld [vmem:[%s1783 + $0x8] sm:$0xf]
        %v1787 = vld [vmem:[%s1783 + $0xc] sm:$0xf]
        %s1788 = scalar_lea.vmem %s3, 3
        %v1789 = vld [vmem:[%s1788] sm:$0x1]
        %v1791 = vlaneseq
        %v1792 = vshrl.u32 %v1791, 7
        %v1793 = vsub.s32 0, %v1792
        %v1794 = vrot.slane %v1789, %v1793
        %v1800 = vunpack.c.l.b16 %v1784
        %v1801 = vunpack.c.l.b16 %v1785
        %v1802 = vunpack.c.l.b16 %v1786
        %v1803 = vunpack.c.l.b16 %v1787
        %v1804 = vpack.c.b16 %v1801, %v1800
        %v1805 = vpack.c.b16 %v1803, %v1802
        %1808 = vmatprep.subr.bf16.mxu0 0
        %1809 = vmatpush1.bf16.msra.mxu0 %v1804
        %1810 = vmatprep.subr.bf16.mxu0 0
        %1811 = vmatpush1.bf16.msra.mxu0 %v1805
        %1812 = vmatprep.subr.bf16.mxu0 0
        %1813 = vmatpush1.bf16.msra.mxu0 0
        %1814 = vmatprep.subr.bf16.mxu0 0
        %1815 = vmatpush1.bf16.msra.mxu0 0
        %1816 = vmatprep.subr.bf16.mxu0 0
        %1817 = vmatpush1.bf16.msra.mxu0 0
        %1818 = vmatprep.subr.bf16.mxu0 0
        %1819 = vmatpush1.bf16.msra.mxu0 0
        %1820 = vmatprep.subr.bf16.mxu0 0
        %1821 = vmatpush1.bf16.msra.mxu0 0
        %1822 = vmatprep.subr.bf16.mxu0 0
        %1823 = vmatpush1.bf16.msra.mxu0 0
        %1824 = vmatprep.subr.bf16.mxu0 0
        %1825 = vmatpush1.bf16.msra.mxu0 0
        %1826 = vmatprep.subr.bf16.mxu0 0
        %1827 = vmatpush1.bf16.msra.mxu0 0
        %1828 = vmatprep.subr.bf16.mxu0 0
        %1829 = vmatpush1.bf16.msra.mxu0 0
        %1830 = vmatprep.subr.bf16.mxu0 0
        %1831 = vmatpush1.bf16.msra.mxu0 0
        %1832 = vmatprep.subr.bf16.mxu0 0
        %1833 = vmatpush1.bf16.msra.mxu0 0
        %1834 = vmatprep.subr.bf16.mxu0 0
        %1835 = vmatpush1.bf16.msra.mxu0 0
        %1836 = vmatprep.subr.bf16.mxu0 0
        %1837 = vmatpush1.bf16.msra.mxu0 0
        %1838 = vmatprep.subr.bf16.mxu0 0
        %1839 = vmatpush1.bf16.msra.mxu0 0
        %1840 = vmatprep.mubr.bf16.mxu0 0
        %1841 = vmatmul.mubr.bf16.gmra.mrb[0].mxu0 %v1128
        %v1842 = vpop.f32.mrb[0].mxu0
        %v1843 = vadd.f32 %v1794, %v1842
        %v1844 = vpop.f32.mrb[0].mxu0
        %v1845 = vpop.f32.mrb[0].mxu0
        %v1846 = vpop.f32.mrb[0].mxu0
        %1847 = vdwg.mxu0
        %v1848 = vmul.f32 %v1843, 0.35355338
        %v1849 = vpack.c.bf16 %v1848, %v1848
        %s1850 = scalar_lea.vmem [#allocation2], 12
        %v1851 = vld [vmem:[%s1850] sm:$0xf]
        %v1853 = vsel %vm1179, %v1849, 0
        %v1856 = vsel %vm1183, %v1851, 0
        %1858 = vmatprep.subr.bf16.mxu0 0
        %1859 = vmatpush1.bf16.msra.mxu0 %v1856
        %1860 = vmatprep.subr.bf16.mxu0 0
        %1861 = vmatpush1.bf16.msra.mxu0 0
        %1862 = vmatprep.subr.bf16.mxu0 0
        %1863 = vmatpush1.bf16.msra.mxu0 0
        %1864 = vmatprep.subr.bf16.mxu0 0
        %1865 = vmatpush1.bf16.msra.mxu0 0
        %1866 = vmatprep.subr.bf16.mxu0 0
        %1867 = vmatpush1.bf16.msra.mxu0 0
        %1868 = vmatprep.subr.bf16.mxu0 0
        %1869 = vmatpush1.bf16.msra.mxu0 0
        %1870 = vmatprep.subr.bf16.mxu0 0
        %1871 = vmatpush1.bf16.msra.mxu0 0
        %1872 = vmatprep.subr.bf16.mxu0 0
        %1873 = vmatpush1.bf16.msra.mxu0 0
        %1874 = vmatprep.subr.bf16.mxu0 0
        %1875 = vmatpush1.bf16.msra.mxu0 0
        %1876 = vmatprep.subr.bf16.mxu0 0
        %1877 = vmatpush1.bf16.msra.mxu0 0
        %1878 = vmatprep.subr.bf16.mxu0 0
        %1879 = vmatpush1.bf16.msra.mxu0 0
        %1880 = vmatprep.subr.bf16.mxu0 0
        %1881 = vmatpush1.bf16.msra.mxu0 0
        %1882 = vmatprep.subr.bf16.mxu0 0
        %1883 = vmatpush1.bf16.msra.mxu0 0
        %1884 = vmatprep.subr.bf16.mxu0 0
        %1885 = vmatpush1.bf16.msra.mxu0 0
        %1886 = vmatprep.subr.bf16.mxu0 0
        %1887 = vmatpush1.bf16.msra.mxu0 0
        %1888 = vmatprep.subr.bf16.mxu0 0
        %1889 = vmatpush1.bf16.msra.mxu0 0
        %1890 = vmatprep.mubr.bf16.mxu0 0
        %1891 = vmatmul.mubr.bf16.gmra.mrb[0].mxu0 %v1853
        %v1892 = vpop.f32.mrb[0].mxu0
        %v1893 = vadd.f32 %v1177, %v1892
        %v1894 = vpop.f32.mrb[0].mxu0
        %v1895 = vpop.f32.mrb[0].mxu0
        %v1896 = vpop.f32.mrb[0].mxu0
        %1897 = vdwg.mxu0
        %v1898 = vsel %vm1179, %v1893, -inf
        %1899 = vmax.xlane.f32.xlu0 %v1898
        %v1900 = vpop.xlane.xlu0 %1899
        %v1901 = vsub.f32 %v1893, %v1900
        %v1902 = vmul.f32 %v1901, 1.442695
        %v1903 = vpow.pop %v1902
        %v1904 = vsel %vm1179, %v1903, 0.0
        %1905 = vadd.xlane.f32.xlu0 %v1904
        %v1906 = vpop.xlane.xlu0 %1905
        %v1907 = vrcp.pop %v1906
        %v1908 = vmul.f32 %v1903, %v1907
        %v1909 = vpack.c.bf16 %v1908, %v1908
        %s1910 = scalar_lea.vmem [#allocation3], 12
        %v1911 = vld [vmem:[%s1910] sm:$0xf]
        %v1913 = vsel %vm1179, %v1909, 0
        %v1916 = vsel %vm1183, %v1911, 0
        %1918 = vmatprep.subr.bf16.mxu0 0
        %1919 = vmatpush1.bf16.msra.mxu0 %v1916
        %1920 = vmatprep.subr.bf16.mxu0 0
        %1921 = vmatpush1.bf16.msra.mxu0 0
        %1922 = vmatprep.subr.bf16.mxu0 0
        %1923 = vmatpush1.bf16.msra.mxu0 0
        %1924 = vmatprep.subr.bf16.mxu0 0
        %1925 = vmatpush1.bf16.msra.mxu0 0
        %1926 = vmatprep.subr.bf16.mxu0 0
        %1927 = vmatpush1.bf16.msra.mxu0 0
        %1928 = vmatprep.subr.bf16.mxu0 0
        %1929 = vmatpush1.bf16.msra.mxu0 0
        %1930 = vmatprep.subr.bf16.mxu0 0
        %1931 = vmatpush1.bf16.msra.mxu0 0
        %1932 = vmatprep.subr.bf16.mxu0 0
        %1933 = vmatpush1.bf16.msra.mxu0 0
        %1934 = vmatprep.subr.bf16.mxu0 0
        %1935 = vmatpush1.bf16.msra.mxu0 0
        %1936 = vmatprep.subr.bf16.mxu0 0
        %1937 = vmatpush1.bf16.msra.mxu0 0
        %1938 = vmatprep.subr.bf16.mxu0 0
        %1939 = vmatpush1.bf16.msra.mxu0 0
        %1940 = vmatprep.subr.bf16.mxu0 0
        %1941 = vmatpush1.bf16.msra.mxu0 0
        %1942 = vmatprep.subr.bf16.mxu0 0
        %1943 = vmatpush1.bf16.msra.mxu0 0
        %1944 = vmatprep.subr.bf16.mxu0 0
        %1945 = vmatpush1.bf16.msra.mxu0 0
        %1946 = vmatprep.subr.bf16.mxu0 0
        %1947 = vmatpush1.bf16.msra.mxu0 0
        %1948 = vmatprep.subr.bf16.mxu0 0
        %1949 = vmatpush1.bf16.msra.mxu0 0
        %1950 = vmatprep.mubr.bf16.mxu0 0
        %1951 = vmatmul.mubr.bf16.gmra.mrb[0].mxu0 %v1913
        %v1952 = vpop.f32.mrb[0].mxu0
        %v1953 = vadd.f32 0.0, %v1952
        %v1954 = vpop.f32.mrb[0].mxu0
        %v1955 = vpop.f32.mrb[0].mxu0
        %v1956 = vpop.f32.mrb[0].mxu0
        %1957 = vdwg.mxu0
        %v1958 = vpack.c.bf16 %v1953, %v1953
        %s1959 = scalar_lea.vmem %s8, 12
        %v1960 = vld [vmem:[%s1959] sm:$0xf]
        %v1962 = vsel %vm1179, %v1958, 0
        %v1965 = vsel %vm1183, %v1960, 0
        %1967 = vmatprep.subr.bf16.mxu0 0
        %1968 = vmatpush1.bf16.msra.mxu0 %v1965
        %1969 = vmatprep.subr.bf16.mxu0 0
        %1970 = vmatpush1.bf16.msra.mxu0 0
        %1971 = vmatprep.subr.bf16.mxu0 0
        %1972 = vmatpush1.bf16.msra.mxu0 0
        %1973 = vmatprep.subr.bf16.mxu0 0
        %1974 = vmatpush1.bf16.msra.mxu0 0
        %1975 = vmatprep.subr.bf16.mxu0 0
        %1976 = vmatpush1.bf16.msra.mxu0 0
        %1977 = vmatprep.subr.bf16.mxu0 0
        %1978 = vmatpush1.bf16.msra.mxu0 0
        %1979 = vmatprep.subr.bf16.mxu0 0
        %1980 = vmatpush1.bf16.msra.mxu0 0
        %1981 = vmatprep.subr.bf16.mxu0 0
        %1982 = vmatpush1.bf16.msra.mxu0 0
        %1983 = vmatprep.subr.bf16.mxu0 0
        %1984 = vmatpush1.bf16.msra.mxu0 0
        %1985 = vmatprep.subr.bf16.mxu0 0
        %1986 = vmatpush1.bf16.msra.mxu0 0
        %1987 = vmatprep.subr.bf16.mxu0 0
        %1988 = vmatpush1.bf16.msra.mxu0 0
        %1989 = vmatprep.subr.bf16.mxu0 0
        %1990 = vmatpush1.bf16.msra.mxu0 0
        %1991 = vmatprep.subr.bf16.mxu0 0
        %1992 = vmatpush1.bf16.msra.mxu0 0
        %1993 = vmatprep.subr.bf16.mxu0 0
        %1994 = vmatpush1.bf16.msra.mxu0 0
        %1995 = vmatprep.subr.bf16.mxu0 0
        %1996 = vmatpush1.bf16.msra.mxu0 0
        %1997 = vmatprep.subr.bf16.mxu0 0
        %1998 = vmatpush1.bf16.msra.mxu0 0
        %1999 = vmatprep.mubr.bf16.mxu0 0
        %2000 = vmatmul.mubr.bf16.gmra.mrb[0].mxu0 %v1962
        %v2001 = vpop.f32.mrb[0].mxu0
        %v2002 = vadd.f32 0.0, %v2001
        %v2003 = vpop.f32.mrb[0].mxu0
        %v2004 = vpop.f32.mrb[0].mxu0
        %v2005 = vpop.f32.mrb[0].mxu0
        %2006 = vdwg.mxu0
        %v2007 = vadd.f32 %v1782, %v2002
        %v2008 = vld [vmem:[%s9] sm:$0x1]
        %v2010 = vlaneseq
        %v2011 = vshrl.u32 %v2010, 7
        %v2012 = vsub.s32 0, %v2011
        %v2013 = vrot.slane %v2008, %v2012
        %v2015 = vadd.f32 %v2007, %v2013
        %v2016 = vunpack.c.l.bf16 %v1101
        %v2017 = vadd.f32 %v2016, %v2015
        %v2018 = vld [vmem:[%s14] sm:$0x1]
        %v2019 = vld [vmem:[%s15] sm:$0x1]
        %v2020 = vsel %vm1126, %v2017, 0.0
        %2021 = vadd.xlane.f32.xlu0 %v2020
        %v2022 = vpop.xlane.xlu0 %2021
        %v2023 = vrcp.pop 32.0
        %v2024 = vmul.f32 %v2022, %v2023
        %v2025 = vsub.f32 %v2017, %v2024
        %v2026 = vmul.f32 %v2025, %v2025
        %v2027 = vsel %vm1126, %v2026, 0.0
        %2028 = vadd.xlane.f32.xlu0 %v2027
        %v2029 = vpop.xlane.xlu0 %2028
        %v2030 = vmul.f32 %v2029, %v2023
        %v2031 = vadd.f32 %v2030, 1e-12
        %v2032 = vrsqrt.pop %v2031
        %v2033 = vmul.f32 %v2025, %v2032
        %v2035 = vlaneseq
        %v2036 = vshrl.u32 %v2035, 7
        %v2037 = vsub.s32 0, %v2036
        %v2038 = vrot.slane %v2018, %v2037
        %v2040 = vmul.f32 %v2033, %v2038
        %v2042 = vlaneseq
        %v2043 = vshrl.u32 %v2042, 7
        %v2044 = vsub.s32 0, %v2043
        %v2045 = vrot.slane %v2019, %v2044
        %v2047 = vadd.f32 %v2040, %v2045
        %v2048 = vpack.c.bf16 %v2047, %v2047
        %v2049 = vld [vmem:[%s10] sm:$0xf]
        %v2050 = vld [vmem:[%s10 + $0x4] sm:$0xf]
        %v2051 = vld [vmem:[%s10 + $0x8] sm:$0xf]
        %v2052 = vld [vmem:[%s10 + $0xc] sm:$0xf]
        %v2053 = vld [vmem:[%s11] sm:$0x1]
        %v2055 = vlaneseq
        %v2056 = vshrl.u32 %v2055, 7
        %v2057 = vsub.s32 0, %v2056
        %v2058 = vrot.slane %v2053, %v2057
        %v2064 = vunpack.c.l.b16 %v2049
        %v2065 = vunpack.c.l.b16 %v2050
        %v2066 = vunpack.c.l.b16 %v2051
        %v2067 = vunpack.c.l.b16 %v2052
        %v2068 = vpack.c.b16 %v2065, %v2064
        %v2069 = vpack.c.b16 %v2067, %v2066
        %v2073 = vsel %vm1126, %v2048, 0
        %2075 = vmatprep.subr.bf16.mxu0 0
        %2076 = vmatpush1.bf16.msra.mxu0 %v2068
        %2077 = vmatprep.subr.bf16.mxu0 0
        %2078 = vmatpush1.bf16.msra.mxu0 %v2069
        %2079 = vmatprep.subr.bf16.mxu0 0
        %2080 = vmatpush1.bf16.msra.mxu0 0
        %2081 = vmatprep.subr.bf16.mxu0 0
        %2082 = vmatpush1.bf16.msra.mxu0 0
        %2083 = vmatprep.subr.bf16.mxu0 0
        %2084 = vmatpush1.bf16.msra.mxu0 0
        %2085 = vmatprep.subr.bf16.mxu0 0
        %2086 = vmatpush1.bf16.msra.mxu0 0
        %2087 = vmatprep.subr.bf16.mxu0 0
        %2088 = vmatpush1.bf16.msra.mxu0 0
        %2089 = vmatprep.subr.bf16.mxu0 0
        %2090 = vmatpush1.bf16.msra.mxu0 0
        %2091 = vmatprep.subr.bf16.mxu0 0
        %2092 = vmatpush1.bf16.msra.mxu0 0
        %2093 = vmatprep.subr.bf16.mxu0 0
        %2094 = vmatpush1.bf16.msra.mxu0 0
        %2095 = vmatprep.subr.bf16.mxu0 0
        %2096 = vmatpush1.bf16.msra.mxu0 0
        %2097 = vmatprep.subr.bf16.mxu0 0
        %2098 = vmatpush1.bf16.msra.mxu0 0
        %2099 = vmatprep.subr.bf16.mxu0 0
        %2100 = vmatpush1.bf16.msra.mxu0 0
        %2101 = vmatprep.subr.bf16.mxu0 0
        %2102 = vmatpush1.bf16.msra.mxu0 0
        %2103 = vmatprep.subr.bf16.mxu0 0
        %2104 = vmatpush1.bf16.msra.mxu0 0
        %2105 = vmatprep.subr.bf16.mxu0 0
        %2106 = vmatpush1.bf16.msra.mxu0 0
        %2107 = vmatprep.mubr.bf16.mxu0 0
        %2108 = vmatmul.mubr.bf16.gmra.mrb[0].mxu0 %v2073
        %v2109 = vpop.f32.mrb[0].mxu0
        %v2110 = vadd.f32 %v2058, %v2109
        %v2111 = vpop.f32.mrb[0].mxu0
        %v2112 = vpop.f32.mrb[0].mxu0
        %v2113 = vpop.f32.mrb[0].mxu0
        %2114 = vdwg.mxu0
        %v2115 = vmul.f32 %v2110, 0.5
        %v2116 = vmul.f32 %v2110, 0.044715
        %v2117 = vmul.f32 %v2116, %v2110
        %v2118 = vmul.f32 %v2117, %v2110
        %v2119 = vadd.f32 %v2110, %v2118
        %v2120 = vmul.f32 %v2119, 0.7978846
        %v2121 = vtanh.pop %v2120
        %v2122 = vadd.f32 %v2121, 1.0
        %v2123 = vmul.f32 %v2115, %v2122
        %v2124 = vpack.c.bf16 %v2123, %v2123
        %v2125 = vld [vmem:[%s12] sm:$0xf]
        %v2126 = vld [vmem:[%s12 + $0x4] sm:$0xf]
        %v2127 = vld [vmem:[%s12 + $0x8] sm:$0xf]
        %v2128 = vld [vmem:[%s12 + $0xc] sm:$0xf]
        %v2129 = vld [vmem:[%s12 + $0x10] sm:$0xf]
        %v2130 = vld [vmem:[%s12 + $0x14] sm:$0xf]
        %v2131 = vld [vmem:[%s12 + $0x18] sm:$0xf]
        %v2132 = vld [vmem:[%s12 + $0x1c] sm:$0xf]
        %v2133 = vld [vmem:[%s13] sm:$0x1]
        %v2135 = vlaneseq
        %v2136 = vshrl.u32 %v2135, 7
        %v2137 = vsub.s32 0, %v2136
        %v2138 = vrot.slane %v2133, %v2137
        %v2148 = vunpack.c.l.b16 %v2125
        %v2149 = vunpack.c.l.b16 %v2126
        %v2150 = vunpack.c.l.b16 %v2127
        %v2151 = vunpack.c.l.b16 %v2128
        %v2152 = vunpack.c.l.b16 %v2129
        %v2153 = vunpack.c.l.b16 %v2130
        %v2154 = vunpack.c.l.b16 %v2131
        %v2155 = vunpack.c.l.b16 %v2132
        %v2156 = vpack.c.b16 %v2149, %v2148
        %v2157 = vpack.c.b16 %v2151, %v2150
        %v2158 = vpack.c.b16 %v2153, %v2152
        %v2159 = vpack.c.b16 %v2155, %v2154
        %vm2164 = vcmask 523264
        %v2166 = vsel %vm2164, %v2124, 0
        %2168 = vmatprep.subr.bf16.mxu0 0
        %2169 = vmatpush1.bf16.msra.mxu0 %v2156
        %2170 = vmatprep.subr.bf16.mxu0 0
        %2171 = vmatpush1.bf16.msra.mxu0 %v2157
        %2172 = vmatprep.subr.bf16.mxu0 0
        %2173 = vmatpush1.bf16.msra.mxu0 %v2158
        %2174 = vmatprep.subr.bf16.mxu0 0
        %2175 = vmatpush1.bf16.msra.mxu0 %v2159
        %2176 = vmatprep.subr.bf16.mxu0 0
        %2177 = vmatpush1.bf16.msra.mxu0 0
        %2178 = vmatprep.subr.bf16.mxu0 0
        %2179 = vmatpush1.bf16.msra.mxu0 0
        %2180 = vmatprep.subr.bf16.mxu0 0
        %2181 = vmatpush1.bf16.msra.mxu0 0
        %2182 = vmatprep.subr.bf16.mxu0 0
        %2183 = vmatpush1.bf16.msra.mxu0 0
        %2184 = vmatprep.subr.bf16.mxu0 0
        %2185 = vmatpush1.bf16.msra.mxu0 0
        %2186 = vmatprep.subr.bf16.mxu0 0
        %2187 = vmatpush1.bf16.msra.mxu0 0
        %2188 = vmatprep.subr.bf16.mxu0 0
        %2189 = vmatpush1.bf16.msra.mxu0 0
        %2190 = vmatprep.subr.bf16.mxu0 0
        %2191 = vmatpush1.bf16.msra.mxu0 0
        %2192 = vmatprep.subr.bf16.mxu0 0
        %2193 = vmatpush1.bf16.msra.mxu0 0
        %2194 = vmatprep.subr.bf16.mxu0 0
        %2195 = vmatpush1.bf16.msra.mxu0 0
        %2196 = vmatprep.subr.bf16.mxu0 0
        %2197 = vmatpush1.bf16.msra.mxu0 0
        %2198 = vmatprep.subr.bf16.mxu0 0
        %2199 = vmatpush1.bf16.msra.mxu0 0
        %2200 = vmatprep.mubr.bf16.mxu0 0
        %2201 = vmatmul.mubr.bf16.gmra.mrb[0].mxu0 %v2166
        %v2202 = vpop.f32.mrb[0].mxu0
        %v2203 = vadd.f32 %v2138, %v2202
        %v2204 = vpop.f32.mrb[0].mxu0
        %v2205 = vpop.f32.mrb[0].mxu0
        %v2206 = vpop.f32.mrb[0].mxu0
        %2207 = vdwg.mxu0
        %v2208 = vadd.f32 %v2047, %v2203
        %v2209 = vld [vmem:[%s16] sm:$0x1]
        %v2210 = vld [vmem:[%s17] sm:$0x1]
        %v2211 = vsel %vm1126, %v2208, 0.0
        %2212 = vadd.xlane.f32.xlu0 %v2211
        %v2213 = vpop.xlane.xlu0 %2212
        %v2214 = vmul.f32 %v2213, %v2023
        %v2215 = vsub.f32 %v2208, %v2214
        %v2216 = vmul.f32 %v2215, %v2215
        %v2217 = vsel %vm1126, %v2216, 0.0
        %2218 = vadd.xlane.f32.xlu0 %v2217
        %v2219 = vpop.xlane.xlu0 %2218
        %v2220 = vmul.f32 %v2219, %v2023
        %v2221 = vadd.f32 %v2220, 1e-12
        %v2222 = vrsqrt.pop %v2221
        %v2223 = vmul.f32 %v2215, %v2222
        %v2225 = vlaneseq
        %v2226 = vshrl.u32 %v2225, 7
        %v2227 = vsub.s32 0, %v2226
        %v2228 = vrot.slane %v2209, %v2227
        %v2230 = vmul.f32 %v2223, %v2228
        %v2232 = vlaneseq
        %v2233 = vshrl.u32 %v2232, 7
        %v2234 = vsub.s32 0, %v2233
        %v2235 = vrot.slane %v2210, %v2234
        %v2237 = vadd.f32 %v2230, %v2235
        %v2238 = vpack.c.bf16 %v2237, %v2237
        %vm2239 = vcmask 257024
        %2240 = vst.msk [vmem:[%s591] sm:$0xf] %vm2239, %v2238
        %s2241 = sand.u32 %s442, 1
        %s2242 = scalar_lea.sflag [#allocation5], %s2241
        %s2243 = sand.u32 %s442, 1
        %s2244 = smul.addr %s2243, 4
        %s2245 = scalar_lea.vmem [#allocation4], %s2244
        // Predicated region
        $region97: #{tpu_custom_call.1} parent=91 // pred_check
          %p2246 = pneg %p452
        $region98: #{tpu_custom_call.1} parent=91 // pred_check_branch
          %2248 = sbr.rel (%p2246) target = $region100
        $region99: #{tpu_custom_call.1} parent=91 // pred_region
          %s2250 = ssub.s32 64, 64
          %2251 = vsyncadd %s2242, %s2250
          %s2252 = sadd.s32 %s37, %s36
          %s2253 = smul.addr %s2252, 64
          %s2254 = scalar_lea.hbm %s18, %s2253
          %s2256 = sshll.u32 %s2245, 4
          %s2257 = int_to_ptr.vmem [resolvable:$true] %s2256
          %2259 = dma.vmem_to_hbm [thread:$0]  %s2257, 64, %s2254, %s2242
        $region100: #{tpu_custom_call.1} parent=91 // pred_fallthru
          _
      $region92: #{tpu_custom_call.1} parent=5 // pred_fallthru
        _
      %p2260 = scmp.le.s32.totalorder 2, %s27
      // Predicated region
      $region101: #{tpu_custom_call.1} parent=5 // pred_check
        %p2261 = pneg %p2260
      $region102: #{tpu_custom_call.1} parent=5 // pred_check_branch
        %2263 = sbr.rel (%p2261) target = $region104
      $region103: #{tpu_custom_call.1} parent=5 // pred_region
        %s2264 = ssub.s32 %s27, 2
        // Predicated region
        $region105: #{tpu_custom_call.1} parent=103 // pred_check
          %p2265 = pneg %p458
        $region106: #{tpu_custom_call.1} parent=103 // pred_check_branch
          %2267 = sbr.rel (%p2265) target = $region108
        $region107: #{tpu_custom_call.1} parent=103 // pred_region
          %s2268 = sand.u32 %s443, 1
          %s2269 = scalar_lea.sflag [#allocation5], %s2268
          %s2270 = sand.u32 %s443, 1
          %s2271 = smul.addr %s2270, 4
          %s2272 = scalar_lea.vmem [#allocation4], %s2271
          %2273 = dma.done %s2269, 64
        $region108: #{tpu_custom_call.1} parent=103 // pred_fallthru
          _
      $region104: #{tpu_custom_call.1} parent=5 // pred_fallthru
        _
    $region6: #{tpu_custom_call.1} parent=1 // loop_footer
      %s31 = sadd.s32 1, %s27
    $region7: #{tpu_custom_call.1} parent=1 // loop_footer_branch
      %26 = sbr.rel target = $region3
    $region8: #{tpu_custom_call.1} parent=1 // loop_exit
      _
    %2274 = vsyncpa [#allocation5], 1
    %s2275 = scalar_lea.sflag [#allocation5], 1
    %2276 = vsyncpa %s2275, 1

</llo_original>
